<compile_context>
chip_gen: v7x
topology: tpu7x:2x2x1
jax: 0.10.0
libtpu: 0.0.40
codegen_flags: <defaults>
</compile_context>

<pallas_src>
import functools

import jax
import jax.numpy as jnp
import numpy as np
from jax import lax
from jax.experimental import pallas as pl
from jax.experimental.pallas import tpu as pltpu


# ---------------------------------------------------------------------------
# Packed-weight slab layout (all offsets 8-aligned, width = 8H)
# ---------------------------------------------------------------------------
def _slab_layout(embed_size, num_hiddens, num_layers):
    H = num_hiddens

    def r8(n):
        return ((n + 7) // 8) * 8

    entries = []
    for l in range(num_layers):
        d_in = embed_size if l == 0 else 2 * H
        entries += [(f"w_ih_f{l}", d_in), (f"w_ih_b{l}", d_in), (f"w_hh{l}", 2 * H),
                    (f"b_f{l}", 1), (f"b_b{l}", 1)]
    entries += [("dec_w0", 2 * H), ("dec_wl", 2 * H), ("dec_b", 1)]

    layout, off = {}, 0
    for name, rows in entries:
        layout[name] = (off, rows)
        off += r8(rows)
    return layout, off


def prepare_params(params):
    """One-time (host-side, NumPy) repack of the BiRNN parameters into the fused
    kernel layout.  Runs outside the jitted forward, like PyTorch module init."""
    H = params["lstm"][0]["fwd"][1].shape[0]
    E = params["embedding"].shape[1]
    V = params["embedding"].shape[0]
    num_layers = len(params["lstm"])
    layout, total_rows = _slab_layout(E, H, num_layers)

    def place(w, d):
        """Scatter a PyTorch-gate-ordered (rows, 4H) matrix into the gate-major /
        direction-minor 8H layout [i_f,i_b,f_f,f_b,g_f,g_b,o_f,o_b]."""
        w = np.asarray(w, np.float32)
        out = np.zeros((w.shape[0], 8 * H), np.float32)
        for k in range(4):
            out[:, (2 * k + d) * H:(2 * k + d + 1) * H] = w[:, k * H:(k + 1) * H]
        return out

    slab = np.zeros((total_rows, 8 * H), np.float32)

    def put(name, mat):
        off, rows = layout[name]
        assert mat.shape[0] == rows
        slab[off:off + rows, :mat.shape[1]] = mat

    for l, layer in enumerate(params["lstm"]):
        w_ih_f, w_hh_f, b_f = layer["fwd"]
        w_ih_b, w_hh_b, b_b = layer["bwd"]
        mats = {
            f"w_ih_f{l}": place(w_ih_f, 0),
            f"w_ih_b{l}": place(w_ih_b, 1),
            f"w_hh{l}": np.concatenate([place(w_hh_f, 0), place(w_hh_b, 1)], axis=0),
            f"b_f{l}": place(b_f, 0),
            f"b_b{l}": place(b_b, 1),
        }
        for name, m in mats.items():
            # Pre-scale the g-gate band by 2: in-kernel tanh(x) = 2*sigmoid(2x) - 1.
            m[:, 4 * H:6 * H] *= 2.0
            put(name, m)

    dec_w = np.asarray(params["dec_w"], np.float32)     # (4H, C)
    dec_b = np.asarray(params["dec_b"], np.float32)     # (1, C)
    # encoding = [h_f(0), h_b(0), h_f(T-1), h_b(T-1)] @ dec_w is re-expressed on
    # the recurrence carries: h_cat(step 0)   = [h_f(0)   | h_b(T-1)]
    #                         h_cat(step T-1) = [h_f(T-1) | h_b(0)  ]
    put("dec_w0", np.concatenate([dec_w[0:H], dec_w[3 * H:4 * H]], axis=0))
    put("dec_wl", np.concatenate([dec_w[2 * H:3 * H], dec_w[H:2 * H]], axis=0))
    put("dec_b", dec_b)

    emb3 = np.asarray(params["embedding"], np.float32).reshape(V, 1, E)

    return dict(emb3=jnp.asarray(emb3), slab=jnp.asarray(slab), layout=layout,
                H=H, num_layers=num_layers, num_classes=dec_w.shape[1])


# ---------------------------------------------------------------------------
# Fused Pallas kernel
# ---------------------------------------------------------------------------
def _birnn_fused_kernel(inp_ref, emb_ref, w_ref, out_ref, x_ref, hs_ref, *,
                        T, B, H, num_layers, layout, num_classes):
    """Whole BiRNN forward for one (B, T) batch of token ids.

    inp_ref : (B, T) int32, SMEM           token ids
    emb_ref : (V, 1, E) f32, VMEM          embedding table
    w_ref   : (rows, 8H) f32, VMEM         packed weight slab (see _slab_layout)
    out_ref : (B, num_classes) f32, VMEM   logits
    x_ref   : (T*B, E) f32, VMEM scratch   gathered embeddings, time-major
    hs_ref  : (T*B, 2H) f32, VMEM scratch  per-layer [h_fwd | h_bwd] outputs
    """
    def w_rows(name):
        off, rows = layout[name]
        return w_ref[off:off + rows, :]

    # ---- In-kernel embedding gather: one dynamic row read per token ----
    for t in range(T):
        for b in range(B):
            r = t * B + b
            x_ref[r:r + 1, :] = emb_ref[inp_ref[b, t]]
    x = x_ref[...]                                           # (T*B, E), time-major

    # ---- Fused bidirectional LSTM recurrence (both directions per step) ----
    def bilstm(xp_f, xp_b, w_hh, write_hs):
        h = jnp.zeros((B, 2 * H), jnp.float32)
        c = jnp.zeros((B, 2 * H), jnp.float32)
        h_first = None
        for s in range(T):
            g = xp_f[s * B:(s + 1) * B, :] + xp_b[(T - 1 - s) * B:(T - s) * B, :]
            if s > 0:                        # h == 0 at s == 0: skip the exact-zero matmul
                g = g + jnp.dot(h, w_hh, preferred_element_type=jnp.float32)
            sg = jax.nn.sigmoid(g)           # single full-width EUP pass
            i_g = sg[:, 0 * H:2 * H]
            f_g = sg[:, 2 * H:4 * H]
            g_g = 2.0 * sg[:, 4 * H:6 * H] - 1.0   # tanh of the (unscaled) g gate
            o_g = sg[:, 6 * H:8 * H]
            c = f_g * c + i_g * g_g
            h = o_g * jnp.tanh(c)
            if write_hs:
                # layer output at time t is [h_fwd(t) | h_bwd(t)]
                hs_ref[s * B:(s + 1) * B, 0:H] = h[:, 0:H]
                hs_ref[(T - 1 - s) * B:(T - s) * B, H:2 * H] = h[:, H:2 * H]
            if s == 0:
                h_first = h
        return h_first, h

    h_first = h_last = None
    for l in range(num_layers):
        # Hoisted, zero-padded input projections (bias folded): two batched
        # (T*B, d_in) @ (d_in, 8H) matmuls per layer, all off the serial chain.
        xp_f = jnp.dot(x, w_rows(f"w_ih_f{l}"),
                       preferred_element_type=jnp.float32) + w_rows(f"b_f{l}")
        xp_b = jnp.dot(x, w_rows(f"w_ih_b{l}"),
                       preferred_element_type=jnp.float32) + w_rows(f"b_b{l}")
        last = (l == num_layers - 1)
        h_first, h_last = bilstm(xp_f, xp_b, w_rows(f"w_hh{l}"), write_hs=not last)
        if not last:
            x = hs_ref[...]                                  # (T*B, 2H) next-layer input

    # ---- Decoder: cat(outputs[0], outputs[-1]) @ dec_w as two permuted matmuls ----
    logits = (jnp.dot(h_first, w_rows("dec_w0"), preferred_element_type=jnp.float32)
              + jnp.dot(h_last, w_rows("dec_wl"), preferred_element_type=jnp.float32)
              + w_rows("dec_b"))
    out_ref[...] = logits[:, :num_classes]


# ---------------------------------------------------------------------------
# Wrapper
# ---------------------------------------------------------------------------
def _full_vmem_spec(a):
    zeros = (0,) * a.ndim
    return pl.BlockSpec(a.shape, lambda *_: zeros)


def birnn_pallas(inputs, emb3, slab, *, H, num_layers, layout, num_classes):
    B, T = inputs.shape
    E = emb3.shape[-1]
    kernel = functools.partial(
        _birnn_fused_kernel, T=T, B=B, H=H, num_layers=num_layers,
        layout=layout, num_classes=num_classes)
    return pl.pallas_call(
        kernel,
        out_shape=jax.ShapeDtypeStruct((B, num_classes), jnp.float32),
        in_specs=[
            pl.BlockSpec(memory_space=pltpu.MemorySpace.SMEM),   # token ids
            _full_vmem_spec(emb3),                               # embedding table
            _full_vmem_spec(slab),                               # packed weights
        ],
        out_specs=pl.BlockSpec((B, num_classes), lambda *_: (0, 0)),
        scratch_shapes=[
            pltpu.VMEM((T * B, E), jnp.float32),                 # gathered embeddings
            pltpu.VMEM((T * B, 2 * H), jnp.float32),             # per-layer outputs
        ],
        compiler_params=pltpu.CompilerParams(vmem_limit_bytes=32 * 1024 * 1024),
    )(inputs, emb3, slab)


class BiRNNPallas:
    """Embedding -> num_layers x bidirectional LSTM -> Linear in one pallas_call."""

    def __init__(self, params):
        prep = prepare_params(params)
        self._emb3 = prep["emb3"]
        self._slab = prep["slab"]
        self._static = dict(H=prep["H"], num_layers=prep["num_layers"],
                            layout=prep["layout"], num_classes=prep["num_classes"])
        self._fwd = jax.jit(self._forward)

    def _forward(self, inputs, emb3, slab):
        inputs = inputs.astype(jnp.int32)
        return birnn_pallas(inputs, emb3, slab, **self._static)

    def __call__(self, inputs):
        return self._fwd(inputs, self._emb3, self._slab)


# ---------------------------------------------------------------------------
# Pure-JAX reference (for correctness check)
# ---------------------------------------------------------------------------
def _ref_lstm_direction(x, w_ih, w_hh, b):
    T, B, _ = x.shape
    H = w_hh.shape[0]

    def step(carry, xt):
        h, c = carry
        g = xt @ w_ih + h @ w_hh + b
        i = jax.nn.sigmoid(g[:, 0 * H:1 * H])
        f = jax.nn.sigmoid(g[:, 1 * H:2 * H])
        gg = jnp.tanh(g[:, 2 * H:3 * H])
        o = jax.nn.sigmoid(g[:, 3 * H:4 * H])
        c = f * c + i * gg
        h = o * jnp.tanh(c)
        return (h, c), h

    init = (jnp.zeros((B, H), jnp.float32), jnp.zeros((B, H), jnp.float32))
    _, hs = lax.scan(step, init, x)
    return hs


def birnn_forward_ref(inputs, params):
    emb = jnp.take(params["embedding"], inputs.T, axis=0).astype(jnp.float32)
    x = emb
    for layer in params["lstm"]:
        f = _ref_lstm_direction(x, *layer["fwd"])
        b = jnp.flip(_ref_lstm_direction(jnp.flip(x, axis=0), *layer["bwd"]), axis=0)
        x = jnp.concatenate([f, b], axis=-1)
    enc = jnp.concatenate([x[0], x[-1]], axis=-1)
    return enc @ params["dec_w"] + params["dec_b"]


# ---------------------------------------------------------------------------
# Deterministic parameter construction (matches BiRNN.__init__ shapes)
# ---------------------------------------------------------------------------
def make_params(key, vocab_len, embed_size, num_hiddens, num_layers):
    keys = jax.random.split(key, 3 + num_layers * 8)
    k_iter = iter(keys)
    scale = 1.0 / np.sqrt(num_hiddens)

    params = {}
    params["embedding"] = jax.random.normal(
        next(k_iter), (vocab_len, embed_size), jnp.float32)

    lstm_layers = []
    for layer in range(num_layers):
        d_in = embed_size if layer == 0 else 2 * num_hiddens
        layer_p = {}
        for direction in ("fwd", "bwd"):
            w_ih = jax.random.uniform(
                next(k_iter), (d_in, 4 * num_hiddens), jnp.float32, -scale, scale)
            w_hh = jax.random.uniform(
                next(k_iter), (num_hiddens, 4 * num_hiddens), jnp.float32, -scale, scale)
            b_ih = jax.random.uniform(
                next(k_iter), (1, 4 * num_hiddens), jnp.float32, -scale, scale)
            b_hh = jax.random.uniform(
                next(k_iter), (1, 4 * num_hiddens), jnp.float32, -scale, scale)
            layer_p[direction] = (w_ih, w_hh, b_ih + b_hh)
        lstm_layers.append(layer_p)
    params["lstm"] = lstm_layers

    dec_scale = 1.0 / np.sqrt(4 * num_hiddens)
    params["dec_w"] = jax.random.uniform(
        next(k_iter), (4 * num_hiddens, 5), jnp.float32, -dec_scale, dec_scale)
    params["dec_b"] = jax.random.uniform(
        next(k_iter), (1, 5), jnp.float32, -dec_scale, dec_scale)
    return params


# ---------------------------------------------------------------------------
if __name__ == "__main__":
    vocab_len, embed_size, num_hiddens, num_layers = 50, 32, 32, 2
    batch, seq_len = 2, 8

    key = jax.random.PRNGKey(0)
    k_tok, k_par = jax.random.split(key)
    inputs = jax.random.randint(k_tok, (batch, seq_len), 0, vocab_len, jnp.int32)
    params = make_params(k_par, vocab_len, embed_size, num_hiddens, num_layers)

    model = BiRNNPallas(params)
    out = jax.block_until_ready(model(inputs))

    ref = jax.block_until_ready(birnn_forward_ref(inputs, params))
    assert out.shape == (batch, 5), out.shape
    np.testing.assert_allclose(np.asarray(out), np.asarray(ref), rtol=1e-4, atol=1e-4)

    print("KERNEL_OK")
</pallas_src>

<mosaic_0001>
module attributes {stable_mosaic.version = 11 : i64} {
  func.func @_birnn_fused_kernel(%arg0: memref<2x8xi32, #tpu.memory_space<smem>>, %arg1: memref<50x1x32xf32, #tpu.memory_space<vmem>>, %arg2: memref<488x256xf32, #tpu.memory_space<vmem>>, %arg3: memref<2x5xf32, #tpu.memory_space<vmem>>, %arg4: memref<16x32xf32, #tpu.memory_space<vmem>>, %arg5: memref<16x64xf32, #tpu.memory_space<vmem>>) attributes {dimension_semantics = [], scalar_prefetch = 0 : i64, scratch_operands = 2 : i64, tpu.core_type = #tpu.core_type<tc>} {
    %c0 = arith.constant 0 : index
    %c0_0 = arith.constant 0 : index
    %0 = memref.load %arg0[%c0, %c0_0] : memref<2x8xi32, #tpu.memory_space<smem>>
    %1 = arith.index_cast %0 : i32 to index
    %c0_1 = arith.constant 0 : index
    %c0_2 = arith.constant 0 : index
    %2 = vector.load %arg1[%1, %c0_1, %c0_2] : memref<50x1x32xf32, #tpu.memory_space<vmem>>, vector<1x1x32xf32>
    %3 = vector.shape_cast %2 : vector<1x1x32xf32> to vector<1x32xf32>
    %c0_3 = arith.constant 0 : index
    %c0_4 = arith.constant 0 : index
    %4 = vector.load %arg4[%c0_3, %c0_4] : memref<16x32xf32, #tpu.memory_space<vmem>>, vector<1x32xf32>
    tpu.vector_store %arg4[%c0_3, %c0_4], %3 {strides = array<i32>} : memref<16x32xf32, #tpu.memory_space<vmem>>, vector<1x32xf32>,
    %c1 = arith.constant 1 : index
    %c0_5 = arith.constant 0 : index
    %5 = memref.load %arg0[%c1, %c0_5] : memref<2x8xi32, #tpu.memory_space<smem>>
    %6 = arith.index_cast %5 : i32 to index
    %c0_6 = arith.constant 0 : index
    %c0_7 = arith.constant 0 : index
    %7 = vector.load %arg1[%6, %c0_6, %c0_7] : memref<50x1x32xf32, #tpu.memory_space<vmem>>, vector<1x1x32xf32>
    %8 = vector.shape_cast %7 : vector<1x1x32xf32> to vector<1x32xf32>
    %c1_8 = arith.constant 1 : index
    %c0_9 = arith.constant 0 : index
    %9 = vector.load %arg4[%c1_8, %c0_9] : memref<16x32xf32, #tpu.memory_space<vmem>>, vector<1x32xf32>
    tpu.vector_store %arg4[%c1_8, %c0_9], %8 {strides = array<i32>} : memref<16x32xf32, #tpu.memory_space<vmem>>, vector<1x32xf32>,
    %c0_10 = arith.constant 0 : index
    %c1_11 = arith.constant 1 : index
    %10 = memref.load %arg0[%c0_10, %c1_11] : memref<2x8xi32, #tpu.memory_space<smem>>
    %11 = arith.index_cast %10 : i32 to index
    %c0_12 = arith.constant 0 : index
    %c0_13 = arith.constant 0 : index
    %12 = vector.load %arg1[%11, %c0_12, %c0_13] : memref<50x1x32xf32, #tpu.memory_space<vmem>>, vector<1x1x32xf32>
    %13 = vector.shape_cast %12 : vector<1x1x32xf32> to vector<1x32xf32>
    %c2 = arith.constant 2 : index
    %c0_14 = arith.constant 0 : index
    %14 = vector.load %arg4[%c2, %c0_14] : memref<16x32xf32, #tpu.memory_space<vmem>>, vector<1x32xf32>
    tpu.vector_store %arg4[%c2, %c0_14], %13 {strides = array<i32>} : memref<16x32xf32, #tpu.memory_space<vmem>>, vector<1x32xf32>,
    %c1_15 = arith.constant 1 : index
    %c1_16 = arith.constant 1 : index
    %15 = memref.load %arg0[%c1_15, %c1_16] : memref<2x8xi32, #tpu.memory_space<smem>>
    %16 = arith.index_cast %15 : i32 to index
    %c0_17 = arith.constant 0 : index
    %c0_18 = arith.constant 0 : index
    %17 = vector.load %arg1[%16, %c0_17, %c0_18] : memref<50x1x32xf32, #tpu.memory_space<vmem>>, vector<1x1x32xf32>
    %18 = vector.shape_cast %17 : vector<1x1x32xf32> to vector<1x32xf32>
    %c3 = arith.constant 3 : index
    %c0_19 = arith.constant 0 : index
    %19 = vector.load %arg4[%c3, %c0_19] : memref<16x32xf32, #tpu.memory_space<vmem>>, vector<1x32xf32>
    tpu.vector_store %arg4[%c3, %c0_19], %18 {strides = array<i32>} : memref<16x32xf32, #tpu.memory_space<vmem>>, vector<1x32xf32>,
    %c0_20 = arith.constant 0 : index
    %c2_21 = arith.constant 2 : index
    %20 = memref.load %arg0[%c0_20, %c2_21] : memref<2x8xi32, #tpu.memory_space<smem>>
    %21 = arith.index_cast %20 : i32 to index
    %c0_22 = arith.constant 0 : index
    %c0_23 = arith.constant 0 : index
    %22 = vector.load %arg1[%21, %c0_22, %c0_23] : memref<50x1x32xf32, #tpu.memory_space<vmem>>, vector<1x1x32xf32>
    %23 = vector.shape_cast %22 : vector<1x1x32xf32> to vector<1x32xf32>
    %c4 = arith.constant 4 : index
    %c0_24 = arith.constant 0 : index
    %24 = vector.load %arg4[%c4, %c0_24] : memref<16x32xf32, #tpu.memory_space<vmem>>, vector<1x32xf32>
    tpu.vector_store %arg4[%c4, %c0_24], %23 {strides = array<i32>} : memref<16x32xf32, #tpu.memory_space<vmem>>, vector<1x32xf32>,
    %c1_25 = arith.constant 1 : index
    %c2_26 = arith.constant 2 : index
    %25 = memref.load %arg0[%c1_25, %c2_26] : memref<2x8xi32, #tpu.memory_space<smem>>
    %26 = arith.index_cast %25 : i32 to index
    %c0_27 = arith.constant 0 : index
    %c0_28 = arith.constant 0 : index
    %27 = vector.load %arg1[%26, %c0_27, %c0_28] : memref<50x1x32xf32, #tpu.memory_space<vmem>>, vector<1x1x32xf32>
    %28 = vector.shape_cast %27 : vector<1x1x32xf32> to vector<1x32xf32>
    %c5 = arith.constant 5 : index
    %c0_29 = arith.constant 0 : index
    %29 = vector.load %arg4[%c5, %c0_29] : memref<16x32xf32, #tpu.memory_space<vmem>>, vector<1x32xf32>
    tpu.vector_store %arg4[%c5, %c0_29], %28 {strides = array<i32>} : memref<16x32xf32, #tpu.memory_space<vmem>>, vector<1x32xf32>,
    %c0_30 = arith.constant 0 : index
    %c3_31 = arith.constant 3 : index
    %30 = memref.load %arg0[%c0_30, %c3_31] : memref<2x8xi32, #tpu.memory_space<smem>>
    %31 = arith.index_cast %30 : i32 to index
    %c0_32 = arith.constant 0 : index
    %c0_33 = arith.constant 0 : index
    %32 = vector.load %arg1[%31, %c0_32, %c0_33] : memref<50x1x32xf32, #tpu.memory_space<vmem>>, vector<1x1x32xf32>
    %33 = vector.shape_cast %32 : vector<1x1x32xf32> to vector<1x32xf32>
    %c6 = arith.constant 6 : index
    %c0_34 = arith.constant 0 : index
    %34 = vector.load %arg4[%c6, %c0_34] : memref<16x32xf32, #tpu.memory_space<vmem>>, vector<1x32xf32>
    tpu.vector_store %arg4[%c6, %c0_34], %33 {strides = array<i32>} : memref<16x32xf32, #tpu.memory_space<vmem>>, vector<1x32xf32>,
    %c1_35 = arith.constant 1 : index
    %c3_36 = arith.constant 3 : index
    %35 = memref.load %arg0[%c1_35, %c3_36] : memref<2x8xi32, #tpu.memory_space<smem>>
    %36 = arith.index_cast %35 : i32 to index
    %c0_37 = arith.constant 0 : index
    %c0_38 = arith.constant 0 : index
    %37 = vector.load %arg1[%36, %c0_37, %c0_38] : memref<50x1x32xf32, #tpu.memory_space<vmem>>, vector<1x1x32xf32>
    %38 = vector.shape_cast %37 : vector<1x1x32xf32> to vector<1x32xf32>
    %c7 = arith.constant 7 : index
    %c0_39 = arith.constant 0 : index
    %39 = vector.load %arg4[%c7, %c0_39] : memref<16x32xf32, #tpu.memory_space<vmem>>, vector<1x32xf32>
    tpu.vector_store %arg4[%c7, %c0_39], %38 {strides = array<i32>} : memref<16x32xf32, #tpu.memory_space<vmem>>, vector<1x32xf32>,
    %c0_40 = arith.constant 0 : index
    %c4_41 = arith.constant 4 : index
    %40 = memref.load %arg0[%c0_40, %c4_41] : memref<2x8xi32, #tpu.memory_space<smem>>
    %41 = arith.index_cast %40 : i32 to index
    %c0_42 = arith.constant 0 : index
    %c0_43 = arith.constant 0 : index
    %42 = vector.load %arg1[%41, %c0_42, %c0_43] : memref<50x1x32xf32, #tpu.memory_space<vmem>>, vector<1x1x32xf32>
    %43 = vector.shape_cast %42 : vector<1x1x32xf32> to vector<1x32xf32>
    %c8 = arith.constant 8 : index
    %c0_44 = arith.constant 0 : index
    %44 = vector.load %arg4[%c8, %c0_44] : memref<16x32xf32, #tpu.memory_space<vmem>>, vector<1x32xf32>
    tpu.vector_store %arg4[%c8, %c0_44], %43 {strides = array<i32>} : memref<16x32xf32, #tpu.memory_space<vmem>>, vector<1x32xf32>,
    %c1_45 = arith.constant 1 : index
    %c4_46 = arith.constant 4 : index
    %45 = memref.load %arg0[%c1_45, %c4_46] : memref<2x8xi32, #tpu.memory_space<smem>>
    %46 = arith.index_cast %45 : i32 to index
    %c0_47 = arith.constant 0 : index
    %c0_48 = arith.constant 0 : index
    %47 = vector.load %arg1[%46, %c0_47, %c0_48] : memref<50x1x32xf32, #tpu.memory_space<vmem>>, vector<1x1x32xf32>
    %48 = vector.shape_cast %47 : vector<1x1x32xf32> to vector<1x32xf32>
    %c9 = arith.constant 9 : index
    %c0_49 = arith.constant 0 : index
    %49 = vector.load %arg4[%c9, %c0_49] : memref<16x32xf32, #tpu.memory_space<vmem>>, vector<1x32xf32>
    tpu.vector_store %arg4[%c9, %c0_49], %48 {strides = array<i32>} : memref<16x32xf32, #tpu.memory_space<vmem>>, vector<1x32xf32>,
    %c0_50 = arith.constant 0 : index
    %c5_51 = arith.constant 5 : index
    %50 = memref.load %arg0[%c0_50, %c5_51] : memref<2x8xi32, #tpu.memory_space<smem>>
    %51 = arith.index_cast %50 : i32 to index
    %c0_52 = arith.constant 0 : index
    %c0_53 = arith.constant 0 : index
    %52 = vector.load %arg1[%51, %c0_52, %c0_53] : memref<50x1x32xf32, #tpu.memory_space<vmem>>, vector<1x1x32xf32>
    %53 = vector.shape_cast %52 : vector<1x1x32xf32> to vector<1x32xf32>
    %c10 = arith.constant 10 : index
    %c0_54 = arith.constant 0 : index
    %54 = vector.load %arg4[%c10, %c0_54] : memref<16x32xf32, #tpu.memory_space<vmem>>, vector<1x32xf32>
    tpu.vector_store %arg4[%c10, %c0_54], %53 {strides = array<i32>} : memref<16x32xf32, #tpu.memory_space<vmem>>, vector<1x32xf32>,
    %c1_55 = arith.constant 1 : index
    %c5_56 = arith.constant 5 : index
    %55 = memref.load %arg0[%c1_55, %c5_56] : memref<2x8xi32, #tpu.memory_space<smem>>
    %56 = arith.index_cast %55 : i32 to index
    %c0_57 = arith.constant 0 : index
    %c0_58 = arith.constant 0 : index
    %57 = vector.load %arg1[%56, %c0_57, %c0_58] : memref<50x1x32xf32, #tpu.memory_space<vmem>>, vector<1x1x32xf32>
    %58 = vector.shape_cast %57 : vector<1x1x32xf32> to vector<1x32xf32>
    %c11 = arith.constant 11 : index
    %c0_59 = arith.constant 0 : index
    %59 = vector.load %arg4[%c11, %c0_59] : memref<16x32xf32, #tpu.memory_space<vmem>>, vector<1x32xf32>
    tpu.vector_store %arg4[%c11, %c0_59], %58 {strides = array<i32>} : memref<16x32xf32, #tpu.memory_space<vmem>>, vector<1x32xf32>,
    %c0_60 = arith.constant 0 : index
    %c6_61 = arith.constant 6 : index
    %60 = memref.load %arg0[%c0_60, %c6_61] : memref<2x8xi32, #tpu.memory_space<smem>>
    %61 = arith.index_cast %60 : i32 to index
    %c0_62 = arith.constant 0 : index
    %c0_63 = arith.constant 0 : index
    %62 = vector.load %arg1[%61, %c0_62, %c0_63] : memref<50x1x32xf32, #tpu.memory_space<vmem>>, vector<1x1x32xf32>
    %63 = vector.shape_cast %62 : vector<1x1x32xf32> to vector<1x32xf32>
    %c12 = arith.constant 12 : index
    %c0_64 = arith.constant 0 : index
    %64 = vector.load %arg4[%c12, %c0_64] : memref<16x32xf32, #tpu.memory_space<vmem>>, vector<1x32xf32>
    tpu.vector_store %arg4[%c12, %c0_64], %63 {strides = array<i32>} : memref<16x32xf32, #tpu.memory_space<vmem>>, vector<1x32xf32>,
    %c1_65 = arith.constant 1 : index
    %c6_66 = arith.constant 6 : index
    %65 = memref.load %arg0[%c1_65, %c6_66] : memref<2x8xi32, #tpu.memory_space<smem>>
    %66 = arith.index_cast %65 : i32 to index
    %c0_67 = arith.constant 0 : index
    %c0_68 = arith.constant 0 : index
    %67 = vector.load %arg1[%66, %c0_67, %c0_68] : memref<50x1x32xf32, #tpu.memory_space<vmem>>, vector<1x1x32xf32>
    %68 = vector.shape_cast %67 : vector<1x1x32xf32> to vector<1x32xf32>
    %c13 = arith.constant 13 : index
    %c0_69 = arith.constant 0 : index
    %69 = vector.load %arg4[%c13, %c0_69] : memref<16x32xf32, #tpu.memory_space<vmem>>, vector<1x32xf32>
    tpu.vector_store %arg4[%c13, %c0_69], %68 {strides = array<i32>} : memref<16x32xf32, #tpu.memory_space<vmem>>, vector<1x32xf32>,
    %c0_70 = arith.constant 0 : index
    %c7_71 = arith.constant 7 : index
    %70 = memref.load %arg0[%c0_70, %c7_71] : memref<2x8xi32, #tpu.memory_space<smem>>
    %71 = arith.index_cast %70 : i32 to index
    %c0_72 = arith.constant 0 : index
    %c0_73 = arith.constant 0 : index
    %72 = vector.load %arg1[%71, %c0_72, %c0_73] : memref<50x1x32xf32, #tpu.memory_space<vmem>>, vector<1x1x32xf32>
    %73 = vector.shape_cast %72 : vector<1x1x32xf32> to vector<1x32xf32>
    %c14 = arith.constant 14 : index
    %c0_74 = arith.constant 0 : index
    %74 = vector.load %arg4[%c14, %c0_74] : memref<16x32xf32, #tpu.memory_space<vmem>>, vector<1x32xf32>
    tpu.vector_store %arg4[%c14, %c0_74], %73 {strides = array<i32>} : memref<16x32xf32, #tpu.memory_space<vmem>>, vector<1x32xf32>,
    %c1_75 = arith.constant 1 : index
    %c7_76 = arith.constant 7 : index
    %75 = memref.load %arg0[%c1_75, %c7_76] : memref<2x8xi32, #tpu.memory_space<smem>>
    %76 = arith.index_cast %75 : i32 to index
    %c0_77 = arith.constant 0 : index
    %c0_78 = arith.constant 0 : index
    %77 = vector.load %arg1[%76, %c0_77, %c0_78] : memref<50x1x32xf32, #tpu.memory_space<vmem>>, vector<1x1x32xf32>
    %78 = vector.shape_cast %77 : vector<1x1x32xf32> to vector<1x32xf32>
    %c15 = arith.constant 15 : index
    %c0_79 = arith.constant 0 : index
    %79 = vector.load %arg4[%c15, %c0_79] : memref<16x32xf32, #tpu.memory_space<vmem>>, vector<1x32xf32>
    tpu.vector_store %arg4[%c15, %c0_79], %78 {strides = array<i32>} : memref<16x32xf32, #tpu.memory_space<vmem>>, vector<1x32xf32>,
    %c0_80 = arith.constant 0 : index
    %c0_81 = arith.constant 0 : index
    %80 = vector.load %arg4[%c0_80, %c0_81] : memref<16x32xf32, #tpu.memory_space<vmem>>, vector<16x32xf32>
    %c0_82 = arith.constant 0 : index
    %c0_83 = arith.constant 0 : index
    %81 = vector.load %arg2[%c0_82, %c0_83] : memref<488x256xf32, #tpu.memory_space<vmem>>, vector<32x256xf32>
    %cst = arith.constant dense<0.000000e+00> : vector<16x256xf32>
    %82 = tpu.matmul %80, %81, %cst {dimension_numbers = #tpu.dot_dimension_numbers<[1], [0], [0], [1], [0, 0, 1, 1], [], []>} : vector<16x32xf32>, vector<32x256xf32>, vector<16x256xf32> -> vector<16x256xf32>
    %c128 = arith.constant 128 : index
    %c0_84 = arith.constant 0 : index
    %83 = vector.load %arg2[%c128, %c0_84] : memref<488x256xf32, #tpu.memory_space<vmem>>, vector<1x256xf32>
    %84 = vector.broadcast %83 : vector<1x256xf32> to vector<16x256xf32>
    %85 = arith.addf %82, %84 : vector<16x256xf32>
    %c32 = arith.constant 32 : index
    %c0_85 = arith.constant 0 : index
    %86 = vector.load %arg2[%c32, %c0_85] : memref<488x256xf32, #tpu.memory_space<vmem>>, vector<32x256xf32>
    %cst_86 = arith.constant dense<0.000000e+00> : vector<16x256xf32>
    %87 = tpu.matmul %80, %86, %cst_86 {dimension_numbers = #tpu.dot_dimension_numbers<[1], [0], [0], [1], [0, 0, 1, 1], [], []>} : vector<16x32xf32>, vector<32x256xf32>, vector<16x256xf32> -> vector<16x256xf32>
    %c136 = arith.constant 136 : index
    %c0_87 = arith.constant 0 : index
    %88 = vector.load %arg2[%c136, %c0_87] : memref<488x256xf32, #tpu.memory_space<vmem>>, vector<1x256xf32>
    %89 = vector.broadcast %88 : vector<1x256xf32> to vector<16x256xf32>
    %90 = arith.addf %87, %89 : vector<16x256xf32>
    %c64 = arith.constant 64 : index
    %c0_88 = arith.constant 0 : index
    %91 = vector.load %arg2[%c64, %c0_88] : memref<488x256xf32, #tpu.memory_space<vmem>>, vector<64x256xf32>
    %cst_89 = arith.constant 0.000000e+00 : f32
    %92 = vector.broadcast %cst_89 : f32 to vector<2x64xf32>
    %93 = vector.extract_strided_slice %85 {offsets = [0, 0], sizes = [2, 256], strides = [1, 1]} : vector<16x256xf32> to vector<2x256xf32>
    %94 = vector.extract_strided_slice %90 {offsets = [14, 0], sizes = [2, 256], strides = [1, 1]} : vector<16x256xf32> to vector<2x256xf32>
    %95 = arith.addf %93, %94 : vector<2x256xf32>
    %96 = arith.negf %95 : vector<2x256xf32>
    %97 = math.exp %96 : vector<2x256xf32>
    %cst_90 = arith.constant 1.000000e+00 : f32
    %98 = vector.broadcast %cst_90 : f32 to vector<2x256xf32>
    %99 = arith.addf %98, %97 : vector<2x256xf32>
    %100 = arith.divf %98, %99 : vector<2x256xf32>
    %101 = vector.extract_strided_slice %100 {offsets = [0, 0], sizes = [2, 64], strides = [1, 1]} : vector<2x256xf32> to vector<2x64xf32>
    %102 = vector.extract_strided_slice %100 {offsets = [0, 64], sizes = [2, 64], strides = [1, 1]} : vector<2x256xf32> to vector<2x64xf32>
    %103 = vector.extract_strided_slice %100 {offsets = [0, 128], sizes = [2, 64], strides = [1, 1]} : vector<2x256xf32> to vector<2x64xf32>
    %cst_91 = arith.constant 2.000000e+00 : f32
    %104 = vector.broadcast %cst_91 : f32 to vector<2x64xf32>
    %105 = arith.mulf %104, %103 : vector<2x64xf32>
    %cst_92 = arith.constant 1.000000e+00 : f32
    %106 = vector.broadcast %cst_92 : f32 to vector<2x64xf32>
    %107 = arith.subf %105, %106 : vector<2x64xf32>
    %108 = vector.extract_strided_slice %100 {offsets = [0, 192], sizes = [2, 64], strides = [1, 1]} : vector<2x256xf32> to vector<2x64xf32>
    %109 = arith.mulf %102, %92 : vector<2x64xf32>
    %110 = arith.mulf %101, %107 : vector<2x64xf32>
    %111 = arith.addf %109, %110 : vector<2x64xf32>
    %112 = math.tanh %111 : vector<2x64xf32>
    %113 = arith.mulf %108, %112 : vector<2x64xf32>
    %114 = vector.extract_strided_slice %113 {offsets = [0, 0], sizes = [2, 32], strides = [1, 1]} : vector<2x64xf32> to vector<2x32xf32>
    %c0_93 = arith.constant 0 : index
    %c0_94 = arith.constant 0 : index
    %115 = vector.load %arg5[%c0_93, %c0_94] : memref<16x64xf32, #tpu.memory_space<vmem>>, vector<2x32xf32>
    tpu.vector_store %arg5[%c0_93, %c0_94], %114 {strides = array<i32>} : memref<16x64xf32, #tpu.memory_space<vmem>>, vector<2x32xf32>,
    %116 = vector.extract_strided_slice %113 {offsets = [0, 32], sizes = [2, 32], strides = [1, 1]} : vector<2x64xf32> to vector<2x32xf32>
    %c14_95 = arith.constant 14 : index
    %c32_96 = arith.constant 32 : index
    %117 = vector.load %arg5[%c14_95, %c32_96] : memref<16x64xf32, #tpu.memory_space<vmem>>, vector<2x32xf32>
    tpu.vector_store %arg5[%c14_95, %c32_96], %116 {strides = array<i32>} : memref<16x64xf32, #tpu.memory_space<vmem>>, vector<2x32xf32>,
    %118 = vector.extract_strided_slice %85 {offsets = [2, 0], sizes = [2, 256], strides = [1, 1]} : vector<16x256xf32> to vector<2x256xf32>
    %119 = vector.extract_strided_slice %90 {offsets = [12, 0], sizes = [2, 256], strides = [1, 1]} : vector<16x256xf32> to vector<2x256xf32>
    %120 = arith.addf %118, %119 : vector<2x256xf32>
    %cst_97 = arith.constant dense<0.000000e+00> : vector<2x256xf32>
    %121 = tpu.matmul %113, %91, %cst_97 {dimension_numbers = #tpu.dot_dimension_numbers<[1], [0], [0], [1], [0, 0, 1, 1], [], []>} : vector<2x64xf32>, vector<64x256xf32>, vector<2x256xf32> -> vector<2x256xf32>
    %122 = arith.addf %120, %121 : vector<2x256xf32>
    %123 = arith.negf %122 : vector<2x256xf32>
    %124 = math.exp %123 : vector<2x256xf32>
    %cst_98 = arith.constant 1.000000e+00 : f32
    %125 = vector.broadcast %cst_98 : f32 to vector<2x256xf32>
    %126 = arith.addf %125, %124 : vector<2x256xf32>
    %127 = arith.divf %125, %126 : vector<2x256xf32>
    %128 = vector.extract_strided_slice %127 {offsets = [0, 0], sizes = [2, 64], strides = [1, 1]} : vector<2x256xf32> to vector<2x64xf32>
    %129 = vector.extract_strided_slice %127 {offsets = [0, 64], sizes = [2, 64], strides = [1, 1]} : vector<2x256xf32> to vector<2x64xf32>
    %130 = vector.extract_strided_slice %127 {offsets = [0, 128], sizes = [2, 64], strides = [1, 1]} : vector<2x256xf32> to vector<2x64xf32>
    %cst_99 = arith.constant 2.000000e+00 : f32
    %131 = vector.broadcast %cst_99 : f32 to vector<2x64xf32>
    %132 = arith.mulf %131, %130 : vector<2x64xf32>
    %cst_100 = arith.constant 1.000000e+00 : f32
    %133 = vector.broadcast %cst_100 : f32 to vector<2x64xf32>
    %134 = arith.subf %132, %133 : vector<2x64xf32>
    %135 = vector.extract_strided_slice %127 {offsets = [0, 192], sizes = [2, 64], strides = [1, 1]} : vector<2x256xf32> to vector<2x64xf32>
    %136 = arith.mulf %129, %111 : vector<2x64xf32>
    %137 = arith.mulf %128, %134 : vector<2x64xf32>
    %138 = arith.addf %136, %137 : vector<2x64xf32>
    %139 = math.tanh %138 : vector<2x64xf32>
    %140 = arith.mulf %135, %139 : vector<2x64xf32>
    %141 = vector.extract_strided_slice %140 {offsets = [0, 0], sizes = [2, 32], strides = [1, 1]} : vector<2x64xf32> to vector<2x32xf32>
    %c2_101 = arith.constant 2 : index
    %c0_102 = arith.constant 0 : index
    %142 = vector.load %arg5[%c2_101, %c0_102] : memref<16x64xf32, #tpu.memory_space<vmem>>, vector<2x32xf32>
    tpu.vector_store %arg5[%c2_101, %c0_102], %141 {strides = array<i32>} : memref<16x64xf32, #tpu.memory_space<vmem>>, vector<2x32xf32>,
    %143 = vector.extract_strided_slice %140 {offsets = [0, 32], sizes = [2, 32], strides = [1, 1]} : vector<2x64xf32> to vector<2x32xf32>
    %c12_103 = arith.constant 12 : index
    %c32_104 = arith.constant 32 : index
    %144 = vector.load %arg5[%c12_103, %c32_104] : memref<16x64xf32, #tpu.memory_space<vmem>>, vector<2x32xf32>
    tpu.vector_store %arg5[%c12_103, %c32_104], %143 {strides = array<i32>} : memref<16x64xf32, #tpu.memory_space<vmem>>, vector<2x32xf32>,
    %145 = vector.extract_strided_slice %85 {offsets = [4, 0], sizes = [2, 256], strides = [1, 1]} : vector<16x256xf32> to vector<2x256xf32>
    %146 = vector.extract_strided_slice %90 {offsets = [10, 0], sizes = [2, 256], strides = [1, 1]} : vector<16x256xf32> to vector<2x256xf32>
    %147 = arith.addf %145, %146 : vector<2x256xf32>
    %cst_105 = arith.constant dense<0.000000e+00> : vector<2x256xf32>
    %148 = tpu.matmul %140, %91, %cst_105 {dimension_numbers = #tpu.dot_dimension_numbers<[1], [0], [0], [1], [0, 0, 1, 1], [], []>} : vector<2x64xf32>, vector<64x256xf32>, vector<2x256xf32> -> vector<2x256xf32>
    %149 = arith.addf %147, %148 : vector<2x256xf32>
    %150 = arith.negf %149 : vector<2x256xf32>
    %151 = math.exp %150 : vector<2x256xf32>
    %cst_106 = arith.constant 1.000000e+00 : f32
    %152 = vector.broadcast %cst_106 : f32 to vector<2x256xf32>
    %153 = arith.addf %152, %151 : vector<2x256xf32>
    %154 = arith.divf %152, %153 : vector<2x256xf32>
    %155 = vector.extract_strided_slice %154 {offsets = [0, 0], sizes = [2, 64], strides = [1, 1]} : vector<2x256xf32> to vector<2x64xf32>
    %156 = vector.extract_strided_slice %154 {offsets = [0, 64], sizes = [2, 64], strides = [1, 1]} : vector<2x256xf32> to vector<2x64xf32>
    %157 = vector.extract_strided_slice %154 {offsets = [0, 128], sizes = [2, 64], strides = [1, 1]} : vector<2x256xf32> to vector<2x64xf32>
    %cst_107 = arith.constant 2.000000e+00 : f32
    %158 = vector.broadcast %cst_107 : f32 to vector<2x64xf32>
    %159 = arith.mulf %158, %157 : vector<2x64xf32>
    %cst_108 = arith.constant 1.000000e+00 : f32
    %160 = vector.broadcast %cst_108 : f32 to vector<2x64xf32>
    %161 = arith.subf %159, %160 : vector<2x64xf32>
    %162 = vector.extract_strided_slice %154 {offsets = [0, 192], sizes = [2, 64], strides = [1, 1]} : vector<2x256xf32> to vector<2x64xf32>
    %163 = arith.mulf %156, %138 : vector<2x64xf32>
    %164 = arith.mulf %155, %161 : vector<2x64xf32>
    %165 = arith.addf %163, %164 : vector<2x64xf32>
    %166 = math.tanh %165 : vector<2x64xf32>
    %167 = arith.mulf %162, %166 : vector<2x64xf32>
    %168 = vector.extract_strided_slice %167 {offsets = [0, 0], sizes = [2, 32], strides = [1, 1]} : vector<2x64xf32> to vector<2x32xf32>
    %c4_109 = arith.constant 4 : index
    %c0_110 = arith.constant 0 : index
    %169 = vector.load %arg5[%c4_109, %c0_110] : memref<16x64xf32, #tpu.memory_space<vmem>>, vector<2x32xf32>
    tpu.vector_store %arg5[%c4_109, %c0_110], %168 {strides = array<i32>} : memref<16x64xf32, #tpu.memory_space<vmem>>, vector<2x32xf32>,
    %170 = vector.extract_strided_slice %167 {offsets = [0, 32], sizes = [2, 32], strides = [1, 1]} : vector<2x64xf32> to vector<2x32xf32>
    %c10_111 = arith.constant 10 : index
    %c32_112 = arith.constant 32 : index
    %171 = vector.load %arg5[%c10_111, %c32_112] : memref<16x64xf32, #tpu.memory_space<vmem>>, vector<2x32xf32>
    tpu.vector_store %arg5[%c10_111, %c32_112], %170 {strides = array<i32>} : memref<16x64xf32, #tpu.memory_space<vmem>>, vector<2x32xf32>,
    %172 = vector.extract_strided_slice %85 {offsets = [6, 0], sizes = [2, 256], strides = [1, 1]} : vector<16x256xf32> to vector<2x256xf32>
    %173 = vector.extract_strided_slice %90 {offsets = [8, 0], sizes = [2, 256], strides = [1, 1]} : vector<16x256xf32> to vector<2x256xf32>
    %174 = arith.addf %172, %173 : vector<2x256xf32>
    %cst_113 = arith.constant dense<0.000000e+00> : vector<2x256xf32>
    %175 = tpu.matmul %167, %91, %cst_113 {dimension_numbers = #tpu.dot_dimension_numbers<[1], [0], [0], [1], [0, 0, 1, 1], [], []>} : vector<2x64xf32>, vector<64x256xf32>, vector<2x256xf32> -> vector<2x256xf32>
    %176 = arith.addf %174, %175 : vector<2x256xf32>
    %177 = arith.negf %176 : vector<2x256xf32>
    %178 = math.exp %177 : vector<2x256xf32>
    %cst_114 = arith.constant 1.000000e+00 : f32
    %179 = vector.broadcast %cst_114 : f32 to vector<2x256xf32>
    %180 = arith.addf %179, %178 : vector<2x256xf32>
    %181 = arith.divf %179, %180 : vector<2x256xf32>
    %182 = vector.extract_strided_slice %181 {offsets = [0, 0], sizes = [2, 64], strides = [1, 1]} : vector<2x256xf32> to vector<2x64xf32>
    %183 = vector.extract_strided_slice %181 {offsets = [0, 64], sizes = [2, 64], strides = [1, 1]} : vector<2x256xf32> to vector<2x64xf32>
    %184 = vector.extract_strided_slice %181 {offsets = [0, 128], sizes = [2, 64], strides = [1, 1]} : vector<2x256xf32> to vector<2x64xf32>
    %cst_115 = arith.constant 2.000000e+00 : f32
    %185 = vector.broadcast %cst_115 : f32 to vector<2x64xf32>
    %186 = arith.mulf %185, %184 : vector<2x64xf32>
    %cst_116 = arith.constant 1.000000e+00 : f32
    %187 = vector.broadcast %cst_116 : f32 to vector<2x64xf32>
    %188 = arith.subf %186, %187 : vector<2x64xf32>
    %189 = vector.extract_strided_slice %181 {offsets = [0, 192], sizes = [2, 64], strides = [1, 1]} : vector<2x256xf32> to vector<2x64xf32>
    %190 = arith.mulf %183, %165 : vector<2x64xf32>
    %191 = arith.mulf %182, %188 : vector<2x64xf32>
    %192 = arith.addf %190, %191 : vector<2x64xf32>
    %193 = math.tanh %192 : vector<2x64xf32>
    %194 = arith.mulf %189, %193 : vector<2x64xf32>
    %195 = vector.extract_strided_slice %194 {offsets = [0, 0], sizes = [2, 32], strides = [1, 1]} : vector<2x64xf32> to vector<2x32xf32>
    %c6_117 = arith.constant 6 : index
    %c0_118 = arith.constant 0 : index
    %196 = vector.load %arg5[%c6_117, %c0_118] : memref<16x64xf32, #tpu.memory_space<vmem>>, vector<2x32xf32>
    tpu.vector_store %arg5[%c6_117, %c0_118], %195 {strides = array<i32>} : memref<16x64xf32, #tpu.memory_space<vmem>>, vector<2x32xf32>,
    %197 = vector.extract_strided_slice %194 {offsets = [0, 32], sizes = [2, 32], strides = [1, 1]} : vector<2x64xf32> to vector<2x32xf32>
    %c8_119 = arith.constant 8 : index
    %c32_120 = arith.constant 32 : index
    %198 = vector.load %arg5[%c8_119, %c32_120] : memref<16x64xf32, #tpu.memory_space<vmem>>, vector<2x32xf32>
    tpu.vector_store %arg5[%c8_119, %c32_120], %197 {strides = array<i32>} : memref<16x64xf32, #tpu.memory_space<vmem>>, vector<2x32xf32>,
    %199 = vector.extract_strided_slice %85 {offsets = [8, 0], sizes = [2, 256], strides = [1, 1]} : vector<16x256xf32> to vector<2x256xf32>
    %200 = vector.extract_strided_slice %90 {offsets = [6, 0], sizes = [2, 256], strides = [1, 1]} : vector<16x256xf32> to vector<2x256xf32>
    %201 = arith.addf %199, %200 : vector<2x256xf32>
    %cst_121 = arith.constant dense<0.000000e+00> : vector<2x256xf32>
    %202 = tpu.matmul %194, %91, %cst_121 {dimension_numbers = #tpu.dot_dimension_numbers<[1], [0], [0], [1], [0, 0, 1, 1], [], []>} : vector<2x64xf32>, vector<64x256xf32>, vector<2x256xf32> -> vector<2x256xf32>
    %203 = arith.addf %201, %202 : vector<2x256xf32>
    %204 = arith.negf %203 : vector<2x256xf32>
    %205 = math.exp %204 : vector<2x256xf32>
    %cst_122 = arith.constant 1.000000e+00 : f32
    %206 = vector.broadcast %cst_122 : f32 to vector<2x256xf32>
    %207 = arith.addf %206, %205 : vector<2x256xf32>
    %208 = arith.divf %206, %207 : vector<2x256xf32>
    %209 = vector.extract_strided_slice %208 {offsets = [0, 0], sizes = [2, 64], strides = [1, 1]} : vector<2x256xf32> to vector<2x64xf32>
    %210 = vector.extract_strided_slice %208 {offsets = [0, 64], sizes = [2, 64], strides = [1, 1]} : vector<2x256xf32> to vector<2x64xf32>
    %211 = vector.extract_strided_slice %208 {offsets = [0, 128], sizes = [2, 64], strides = [1, 1]} : vector<2x256xf32> to vector<2x64xf32>
    %cst_123 = arith.constant 2.000000e+00 : f32
    %212 = vector.broadcast %cst_123 : f32 to vector<2x64xf32>
    %213 = arith.mulf %212, %211 : vector<2x64xf32>
    %cst_124 = arith.constant 1.000000e+00 : f32
    %214 = vector.broadcast %cst_124 : f32 to vector<2x64xf32>
    %215 = arith.subf %213, %214 : vector<2x64xf32>
    %216 = vector.extract_strided_slice %208 {offsets = [0, 192], sizes = [2, 64], strides = [1, 1]} : vector<2x256xf32> to vector<2x64xf32>
    %217 = arith.mulf %210, %192 : vector<2x64xf32>
    %218 = arith.mulf %209, %215 : vector<2x64xf32>
    %219 = arith.addf %217, %218 : vector<2x64xf32>
    %220 = math.tanh %219 : vector<2x64xf32>
    %221 = arith.mulf %216, %220 : vector<2x64xf32>
    %222 = vector.extract_strided_slice %221 {offsets = [0, 0], sizes = [2, 32], strides = [1, 1]} : vector<2x64xf32> to vector<2x32xf32>
    %c8_125 = arith.constant 8 : index
    %c0_126 = arith.constant 0 : index
    %223 = vector.load %arg5[%c8_125, %c0_126] : memref<16x64xf32, #tpu.memory_space<vmem>>, vector<2x32xf32>
    tpu.vector_store %arg5[%c8_125, %c0_126], %222 {strides = array<i32>} : memref<16x64xf32, #tpu.memory_space<vmem>>, vector<2x32xf32>,
    %224 = vector.extract_strided_slice %221 {offsets = [0, 32], sizes = [2, 32], strides = [1, 1]} : vector<2x64xf32> to vector<2x32xf32>
    %c6_127 = arith.constant 6 : index
    %c32_128 = arith.constant 32 : index
    %225 = vector.load %arg5[%c6_127, %c32_128] : memref<16x64xf32, #tpu.memory_space<vmem>>, vector<2x32xf32>
    tpu.vector_store %arg5[%c6_127, %c32_128], %224 {strides = array<i32>} : memref<16x64xf32, #tpu.memory_space<vmem>>, vector<2x32xf32>,
    %226 = vector.extract_strided_slice %85 {offsets = [10, 0], sizes = [2, 256], strides = [1, 1]} : vector<16x256xf32> to vector<2x256xf32>
    %227 = vector.extract_strided_slice %90 {offsets = [4, 0], sizes = [2, 256], strides = [1, 1]} : vector<16x256xf32> to vector<2x256xf32>
    %228 = arith.addf %226, %227 : vector<2x256xf32>
    %cst_129 = arith.constant dense<0.000000e+00> : vector<2x256xf32>
    %229 = tpu.matmul %221, %91, %cst_129 {dimension_numbers = #tpu.dot_dimension_numbers<[1], [0], [0], [1], [0, 0, 1, 1], [], []>} : vector<2x64xf32>, vector<64x256xf32>, vector<2x256xf32> -> vector<2x256xf32>
    %230 = arith.addf %228, %229 : vector<2x256xf32>
    %231 = arith.negf %230 : vector<2x256xf32>
    %232 = math.exp %231 : vector<2x256xf32>
    %cst_130 = arith.constant 1.000000e+00 : f32
    %233 = vector.broadcast %cst_130 : f32 to vector<2x256xf32>
    %234 = arith.addf %233, %232 : vector<2x256xf32>
    %235 = arith.divf %233, %234 : vector<2x256xf32>
    %236 = vector.extract_strided_slice %235 {offsets = [0, 0], sizes = [2, 64], strides = [1, 1]} : vector<2x256xf32> to vector<2x64xf32>
    %237 = vector.extract_strided_slice %235 {offsets = [0, 64], sizes = [2, 64], strides = [1, 1]} : vector<2x256xf32> to vector<2x64xf32>
    %238 = vector.extract_strided_slice %235 {offsets = [0, 128], sizes = [2, 64], strides = [1, 1]} : vector<2x256xf32> to vector<2x64xf32>
    %cst_131 = arith.constant 2.000000e+00 : f32
    %239 = vector.broadcast %cst_131 : f32 to vector<2x64xf32>
    %240 = arith.mulf %239, %238 : vector<2x64xf32>
    %cst_132 = arith.constant 1.000000e+00 : f32
    %241 = vector.broadcast %cst_132 : f32 to vector<2x64xf32>
    %242 = arith.subf %240, %241 : vector<2x64xf32>
    %243 = vector.extract_strided_slice %235 {offsets = [0, 192], sizes = [2, 64], strides = [1, 1]} : vector<2x256xf32> to vector<2x64xf32>
    %244 = arith.mulf %237, %219 : vector<2x64xf32>
    %245 = arith.mulf %236, %242 : vector<2x64xf32>
    %246 = arith.addf %244, %245 : vector<2x64xf32>
    %247 = math.tanh %246 : vector<2x64xf32>
    %248 = arith.mulf %243, %247 : vector<2x64xf32>
    %249 = vector.extract_strided_slice %248 {offsets = [0, 0], sizes = [2, 32], strides = [1, 1]} : vector<2x64xf32> to vector<2x32xf32>
    %c10_133 = arith.constant 10 : index
    %c0_134 = arith.constant 0 : index
    %250 = vector.load %arg5[%c10_133, %c0_134] : memref<16x64xf32, #tpu.memory_space<vmem>>, vector<2x32xf32>
    tpu.vector_store %arg5[%c10_133, %c0_134], %249 {strides = array<i32>} : memref<16x64xf32, #tpu.memory_space<vmem>>, vector<2x32xf32>,
    %251 = vector.extract_strided_slice %248 {offsets = [0, 32], sizes = [2, 32], strides = [1, 1]} : vector<2x64xf32> to vector<2x32xf32>
    %c4_135 = arith.constant 4 : index
    %c32_136 = arith.constant 32 : index
    %252 = vector.load %arg5[%c4_135, %c32_136] : memref<16x64xf32, #tpu.memory_space<vmem>>, vector<2x32xf32>
    tpu.vector_store %arg5[%c4_135, %c32_136], %251 {strides = array<i32>} : memref<16x64xf32, #tpu.memory_space<vmem>>, vector<2x32xf32>,
    %253 = vector.extract_strided_slice %85 {offsets = [12, 0], sizes = [2, 256], strides = [1, 1]} : vector<16x256xf32> to vector<2x256xf32>
    %254 = vector.extract_strided_slice %90 {offsets = [2, 0], sizes = [2, 256], strides = [1, 1]} : vector<16x256xf32> to vector<2x256xf32>
    %255 = arith.addf %253, %254 : vector<2x256xf32>
    %cst_137 = arith.constant dense<0.000000e+00> : vector<2x256xf32>
    %256 = tpu.matmul %248, %91, %cst_137 {dimension_numbers = #tpu.dot_dimension_numbers<[1], [0], [0], [1], [0, 0, 1, 1], [], []>} : vector<2x64xf32>, vector<64x256xf32>, vector<2x256xf32> -> vector<2x256xf32>
    %257 = arith.addf %255, %256 : vector<2x256xf32>
    %258 = arith.negf %257 : vector<2x256xf32>
    %259 = math.exp %258 : vector<2x256xf32>
    %cst_138 = arith.constant 1.000000e+00 : f32
    %260 = vector.broadcast %cst_138 : f32 to vector<2x256xf32>
    %261 = arith.addf %260, %259 : vector<2x256xf32>
    %262 = arith.divf %260, %261 : vector<2x256xf32>
    %263 = vector.extract_strided_slice %262 {offsets = [0, 0], sizes = [2, 64], strides = [1, 1]} : vector<2x256xf32> to vector<2x64xf32>
    %264 = vector.extract_strided_slice %262 {offsets = [0, 64], sizes = [2, 64], strides = [1, 1]} : vector<2x256xf32> to vector<2x64xf32>
    %265 = vector.extract_strided_slice %262 {offsets = [0, 128], sizes = [2, 64], strides = [1, 1]} : vector<2x256xf32> to vector<2x64xf32>
    %cst_139 = arith.constant 2.000000e+00 : f32
    %266 = vector.broadcast %cst_139 : f32 to vector<2x64xf32>
    %267 = arith.mulf %266, %265 : vector<2x64xf32>
    %cst_140 = arith.constant 1.000000e+00 : f32
    %268 = vector.broadcast %cst_140 : f32 to vector<2x64xf32>
    %269 = arith.subf %267, %268 : vector<2x64xf32>
    %270 = vector.extract_strided_slice %262 {offsets = [0, 192], sizes = [2, 64], strides = [1, 1]} : vector<2x256xf32> to vector<2x64xf32>
    %271 = arith.mulf %264, %246 : vector<2x64xf32>
    %272 = arith.mulf %263, %269 : vector<2x64xf32>
    %273 = arith.addf %271, %272 : vector<2x64xf32>
    %274 = math.tanh %273 : vector<2x64xf32>
    %275 = arith.mulf %270, %274 : vector<2x64xf32>
    %276 = vector.extract_strided_slice %275 {offsets = [0, 0], sizes = [2, 32], strides = [1, 1]} : vector<2x64xf32> to vector<2x32xf32>
    %c12_141 = arith.constant 12 : index
    %c0_142 = arith.constant 0 : index
    %277 = vector.load %arg5[%c12_141, %c0_142] : memref<16x64xf32, #tpu.memory_space<vmem>>, vector<2x32xf32>
    tpu.vector_store %arg5[%c12_141, %c0_142], %276 {strides = array<i32>} : memref<16x64xf32, #tpu.memory_space<vmem>>, vector<2x32xf32>,
    %278 = vector.extract_strided_slice %275 {offsets = [0, 32], sizes = [2, 32], strides = [1, 1]} : vector<2x64xf32> to vector<2x32xf32>
    %c2_143 = arith.constant 2 : index
    %c32_144 = arith.constant 32 : index
    %279 = vector.load %arg5[%c2_143, %c32_144] : memref<16x64xf32, #tpu.memory_space<vmem>>, vector<2x32xf32>
    tpu.vector_store %arg5[%c2_143, %c32_144], %278 {strides = array<i32>} : memref<16x64xf32, #tpu.memory_space<vmem>>, vector<2x32xf32>,
    %280 = vector.extract_strided_slice %85 {offsets = [14, 0], sizes = [2, 256], strides = [1, 1]} : vector<16x256xf32> to vector<2x256xf32>
    %281 = vector.extract_strided_slice %90 {offsets = [0, 0], sizes = [2, 256], strides = [1, 1]} : vector<16x256xf32> to vector<2x256xf32>
    %282 = arith.addf %280, %281 : vector<2x256xf32>
    %cst_145 = arith.constant dense<0.000000e+00> : vector<2x256xf32>
    %283 = tpu.matmul %275, %91, %cst_145 {dimension_numbers = #tpu.dot_dimension_numbers<[1], [0], [0], [1], [0, 0, 1, 1], [], []>} : vector<2x64xf32>, vector<64x256xf32>, vector<2x256xf32> -> vector<2x256xf32>
    %284 = arith.addf %282, %283 : vector<2x256xf32>
    %285 = arith.negf %284 : vector<2x256xf32>
    %286 = math.exp %285 : vector<2x256xf32>
    %cst_146 = arith.constant 1.000000e+00 : f32
    %287 = vector.broadcast %cst_146 : f32 to vector<2x256xf32>
    %288 = arith.addf %287, %286 : vector<2x256xf32>
    %289 = arith.divf %287, %288 : vector<2x256xf32>
    %290 = vector.extract_strided_slice %289 {offsets = [0, 0], sizes = [2, 64], strides = [1, 1]} : vector<2x256xf32> to vector<2x64xf32>
    %291 = vector.extract_strided_slice %289 {offsets = [0, 64], sizes = [2, 64], strides = [1, 1]} : vector<2x256xf32> to vector<2x64xf32>
    %292 = vector.extract_strided_slice %289 {offsets = [0, 128], sizes = [2, 64], strides = [1, 1]} : vector<2x256xf32> to vector<2x64xf32>
    %cst_147 = arith.constant 2.000000e+00 : f32
    %293 = vector.broadcast %cst_147 : f32 to vector<2x64xf32>
    %294 = arith.mulf %293, %292 : vector<2x64xf32>
    %cst_148 = arith.constant 1.000000e+00 : f32
    %295 = vector.broadcast %cst_148 : f32 to vector<2x64xf32>
    %296 = arith.subf %294, %295 : vector<2x64xf32>
    %297 = vector.extract_strided_slice %289 {offsets = [0, 192], sizes = [2, 64], strides = [1, 1]} : vector<2x256xf32> to vector<2x64xf32>
    %298 = arith.mulf %291, %273 : vector<2x64xf32>
    %299 = arith.mulf %290, %296 : vector<2x64xf32>
    %300 = arith.addf %298, %299 : vector<2x64xf32>
    %301 = math.tanh %300 : vector<2x64xf32>
    %302 = arith.mulf %297, %301 : vector<2x64xf32>
    %303 = vector.extract_strided_slice %302 {offsets = [0, 0], sizes = [2, 32], strides = [1, 1]} : vector<2x64xf32> to vector<2x32xf32>
    %c14_149 = arith.constant 14 : index
    %c0_150 = arith.constant 0 : index
    %304 = vector.load %arg5[%c14_149, %c0_150] : memref<16x64xf32, #tpu.memory_space<vmem>>, vector<2x32xf32>
    tpu.vector_store %arg5[%c14_149, %c0_150], %303 {strides = array<i32>} : memref<16x64xf32, #tpu.memory_space<vmem>>, vector<2x32xf32>,
    %305 = vector.extract_strided_slice %302 {offsets = [0, 32], sizes = [2, 32], strides = [1, 1]} : vector<2x64xf32> to vector<2x32xf32>
    %c0_151 = arith.constant 0 : index
    %c32_152 = arith.constant 32 : index
    %306 = vector.load %arg5[%c0_151, %c32_152] : memref<16x64xf32, #tpu.memory_space<vmem>>, vector<2x32xf32>
    tpu.vector_store %arg5[%c0_151, %c32_152], %305 {strides = array<i32>} : memref<16x64xf32, #tpu.memory_space<vmem>>, vector<2x32xf32>,
    %c0_153 = arith.constant 0 : index
    %c0_154 = arith.constant 0 : index
    %307 = vector.load %arg5[%c0_153, %c0_154] : memref<16x64xf32, #tpu.memory_space<vmem>>, vector<16x64xf32>
    %c144 = arith.constant 144 : index
    %c0_155 = arith.constant 0 : index
    %308 = vector.load %arg2[%c144, %c0_155] : memref<488x256xf32, #tpu.memory_space<vmem>>, vector<64x256xf32>
    %cst_156 = arith.constant dense<0.000000e+00> : vector<16x256xf32>
    %309 = tpu.matmul %307, %308, %cst_156 {dimension_numbers = #tpu.dot_dimension_numbers<[1], [0], [0], [1], [0, 0, 1, 1], [], []>} : vector<16x64xf32>, vector<64x256xf32>, vector<16x256xf32> -> vector<16x256xf32>
    %c336 = arith.constant 336 : index
    %c0_157 = arith.constant 0 : index
    %310 = vector.load %arg2[%c336, %c0_157] : memref<488x256xf32, #tpu.memory_space<vmem>>, vector<1x256xf32>
    %311 = vector.broadcast %310 : vector<1x256xf32> to vector<16x256xf32>
    %312 = arith.addf %309, %311 : vector<16x256xf32>
    %c208 = arith.constant 208 : index
    %c0_158 = arith.constant 0 : index
    %313 = vector.load %arg2[%c208, %c0_158] : memref<488x256xf32, #tpu.memory_space<vmem>>, vector<64x256xf32>
    %cst_159 = arith.constant dense<0.000000e+00> : vector<16x256xf32>
    %314 = tpu.matmul %307, %313, %cst_159 {dimension_numbers = #tpu.dot_dimension_numbers<[1], [0], [0], [1], [0, 0, 1, 1], [], []>} : vector<16x64xf32>, vector<64x256xf32>, vector<16x256xf32> -> vector<16x256xf32>
    %c344 = arith.constant 344 : index
    %c0_160 = arith.constant 0 : index
    %315 = vector.load %arg2[%c344, %c0_160] : memref<488x256xf32, #tpu.memory_space<vmem>>, vector<1x256xf32>
    %316 = vector.broadcast %315 : vector<1x256xf32> to vector<16x256xf32>
    %317 = arith.addf %314, %316 : vector<16x256xf32>
    %c272 = arith.constant 272 : index
    %c0_161 = arith.constant 0 : index
    %318 = vector.load %arg2[%c272, %c0_161] : memref<488x256xf32, #tpu.memory_space<vmem>>, vector<64x256xf32>
    %cst_162 = arith.constant 0.000000e+00 : f32
    %319 = vector.broadcast %cst_162 : f32 to vector<2x64xf32>
    %320 = vector.extract_strided_slice %312 {offsets = [0, 0], sizes = [2, 256], strides = [1, 1]} : vector<16x256xf32> to vector<2x256xf32>
    %321 = vector.extract_strided_slice %317 {offsets = [14, 0], sizes = [2, 256], strides = [1, 1]} : vector<16x256xf32> to vector<2x256xf32>
    %322 = arith.addf %320, %321 : vector<2x256xf32>
    %323 = arith.negf %322 : vector<2x256xf32>
    %324 = math.exp %323 : vector<2x256xf32>
    %cst_163 = arith.constant 1.000000e+00 : f32
    %325 = vector.broadcast %cst_163 : f32 to vector<2x256xf32>
    %326 = arith.addf %325, %324 : vector<2x256xf32>
    %327 = arith.divf %325, %326 : vector<2x256xf32>
    %328 = vector.extract_strided_slice %327 {offsets = [0, 0], sizes = [2, 64], strides = [1, 1]} : vector<2x256xf32> to vector<2x64xf32>
    %329 = vector.extract_strided_slice %327 {offsets = [0, 64], sizes = [2, 64], strides = [1, 1]} : vector<2x256xf32> to vector<2x64xf32>
    %330 = vector.extract_strided_slice %327 {offsets = [0, 128], sizes = [2, 64], strides = [1, 1]} : vector<2x256xf32> to vector<2x64xf32>
    %cst_164 = arith.constant 2.000000e+00 : f32
    %331 = vector.broadcast %cst_164 : f32 to vector<2x64xf32>
    %332 = arith.mulf %331, %330 : vector<2x64xf32>
    %cst_165 = arith.constant 1.000000e+00 : f32
    %333 = vector.broadcast %cst_165 : f32 to vector<2x64xf32>
    %334 = arith.subf %332, %333 : vector<2x64xf32>
    %335 = vector.extract_strided_slice %327 {offsets = [0, 192], sizes = [2, 64], strides = [1, 1]} : vector<2x256xf32> to vector<2x64xf32>
    %336 = arith.mulf %329, %319 : vector<2x64xf32>
    %337 = arith.mulf %328, %334 : vector<2x64xf32>
    %338 = arith.addf %336, %337 : vector<2x64xf32>
    %339 = math.tanh %338 : vector<2x64xf32>
    %340 = arith.mulf %335, %339 : vector<2x64xf32>
    %341 = vector.extract_strided_slice %312 {offsets = [2, 0], sizes = [2, 256], strides = [1, 1]} : vector<16x256xf32> to vector<2x256xf32>
    %342 = vector.extract_strided_slice %317 {offsets = [12, 0], sizes = [2, 256], strides = [1, 1]} : vector<16x256xf32> to vector<2x256xf32>
    %343 = arith.addf %341, %342 : vector<2x256xf32>
    %cst_166 = arith.constant dense<0.000000e+00> : vector<2x256xf32>
    %344 = tpu.matmul %340, %318, %cst_166 {dimension_numbers = #tpu.dot_dimension_numbers<[1], [0], [0], [1], [0, 0, 1, 1], [], []>} : vector<2x64xf32>, vector<64x256xf32>, vector<2x256xf32> -> vector<2x256xf32>
    %345 = arith.addf %343, %344 : vector<2x256xf32>
    %346 = arith.negf %345 : vector<2x256xf32>
    %347 = math.exp %346 : vector<2x256xf32>
    %cst_167 = arith.constant 1.000000e+00 : f32
    %348 = vector.broadcast %cst_167 : f32 to vector<2x256xf32>
    %349 = arith.addf %348, %347 : vector<2x256xf32>
    %350 = arith.divf %348, %349 : vector<2x256xf32>
    %351 = vector.extract_strided_slice %350 {offsets = [0, 0], sizes = [2, 64], strides = [1, 1]} : vector<2x256xf32> to vector<2x64xf32>
    %352 = vector.extract_strided_slice %350 {offsets = [0, 64], sizes = [2, 64], strides = [1, 1]} : vector<2x256xf32> to vector<2x64xf32>
    %353 = vector.extract_strided_slice %350 {offsets = [0, 128], sizes = [2, 64], strides = [1, 1]} : vector<2x256xf32> to vector<2x64xf32>
    %cst_168 = arith.constant 2.000000e+00 : f32
    %354 = vector.broadcast %cst_168 : f32 to vector<2x64xf32>
    %355 = arith.mulf %354, %353 : vector<2x64xf32>
    %cst_169 = arith.constant 1.000000e+00 : f32
    %356 = vector.broadcast %cst_169 : f32 to vector<2x64xf32>
    %357 = arith.subf %355, %356 : vector<2x64xf32>
    %358 = vector.extract_strided_slice %350 {offsets = [0, 192], sizes = [2, 64], strides = [1, 1]} : vector<2x256xf32> to vector<2x64xf32>
    %359 = arith.mulf %352, %338 : vector<2x64xf32>
    %360 = arith.mulf %351, %357 : vector<2x64xf32>
    %361 = arith.addf %359, %360 : vector<2x64xf32>
    %362 = math.tanh %361 : vector<2x64xf32>
    %363 = arith.mulf %358, %362 : vector<2x64xf32>
    %364 = vector.extract_strided_slice %312 {offsets = [4, 0], sizes = [2, 256], strides = [1, 1]} : vector<16x256xf32> to vector<2x256xf32>
    %365 = vector.extract_strided_slice %317 {offsets = [10, 0], sizes = [2, 256], strides = [1, 1]} : vector<16x256xf32> to vector<2x256xf32>
    %366 = arith.addf %364, %365 : vector<2x256xf32>
    %cst_170 = arith.constant dense<0.000000e+00> : vector<2x256xf32>
    %367 = tpu.matmul %363, %318, %cst_170 {dimension_numbers = #tpu.dot_dimension_numbers<[1], [0], [0], [1], [0, 0, 1, 1], [], []>} : vector<2x64xf32>, vector<64x256xf32>, vector<2x256xf32> -> vector<2x256xf32>
    %368 = arith.addf %366, %367 : vector<2x256xf32>
    %369 = arith.negf %368 : vector<2x256xf32>
    %370 = math.exp %369 : vector<2x256xf32>
    %cst_171 = arith.constant 1.000000e+00 : f32
    %371 = vector.broadcast %cst_171 : f32 to vector<2x256xf32>
    %372 = arith.addf %371, %370 : vector<2x256xf32>
    %373 = arith.divf %371, %372 : vector<2x256xf32>
    %374 = vector.extract_strided_slice %373 {offsets = [0, 0], sizes = [2, 64], strides = [1, 1]} : vector<2x256xf32> to vector<2x64xf32>
    %375 = vector.extract_strided_slice %373 {offsets = [0, 64], sizes = [2, 64], strides = [1, 1]} : vector<2x256xf32> to vector<2x64xf32>
    %376 = vector.extract_strided_slice %373 {offsets = [0, 128], sizes = [2, 64], strides = [1, 1]} : vector<2x256xf32> to vector<2x64xf32>
    %cst_172 = arith.constant 2.000000e+00 : f32
    %377 = vector.broadcast %cst_172 : f32 to vector<2x64xf32>
    %378 = arith.mulf %377, %376 : vector<2x64xf32>
    %cst_173 = arith.constant 1.000000e+00 : f32
    %379 = vector.broadcast %cst_173 : f32 to vector<2x64xf32>
    %380 = arith.subf %378, %379 : vector<2x64xf32>
    %381 = vector.extract_strided_slice %373 {offsets = [0, 192], sizes = [2, 64], strides = [1, 1]} : vector<2x256xf32> to vector<2x64xf32>
    %382 = arith.mulf %375, %361 : vector<2x64xf32>
    %383 = arith.mulf %374, %380 : vector<2x64xf32>
    %384 = arith.addf %382, %383 : vector<2x64xf32>
    %385 = math.tanh %384 : vector<2x64xf32>
    %386 = arith.mulf %381, %385 : vector<2x64xf32>
    %387 = vector.extract_strided_slice %312 {offsets = [6, 0], sizes = [2, 256], strides = [1, 1]} : vector<16x256xf32> to vector<2x256xf32>
    %388 = vector.extract_strided_slice %317 {offsets = [8, 0], sizes = [2, 256], strides = [1, 1]} : vector<16x256xf32> to vector<2x256xf32>
    %389 = arith.addf %387, %388 : vector<2x256xf32>
    %cst_174 = arith.constant dense<0.000000e+00> : vector<2x256xf32>
    %390 = tpu.matmul %386, %318, %cst_174 {dimension_numbers = #tpu.dot_dimension_numbers<[1], [0], [0], [1], [0, 0, 1, 1], [], []>} : vector<2x64xf32>, vector<64x256xf32>, vector<2x256xf32> -> vector<2x256xf32>
    %391 = arith.addf %389, %390 : vector<2x256xf32>
    %392 = arith.negf %391 : vector<2x256xf32>
    %393 = math.exp %392 : vector<2x256xf32>
    %cst_175 = arith.constant 1.000000e+00 : f32
    %394 = vector.broadcast %cst_175 : f32 to vector<2x256xf32>
    %395 = arith.addf %394, %393 : vector<2x256xf32>
    %396 = arith.divf %394, %395 : vector<2x256xf32>
    %397 = vector.extract_strided_slice %396 {offsets = [0, 0], sizes = [2, 64], strides = [1, 1]} : vector<2x256xf32> to vector<2x64xf32>
    %398 = vector.extract_strided_slice %396 {offsets = [0, 64], sizes = [2, 64], strides = [1, 1]} : vector<2x256xf32> to vector<2x64xf32>
    %399 = vector.extract_strided_slice %396 {offsets = [0, 128], sizes = [2, 64], strides = [1, 1]} : vector<2x256xf32> to vector<2x64xf32>
    %cst_176 = arith.constant 2.000000e+00 : f32
    %400 = vector.broadcast %cst_176 : f32 to vector<2x64xf32>
    %401 = arith.mulf %400, %399 : vector<2x64xf32>
    %cst_177 = arith.constant 1.000000e+00 : f32
    %402 = vector.broadcast %cst_177 : f32 to vector<2x64xf32>
    %403 = arith.subf %401, %402 : vector<2x64xf32>
    %404 = vector.extract_strided_slice %396 {offsets = [0, 192], sizes = [2, 64], strides = [1, 1]} : vector<2x256xf32> to vector<2x64xf32>
    %405 = arith.mulf %398, %384 : vector<2x64xf32>
    %406 = arith.mulf %397, %403 : vector<2x64xf32>
    %407 = arith.addf %405, %406 : vector<2x64xf32>
    %408 = math.tanh %407 : vector<2x64xf32>
    %409 = arith.mulf %404, %408 : vector<2x64xf32>
    %410 = vector.extract_strided_slice %312 {offsets = [8, 0], sizes = [2, 256], strides = [1, 1]} : vector<16x256xf32> to vector<2x256xf32>
    %411 = vector.extract_strided_slice %317 {offsets = [6, 0], sizes = [2, 256], strides = [1, 1]} : vector<16x256xf32> to vector<2x256xf32>
    %412 = arith.addf %410, %411 : vector<2x256xf32>
    %cst_178 = arith.constant dense<0.000000e+00> : vector<2x256xf32>
    %413 = tpu.matmul %409, %318, %cst_178 {dimension_numbers = #tpu.dot_dimension_numbers<[1], [0], [0], [1], [0, 0, 1, 1], [], []>} : vector<2x64xf32>, vector<64x256xf32>, vector<2x256xf32> -> vector<2x256xf32>
    %414 = arith.addf %412, %413 : vector<2x256xf32>
    %415 = arith.negf %414 : vector<2x256xf32>
    %416 = math.exp %415 : vector<2x256xf32>
    %cst_179 = arith.constant 1.000000e+00 : f32
    %417 = vector.broadcast %cst_179 : f32 to vector<2x256xf32>
    %418 = arith.addf %417, %416 : vector<2x256xf32>
    %419 = arith.divf %417, %418 : vector<2x256xf32>
    %420 = vector.extract_strided_slice %419 {offsets = [0, 0], sizes = [2, 64], strides = [1, 1]} : vector<2x256xf32> to vector<2x64xf32>
    %421 = vector.extract_strided_slice %419 {offsets = [0, 64], sizes = [2, 64], strides = [1, 1]} : vector<2x256xf32> to vector<2x64xf32>
    %422 = vector.extract_strided_slice %419 {offsets = [0, 128], sizes = [2, 64], strides = [1, 1]} : vector<2x256xf32> to vector<2x64xf32>
    %cst_180 = arith.constant 2.000000e+00 : f32
    %423 = vector.broadcast %cst_180 : f32 to vector<2x64xf32>
    %424 = arith.mulf %423, %422 : vector<2x64xf32>
    %cst_181 = arith.constant 1.000000e+00 : f32
    %425 = vector.broadcast %cst_181 : f32 to vector<2x64xf32>
    %426 = arith.subf %424, %425 : vector<2x64xf32>
    %427 = vector.extract_strided_slice %419 {offsets = [0, 192], sizes = [2, 64], strides = [1, 1]} : vector<2x256xf32> to vector<2x64xf32>
    %428 = arith.mulf %421, %407 : vector<2x64xf32>
    %429 = arith.mulf %420, %426 : vector<2x64xf32>
    %430 = arith.addf %428, %429 : vector<2x64xf32>
    %431 = math.tanh %430 : vector<2x64xf32>
    %432 = arith.mulf %427, %431 : vector<2x64xf32>
    %433 = vector.extract_strided_slice %312 {offsets = [10, 0], sizes = [2, 256], strides = [1, 1]} : vector<16x256xf32> to vector<2x256xf32>
    %434 = vector.extract_strided_slice %317 {offsets = [4, 0], sizes = [2, 256], strides = [1, 1]} : vector<16x256xf32> to vector<2x256xf32>
    %435 = arith.addf %433, %434 : vector<2x256xf32>
    %cst_182 = arith.constant dense<0.000000e+00> : vector<2x256xf32>
    %436 = tpu.matmul %432, %318, %cst_182 {dimension_numbers = #tpu.dot_dimension_numbers<[1], [0], [0], [1], [0, 0, 1, 1], [], []>} : vector<2x64xf32>, vector<64x256xf32>, vector<2x256xf32> -> vector<2x256xf32>
    %437 = arith.addf %435, %436 : vector<2x256xf32>
    %438 = arith.negf %437 : vector<2x256xf32>
    %439 = math.exp %438 : vector<2x256xf32>
    %cst_183 = arith.constant 1.000000e+00 : f32
    %440 = vector.broadcast %cst_183 : f32 to vector<2x256xf32>
    %441 = arith.addf %440, %439 : vector<2x256xf32>
    %442 = arith.divf %440, %441 : vector<2x256xf32>
    %443 = vector.extract_strided_slice %442 {offsets = [0, 0], sizes = [2, 64], strides = [1, 1]} : vector<2x256xf32> to vector<2x64xf32>
    %444 = vector.extract_strided_slice %442 {offsets = [0, 64], sizes = [2, 64], strides = [1, 1]} : vector<2x256xf32> to vector<2x64xf32>
    %445 = vector.extract_strided_slice %442 {offsets = [0, 128], sizes = [2, 64], strides = [1, 1]} : vector<2x256xf32> to vector<2x64xf32>
    %cst_184 = arith.constant 2.000000e+00 : f32
    %446 = vector.broadcast %cst_184 : f32 to vector<2x64xf32>
    %447 = arith.mulf %446, %445 : vector<2x64xf32>
    %cst_185 = arith.constant 1.000000e+00 : f32
    %448 = vector.broadcast %cst_185 : f32 to vector<2x64xf32>
    %449 = arith.subf %447, %448 : vector<2x64xf32>
    %450 = vector.extract_strided_slice %442 {offsets = [0, 192], sizes = [2, 64], strides = [1, 1]} : vector<2x256xf32> to vector<2x64xf32>
    %451 = arith.mulf %444, %430 : vector<2x64xf32>
    %452 = arith.mulf %443, %449 : vector<2x64xf32>
    %453 = arith.addf %451, %452 : vector<2x64xf32>
    %454 = math.tanh %453 : vector<2x64xf32>
    %455 = arith.mulf %450, %454 : vector<2x64xf32>
    %456 = vector.extract_strided_slice %312 {offsets = [12, 0], sizes = [2, 256], strides = [1, 1]} : vector<16x256xf32> to vector<2x256xf32>
    %457 = vector.extract_strided_slice %317 {offsets = [2, 0], sizes = [2, 256], strides = [1, 1]} : vector<16x256xf32> to vector<2x256xf32>
    %458 = arith.addf %456, %457 : vector<2x256xf32>
    %cst_186 = arith.constant dense<0.000000e+00> : vector<2x256xf32>
    %459 = tpu.matmul %455, %318, %cst_186 {dimension_numbers = #tpu.dot_dimension_numbers<[1], [0], [0], [1], [0, 0, 1, 1], [], []>} : vector<2x64xf32>, vector<64x256xf32>, vector<2x256xf32> -> vector<2x256xf32>
    %460 = arith.addf %458, %459 : vector<2x256xf32>
    %461 = arith.negf %460 : vector<2x256xf32>
    %462 = math.exp %461 : vector<2x256xf32>
    %cst_187 = arith.constant 1.000000e+00 : f32
    %463 = vector.broadcast %cst_187 : f32 to vector<2x256xf32>
    %464 = arith.addf %463, %462 : vector<2x256xf32>
    %465 = arith.divf %463, %464 : vector<2x256xf32>
    %466 = vector.extract_strided_slice %465 {offsets = [0, 0], sizes = [2, 64], strides = [1, 1]} : vector<2x256xf32> to vector<2x64xf32>
    %467 = vector.extract_strided_slice %465 {offsets = [0, 64], sizes = [2, 64], strides = [1, 1]} : vector<2x256xf32> to vector<2x64xf32>
    %468 = vector.extract_strided_slice %465 {offsets = [0, 128], sizes = [2, 64], strides = [1, 1]} : vector<2x256xf32> to vector<2x64xf32>
    %cst_188 = arith.constant 2.000000e+00 : f32
    %469 = vector.broadcast %cst_188 : f32 to vector<2x64xf32>
    %470 = arith.mulf %469, %468 : vector<2x64xf32>
    %cst_189 = arith.constant 1.000000e+00 : f32
    %471 = vector.broadcast %cst_189 : f32 to vector<2x64xf32>
    %472 = arith.subf %470, %471 : vector<2x64xf32>
    %473 = vector.extract_strided_slice %465 {offsets = [0, 192], sizes = [2, 64], strides = [1, 1]} : vector<2x256xf32> to vector<2x64xf32>
    %474 = arith.mulf %467, %453 : vector<2x64xf32>
    %475 = arith.mulf %466, %472 : vector<2x64xf32>
    %476 = arith.addf %474, %475 : vector<2x64xf32>
    %477 = math.tanh %476 : vector<2x64xf32>
    %478 = arith.mulf %473, %477 : vector<2x64xf32>
    %479 = vector.extract_strided_slice %312 {offsets = [14, 0], sizes = [2, 256], strides = [1, 1]} : vector<16x256xf32> to vector<2x256xf32>
    %480 = vector.extract_strided_slice %317 {offsets = [0, 0], sizes = [2, 256], strides = [1, 1]} : vector<16x256xf32> to vector<2x256xf32>
    %481 = arith.addf %479, %480 : vector<2x256xf32>
    %cst_190 = arith.constant dense<0.000000e+00> : vector<2x256xf32>
    %482 = tpu.matmul %478, %318, %cst_190 {dimension_numbers = #tpu.dot_dimension_numbers<[1], [0], [0], [1], [0, 0, 1, 1], [], []>} : vector<2x64xf32>, vector<64x256xf32>, vector<2x256xf32> -> vector<2x256xf32>
    %483 = arith.addf %481, %482 : vector<2x256xf32>
    %484 = arith.negf %483 : vector<2x256xf32>
    %485 = math.exp %484 : vector<2x256xf32>
    %cst_191 = arith.constant 1.000000e+00 : f32
    %486 = vector.broadcast %cst_191 : f32 to vector<2x256xf32>
    %487 = arith.addf %486, %485 : vector<2x256xf32>
    %488 = arith.divf %486, %487 : vector<2x256xf32>
    %489 = vector.extract_strided_slice %488 {offsets = [0, 0], sizes = [2, 64], strides = [1, 1]} : vector<2x256xf32> to vector<2x64xf32>
    %490 = vector.extract_strided_slice %488 {offsets = [0, 64], sizes = [2, 64], strides = [1, 1]} : vector<2x256xf32> to vector<2x64xf32>
    %491 = vector.extract_strided_slice %488 {offsets = [0, 128], sizes = [2, 64], strides = [1, 1]} : vector<2x256xf32> to vector<2x64xf32>
    %cst_192 = arith.constant 2.000000e+00 : f32
    %492 = vector.broadcast %cst_192 : f32 to vector<2x64xf32>
    %493 = arith.mulf %492, %491 : vector<2x64xf32>
    %cst_193 = arith.constant 1.000000e+00 : f32
    %494 = vector.broadcast %cst_193 : f32 to vector<2x64xf32>
    %495 = arith.subf %493, %494 : vector<2x64xf32>
    %496 = vector.extract_strided_slice %488 {offsets = [0, 192], sizes = [2, 64], strides = [1, 1]} : vector<2x256xf32> to vector<2x64xf32>
    %497 = arith.mulf %490, %476 : vector<2x64xf32>
    %498 = arith.mulf %489, %495 : vector<2x64xf32>
    %499 = arith.addf %497, %498 : vector<2x64xf32>
    %500 = math.tanh %499 : vector<2x64xf32>
    %501 = arith.mulf %496, %500 : vector<2x64xf32>
    %c352 = arith.constant 352 : index
    %c0_194 = arith.constant 0 : index
    %502 = vector.load %arg2[%c352, %c0_194] : memref<488x256xf32, #tpu.memory_space<vmem>>, vector<64x256xf32>
    %cst_195 = arith.constant dense<0.000000e+00> : vector<2x256xf32>
    %503 = tpu.matmul %340, %502, %cst_195 {dimension_numbers = #tpu.dot_dimension_numbers<[1], [0], [0], [1], [0, 0, 1, 1], [], []>} : vector<2x64xf32>, vector<64x256xf32>, vector<2x256xf32> -> vector<2x256xf32>
    %c416 = arith.constant 416 : index
    %c0_196 = arith.constant 0 : index
    %504 = vector.load %arg2[%c416, %c0_196] : memref<488x256xf32, #tpu.memory_space<vmem>>, vector<64x256xf32>
    %cst_197 = arith.constant dense<0.000000e+00> : vector<2x256xf32>
    %505 = tpu.matmul %501, %504, %cst_197 {dimension_numbers = #tpu.dot_dimension_numbers<[1], [0], [0], [1], [0, 0, 1, 1], [], []>} : vector<2x64xf32>, vector<64x256xf32>, vector<2x256xf32> -> vector<2x256xf32>
    %506 = arith.addf %503, %505 : vector<2x256xf32>
    %c480 = arith.constant 480 : index
    %c0_198 = arith.constant 0 : index
    %507 = vector.load %arg2[%c480, %c0_198] : memref<488x256xf32, #tpu.memory_space<vmem>>, vector<1x256xf32>
    %508 = vector.broadcast %507 : vector<1x256xf32> to vector<2x256xf32>
    %509 = arith.addf %506, %508 : vector<2x256xf32>
    %510 = vector.extract_strided_slice %509 {offsets = [0, 0], sizes = [2, 5], strides = [1, 1]} : vector<2x256xf32> to vector<2x5xf32>
    %c0_199 = arith.constant 0 : index
    %c0_200 = arith.constant 0 : index
    %511 = vector.load %arg3[%c0_199, %c0_200] : memref<2x5xf32, #tpu.memory_space<vmem>>, vector<2x5xf32>
    tpu.vector_store %arg3[%c0_199, %c0_200], %510 {strides = array<i32>} : memref<2x5xf32, #tpu.memory_space<vmem>>, vector<2x5xf32>,
    return
  }
}

</mosaic_0001>

<llo_original>
// kernel: _forward.1
$region0: #{_forward.1}
  #allocation0 [shape = 'u32[]', space=smem, size = 0x4, offset = 0x4, fixed_abs, tag = 'smem constant byte address 0x4 - core index']
  #allocation1 [shape = 'u32[144,128]{1,0:T(1,128)}', space=vmem, size = 0x12000, scoped, tag = 'internal scratch']
  #allocation2 [shape = 'f32[16,32]{1,0:T(8,128)}', space=vmem, size = 0x2000, scoped, tag = 'scratch operand']
  #allocation3 [shape = 'f32[16,64]{1,0:T(8,128)}', space=vmem, size = 0x2000, scoped, tag = 'scratch operand']
  %s0 = inlined_call_operand.vmem [shape: s32[2,8], index: 0, kind: input, shape index: {}]
  %s1 = inlined_call_operand.vmem [shape: f32[50,1,32], index: 1, kind: input, shape index: {}]
  %s2 = inlined_call_operand.hbm [shape: f32[488,256], index: 2, kind: input, shape index: {}]
  %s3 = inlined_call_operand.hbm [shape: f32[2,5], index: 3, kind: output, shape index: {}]
  %s4 = sld [smem:[#allocation0]]
  $region30: #{_forward.1} parent=0
    _
  %s6 = ssub.s32 1, %s4
  %s7 = scalar_select 0, %s6, %s4
  $region1: #{_forward.1} parent=0
    #allocation4 [shape = 'u8[1024]{0}', space=smem, size = 0x400, scoped, tag = 'input window, operand 0, single buffered']
    #allocation5 [shape = 's32[1]{0}', space=sflag, size = 0x4, scoped, tag = 'scoped memory for _forward.1']
    #allocation6 [shape = 's32[1]{0}', space=sflag, size = 0x4, scoped, tag = 'scoped memory for _forward.1']
    #allocation7 [shape = 's32[1]{0}', space=sflag, size = 0x4, scoped, tag = 'scoped memory for _forward.1']
    #allocation8 [shape = 'u8[499712]{0}', space=vmem, size = 0x7a000, scoped, tag = 'input window, operand 2, single buffered']
    #allocation9 [shape = 'u8[1024]{0}', space=vmem, size = 0x400, scoped, tag = 'output window, operand 0, single buffered']
    %8 = vsyncpa [#allocation7], 0
    %9 = vsyncpa [#allocation5], 0
    %10 = vsyncpa [#allocation6], 0
    // Predicated region
    $region2: #{_forward.1} parent=1 // pred_check
      _
    $region3: #{_forward.1} parent=1 // pred_check_branch
      %12 = sbr.rel (0) target = $region5
    $region4: #{_forward.1} parent=1 // pred_region
      %s14 = ssub.s32 32, 32
      %15 = vsyncadd [#allocation7], %s14
      %s17 = sshll.u32 %s0, 4
      %s18 = int_to_ptr.vmem [resolvable:$true] %s17
      %20 = dma.vmem_to_smem %s18, 32, [#allocation4], [#allocation7]
    $region5: #{_forward.1} parent=1 // pred_fallthru
      _
    // Predicated region
    $region6: #{_forward.1} parent=1 // pred_check
      _
    $region7: #{_forward.1} parent=1 // pred_check_branch
      %22 = sbr.rel (0) target = $region9
    $region8: #{_forward.1} parent=1 // pred_region
      _
    $region9: #{_forward.1} parent=1 // pred_fallthru
      _
    // Predicated region
    $region10: #{_forward.1} parent=1 // pred_check
      _
    $region11: #{_forward.1} parent=1 // pred_check_branch
      %24 = sbr.rel (0) target = $region13
    $region12: #{_forward.1} parent=1 // pred_region
      %s26 = ssub.s32 15616, 15616
      %27 = vsyncadd [#allocation5], %s26
      %s28 = sshll.u32 [#allocation8], 4
      %s29 = int_to_ptr.vmem [resolvable:$true] %s28
      %34 = dma.hbm_to_vmem [thread:$0]  %s2, 15616, %s29, [#allocation5], 256, 256, 16
    $region13: #{_forward.1} parent=1 // pred_fallthru
      _
    // Predicated region
    $region14: #{_forward.1} parent=1 // pred_check
      _
    $region15: #{_forward.1} parent=1 // pred_check_branch
      %36 = sbr.rel (0) target = $region17
    $region16: #{_forward.1} parent=1 // pred_region
      %37 = dma.done [#allocation7], 32
    $region17: #{_forward.1} parent=1 // pred_fallthru
      _
    // Predicated region
    $region18: #{_forward.1} parent=1 // pred_check
      _
    $region19: #{_forward.1} parent=1 // pred_check_branch
      %39 = sbr.rel (0) target = $region21
    $region20: #{_forward.1} parent=1 // pred_region
      %40 = dma.done [#allocation5], 15616
    $region21: #{_forward.1} parent=1 // pred_fallthru
      _
    %41 = sfence
    %s42 = sld [smem:[#allocation4]]
    %s43 = scalar_lea.vmem %s1, %s42
    %v44 = vld [vmem:[%s43] sm:$0x1]
    %vm45 = vcmask 253952
    %46 = vst.msk [vmem:[#allocation2] sm:$0x1] %vm45, %v44
    %s47 = sld [smem:[#allocation4 + $0x80]]
    %s48 = scalar_lea.vmem %s1, %s47
    %v49 = vld [vmem:[%s48] sm:$0x1]
    %50 = vst.msk [vmem:[#allocation2 + $0x1] sm:$0x1] %vm45, %v49
    %s51 = sld [smem:[#allocation4 + $0x1]]
    %s52 = scalar_lea.vmem %s1, %s51
    %v53 = vld [vmem:[%s52] sm:$0x1]
    %54 = vst.msk [vmem:[#allocation2 + $0x2] sm:$0x1] %vm45, %v53
    %s55 = sld [smem:[#allocation4 + $0x81]]
    %s56 = scalar_lea.vmem %s1, %s55
    %v57 = vld [vmem:[%s56] sm:$0x1]
    %58 = vst.msk [vmem:[#allocation2 + $0x3] sm:$0x1] %vm45, %v57
    %s59 = sld [smem:[#allocation4 + $0x2]]
    %s60 = scalar_lea.vmem %s1, %s59
    %v61 = vld [vmem:[%s60] sm:$0x1]
    %62 = vst.msk [vmem:[#allocation2 + $0x4] sm:$0x1] %vm45, %v61
    %s63 = sld [smem:[#allocation4 + $0x82]]
    %s64 = scalar_lea.vmem %s1, %s63
    %v65 = vld [vmem:[%s64] sm:$0x1]
    %66 = vst.msk [vmem:[#allocation2 + $0x5] sm:$0x1] %vm45, %v65
    %s67 = sld [smem:[#allocation4 + $0x3]]
    %s68 = scalar_lea.vmem %s1, %s67
    %v69 = vld [vmem:[%s68] sm:$0x1]
    %70 = vst.msk [vmem:[#allocation2 + $0x6] sm:$0x1] %vm45, %v69
    %s71 = sld [smem:[#allocation4 + $0x83]]
    %s72 = scalar_lea.vmem %s1, %s71
    %v73 = vld [vmem:[%s72] sm:$0x1]
    %74 = vst.msk [vmem:[#allocation2 + $0x7] sm:$0x1] %vm45, %v73
    %s75 = sld [smem:[#allocation4 + $0x4]]
    %s76 = scalar_lea.vmem %s1, %s75
    %v77 = vld [vmem:[%s76] sm:$0x1]
    %78 = vst.msk [vmem:[#allocation2 + $0x8] sm:$0x1] %vm45, %v77
    %s79 = sld [smem:[#allocation4 + $0x84]]
    %s80 = scalar_lea.vmem %s1, %s79
    %v81 = vld [vmem:[%s80] sm:$0x1]
    %82 = vst.msk [vmem:[#allocation2 + $0x9] sm:$0x1] %vm45, %v81
    %s83 = sld [smem:[#allocation4 + $0x5]]
    %s84 = scalar_lea.vmem %s1, %s83
    %v85 = vld [vmem:[%s84] sm:$0x1]
    %86 = vst.msk [vmem:[#allocation2 + $0xa] sm:$0x1] %vm45, %v85
    %s87 = sld [smem:[#allocation4 + $0x85]]
    %s88 = scalar_lea.vmem %s1, %s87
    %v89 = vld [vmem:[%s88] sm:$0x1]
    %90 = vst.msk [vmem:[#allocation2 + $0xb] sm:$0x1] %vm45, %v89
    %s91 = sld [smem:[#allocation4 + $0x6]]
    %s92 = scalar_lea.vmem %s1, %s91
    %v93 = vld [vmem:[%s92] sm:$0x1]
    %94 = vst.msk [vmem:[#allocation2 + $0xc] sm:$0x1] %vm45, %v93
    %s95 = sld [smem:[#allocation4 + $0x86]]
    %s96 = scalar_lea.vmem %s1, %s95
    %v97 = vld [vmem:[%s96] sm:$0x1]
    %98 = vst.msk [vmem:[#allocation2 + $0xd] sm:$0x1] %vm45, %v97
    %s99 = sld [smem:[#allocation4 + $0x7]]
    %s100 = scalar_lea.vmem %s1, %s99
    %v101 = vld [vmem:[%s100] sm:$0x1]
    %102 = vst.msk [vmem:[#allocation2 + $0xe] sm:$0x1] %vm45, %v101
    %s103 = sld [smem:[#allocation4 + $0x87]]
    %s104 = scalar_lea.vmem %s1, %s103
    %v105 = vld [vmem:[%s104] sm:$0x1]
    %106 = vst.msk [vmem:[#allocation2 + $0xf] sm:$0x1] %vm45, %v105
    %v107 = vld [vmem:[#allocation2] sm:$0xff]
    %v108 = vld [vmem:[#allocation2 + $0x8] sm:$0xff]
    %v109 = vld [vmem:[#allocation8] sm:$0xff]
    %v110 = vld [vmem:[#allocation8 + $0x8] sm:$0xff]
    %v111 = vld [vmem:[#allocation8 + $0x10] sm:$0xff]
    %v112 = vld [vmem:[#allocation8 + $0x18] sm:$0xff]
    %v113 = vld [vmem:[#allocation8 + $0x20] sm:$0xff]
    %v114 = vld [vmem:[#allocation8 + $0x28] sm:$0xff]
    %v115 = vld [vmem:[#allocation8 + $0x30] sm:$0xff]
    %v116 = vld [vmem:[#allocation8 + $0x38] sm:$0xff]
    %s117 = scalar_lea.vmem [#allocation8], 256
    %v118 = vld [vmem:[%s117] ss:$8 sm:$0x3]
    %v120 = vlaneseq
    %v121 = vshrl.u32 %v120, 7
    %v122 = vsub.s32 0, %v121
    %v123 = vrot.slane %v118, %v122
    %v124 = vlaneseq
    %v125 = vshrl.u32 %v124, 7
    %v126 = vsub.s32 1, %v125
    %v127 = vrot.slane %v118, %v126
    %vm130 = vcmask 261120
    %v132 = vsel %vm130, %v107, 0
    %v135 = vsel %vm130, %v108, 0
    %137 = vmatprep.subr.mxu0 %v110
    %138 = vmatpush1.msra.mxu0 %v109
    %139 = vmatprep.subr.mxu0 %v112
    %140 = vmatpush1.msra.mxu0 %v111
    %141 = vmatprep.subr.mxu0 %v114
    %142 = vmatpush1.msra.mxu0 %v113
    %143 = vmatprep.subr.mxu0 %v116
    %144 = vmatpush1.msra.mxu0 %v115
    %145 = vmatprep.subr.mxu0 0.0
    %146 = vmatpush1.msra.mxu0 0.0
    %147 = vmatprep.subr.mxu0 0.0
    %148 = vmatpush1.msra.mxu0 0.0
    %149 = vmatprep.subr.mxu0 0.0
    %150 = vmatpush1.msra.mxu0 0.0
    %151 = vmatprep.subr.mxu0 0.0
    %152 = vmatpush1.msra.mxu0 0.0
    %153 = vmatprep.subr.mxu0 0.0
    %154 = vmatpush1.msra.mxu0 0.0
    %155 = vmatprep.subr.mxu0 0.0
    %156 = vmatpush1.msra.mxu0 0.0
    %157 = vmatprep.subr.mxu0 0.0
    %158 = vmatpush1.msra.mxu0 0.0
    %159 = vmatprep.subr.mxu0 0.0
    %160 = vmatpush1.msra.mxu0 0.0
    %161 = vmatprep.subr.mxu0 0.0
    %162 = vmatpush1.msra.mxu0 0.0
    %163 = vmatprep.subr.mxu0 0.0
    %164 = vmatpush1.msra.mxu0 0.0
    %165 = vmatprep.subr.mxu0 0.0
    %166 = vmatpush1.msra.mxu0 0.0
    %167 = vmatprep.subr.mxu0 0.0
    %168 = vmatpush1.msra.mxu0 0.0
    %169 = vmatprep.subr.mxu0 0.0
    %170 = vmatpush1.msra.mxu0 0.0
    %171 = vmatprep.subr.mxu0 0.0
    %172 = vmatpush1.msra.mxu0 0.0
    %173 = vmatprep.subr.mxu0 0.0
    %174 = vmatpush1.msra.mxu0 0.0
    %175 = vmatprep.subr.mxu0 0.0
    %176 = vmatpush1.msra.mxu0 0.0
    %177 = vmatprep.subr.mxu0 0.0
    %178 = vmatpush1.msra.mxu0 0.0
    %179 = vmatprep.subr.mxu0 0.0
    %180 = vmatpush1.msra.mxu0 0.0
    %181 = vmatprep.subr.mxu0 0.0
    %182 = vmatpush1.msra.mxu0 0.0
    %183 = vmatprep.subr.mxu0 0.0
    %184 = vmatpush1.msra.mxu0 0.0
    %185 = vmatprep.subr.mxu0 0.0
    %186 = vmatpush1.msra.mxu0 0.0
    %187 = vmatprep.subr.mxu0 0.0
    %188 = vmatpush1.msra.mxu0 0.0
    %189 = vmatprep.subr.mxu0 0.0
    %190 = vmatpush1.msra.mxu0 0.0
    %191 = vmatprep.subr.mxu0 0.0
    %192 = vmatpush1.msra.mxu0 0.0
    %193 = vmatprep.subr.mxu0 0.0
    %194 = vmatpush1.msra.mxu0 0.0
    %195 = vmatprep.subr.mxu0 0.0
    %196 = vmatpush1.msra.mxu0 0.0
    %197 = vmatprep.subr.mxu0 0.0
    %198 = vmatpush1.msra.mxu0 0.0
    %199 = vmatprep.subr.mxu0 0.0
    %200 = vmatpush1.msra.mxu0 0.0
    %201 = vmatprep.mubr.f32.mxu0 0.0
    %202 = vmatmul.mubr.f32.gmra.mrb[0].mxu0 %v132
    %v203 = vpop.f32.mrb[0].mxu0
    %v204 = vadd.f32 %v123, %v203
    %v205 = vpop.f32.mrb[0].mxu0
    %v206 = vadd.f32 %v127, %v205
    %207 = vmatprep.mubr.f32.mxu0 0.0
    %208 = vmatmul.mubr.f32.gmra.mrb[0].mxu0 %v135
    %v209 = vpop.f32.mrb[0].mxu0
    %v210 = vadd.f32 %v123, %v209
    %v211 = vpop.f32.mrb[0].mxu0
    %v212 = vadd.f32 %v127, %v211
    %213 = vdwg.mxu0
    %v214 = vld [vmem:[#allocation8 + $0x40] sm:$0xff]
    %v215 = vld [vmem:[#allocation8 + $0x48] sm:$0xff]
    %v216 = vld [vmem:[#allocation8 + $0x50] sm:$0xff]
    %v217 = vld [vmem:[#allocation8 + $0x58] sm:$0xff]
    %v218 = vld [vmem:[#allocation8 + $0x60] sm:$0xff]
    %v219 = vld [vmem:[#allocation8 + $0x68] sm:$0xff]
    %v220 = vld [vmem:[#allocation8 + $0x70] sm:$0xff]
    %v221 = vld [vmem:[#allocation8 + $0x78] sm:$0xff]
    %s222 = scalar_lea.vmem [#allocation8], 272
    %v223 = vld [vmem:[%s222] ss:$8 sm:$0x3]
    %v225 = vlaneseq
    %v226 = vshrl.u32 %v225, 7
    %v227 = vsub.s32 0, %v226
    %v228 = vrot.slane %v223, %v227
    %v229 = vlaneseq
    %v230 = vshrl.u32 %v229, 7
    %v231 = vsub.s32 1, %v230
    %v232 = vrot.slane %v223, %v231
    %235 = vmatprep.subr.mxu0 %v215
    %236 = vmatpush1.msra.mxu0 %v214
    %237 = vmatprep.subr.mxu0 %v217
    %238 = vmatpush1.msra.mxu0 %v216
    %239 = vmatprep.subr.mxu0 %v219
    %240 = vmatpush1.msra.mxu0 %v218
    %241 = vmatprep.subr.mxu0 %v221
    %242 = vmatpush1.msra.mxu0 %v220
    %243 = vmatprep.subr.mxu0 0.0
    %244 = vmatpush1.msra.mxu0 0.0
    %245 = vmatprep.subr.mxu0 0.0
    %246 = vmatpush1.msra.mxu0 0.0
    %247 = vmatprep.subr.mxu0 0.0
    %248 = vmatpush1.msra.mxu0 0.0
    %249 = vmatprep.subr.mxu0 0.0
    %250 = vmatpush1.msra.mxu0 0.0
    %251 = vmatprep.subr.mxu0 0.0
    %252 = vmatpush1.msra.mxu0 0.0
    %253 = vmatprep.subr.mxu0 0.0
    %254 = vmatpush1.msra.mxu0 0.0
    %255 = vmatprep.subr.mxu0 0.0
    %256 = vmatpush1.msra.mxu0 0.0
    %257 = vmatprep.subr.mxu0 0.0
    %258 = vmatpush1.msra.mxu0 0.0
    %259 = vmatprep.subr.mxu0 0.0
    %260 = vmatpush1.msra.mxu0 0.0
    %261 = vmatprep.subr.mxu0 0.0
    %262 = vmatpush1.msra.mxu0 0.0
    %263 = vmatprep.subr.mxu0 0.0
    %264 = vmatpush1.msra.mxu0 0.0
    %265 = vmatprep.subr.mxu0 0.0
    %266 = vmatpush1.msra.mxu0 0.0
    %267 = vmatprep.subr.mxu0 0.0
    %268 = vmatpush1.msra.mxu0 0.0
    %269 = vmatprep.subr.mxu0 0.0
    %270 = vmatpush1.msra.mxu0 0.0
    %271 = vmatprep.subr.mxu0 0.0
    %272 = vmatpush1.msra.mxu0 0.0
    %273 = vmatprep.subr.mxu0 0.0
    %274 = vmatpush1.msra.mxu0 0.0
    %275 = vmatprep.subr.mxu0 0.0
    %276 = vmatpush1.msra.mxu0 0.0
    %277 = vmatprep.subr.mxu0 0.0
    %278 = vmatpush1.msra.mxu0 0.0
    %279 = vmatprep.subr.mxu0 0.0
    %280 = vmatpush1.msra.mxu0 0.0
    %281 = vmatprep.subr.mxu0 0.0
    %282 = vmatpush1.msra.mxu0 0.0
    %283 = vmatprep.subr.mxu0 0.0
    %284 = vmatpush1.msra.mxu0 0.0
    %285 = vmatprep.subr.mxu0 0.0
    %286 = vmatpush1.msra.mxu0 0.0
    %287 = vmatprep.subr.mxu0 0.0
    %288 = vmatpush1.msra.mxu0 0.0
    %289 = vmatprep.subr.mxu0 0.0
    %290 = vmatpush1.msra.mxu0 0.0
    %291 = vmatprep.subr.mxu0 0.0
    %292 = vmatpush1.msra.mxu0 0.0
    %293 = vmatprep.subr.mxu0 0.0
    %294 = vmatpush1.msra.mxu0 0.0
    %295 = vmatprep.subr.mxu0 0.0
    %296 = vmatpush1.msra.mxu0 0.0
    %297 = vmatprep.subr.mxu0 0.0
    %298 = vmatpush1.msra.mxu0 0.0
    %299 = vmatprep.mubr.f32.mxu0 0.0
    %300 = vmatmul.mubr.f32.gmra.mrb[0].mxu0 %v132
    %v301 = vpop.f32.mrb[0].mxu0
    %v302 = vadd.f32 %v228, %v301
    %v303 = vpop.f32.mrb[0].mxu0
    %v304 = vadd.f32 %v232, %v303
    %305 = vmatprep.mubr.f32.mxu0 0.0
    %306 = vmatmul.mubr.f32.gmra.mrb[0].mxu0 %v135
    %v307 = vpop.f32.mrb[0].mxu0
    %v308 = vadd.f32 %v228, %v307
    %v309 = vpop.f32.mrb[0].mxu0
    %v310 = vadd.f32 %v232, %v309
    %311 = vdwg.mxu0
    %v312 = vld [vmem:[#allocation8 + $0x80] sm:$0xff]
    %v313 = vld [vmem:[#allocation8 + $0x88] sm:$0xff]
    %v314 = vld [vmem:[#allocation8 + $0x90] sm:$0xff]
    %v315 = vld [vmem:[#allocation8 + $0x98] sm:$0xff]
    %v316 = vld [vmem:[#allocation8 + $0xa0] sm:$0xff]
    %v317 = vld [vmem:[#allocation8 + $0xa8] sm:$0xff]
    %v318 = vld [vmem:[#allocation8 + $0xb0] sm:$0xff]
    %v319 = vld [vmem:[#allocation8 + $0xb8] sm:$0xff]
    %v320 = vld [vmem:[#allocation8 + $0xc0] sm:$0xff]
    %v321 = vld [vmem:[#allocation8 + $0xc8] sm:$0xff]
    %v322 = vld [vmem:[#allocation8 + $0xd0] sm:$0xff]
    %v323 = vld [vmem:[#allocation8 + $0xd8] sm:$0xff]
    %v324 = vld [vmem:[#allocation8 + $0xe0] sm:$0xff]
    %v325 = vld [vmem:[#allocation8 + $0xe8] sm:$0xff]
    %v326 = vld [vmem:[#allocation8 + $0xf0] sm:$0xff]
    %v327 = vld [vmem:[#allocation8 + $0xf8] sm:$0xff]
    %v330 = vrot.slane %v308, 6
    %v331 = vrot.slane %v310, 6
    %v334 = vadd.f32 %v204, %v330
    %v335 = vadd.f32 %v206, %v331
    %v336 = vxor.u32 %v334, 2147483648
    %v337 = vxor.u32 %v335, 2147483648
    %v338 = vmul.f32 %v336, 1.442695
    %v339 = vpow.pop %v338
    %v340 = vmul.f32 %v337, 1.442695
    %v341 = vpow.pop %v340
    %v342 = vadd.f32 %v339, 1.0
    %v343 = vadd.f32 %v341, 1.0
    %v344 = vrcp.pop %v342
    %v345 = vmul.f32 1.0, %v344
    %v346 = vrcp.pop %v343
    %v347 = vmul.f32 1.0, %v346
    %v348 = vmul.f32 %v347, 2.0
    %v349 = vsub.f32 %v348, 1.0
    %v350 = vmul.f32 %v345, 0.0
    %v351 = vmul.f32 %v345, %v349
    %353 = vrot.lane.b32.xlu0 %v351, 64
    %v354 = vpop.permute.xlu0 %353
    %v356 = vadd.f32 %v350, %v354
    %v357 = vtanh.pop %v356
    %v358 = vmul.f32 %v347, %v357
    %360 = vrot.lane.b32.xlu0 %v358, 64
    %v361 = vpop.permute.xlu0 %360
    %vm363 = vcmask 254976
    %364 = vst.msk [vmem:[#allocation3] sm:$0x3] %vm363, %v361
    %vm365 = vcmask 517376
    %366 = vst.msk [vmem:[#allocation3 + $0xe] sm:$0x3] %vm365, %v361
    %v367 = vrot.slane %v308, 2
    %v368 = vrot.slane %v310, 2
    %v371 = vadd.f32 %v204, %v367
    %v372 = vadd.f32 %v206, %v368
    %vm373 = vcmask 523264
    %v374 = vsel %vm373, %v361, 0
    %376 = vmatprep.subr.mxu0 %v313
    %377 = vmatpush1.msra.mxu0 %v312
    %378 = vmatprep.subr.mxu0 %v315
    %379 = vmatpush1.msra.mxu0 %v314
    %380 = vmatprep.subr.mxu0 %v317
    %381 = vmatpush1.msra.mxu0 %v316
    %382 = vmatprep.subr.mxu0 %v319
    %383 = vmatpush1.msra.mxu0 %v318
    %384 = vmatprep.subr.mxu0 %v321
    %385 = vmatpush1.msra.mxu0 %v320
    %386 = vmatprep.subr.mxu0 %v323
    %387 = vmatpush1.msra.mxu0 %v322
    %388 = vmatprep.subr.mxu0 %v325
    %389 = vmatpush1.msra.mxu0 %v324
    %390 = vmatprep.subr.mxu0 %v327
    %391 = vmatpush1.msra.mxu0 %v326
    %392 = vmatprep.subr.mxu0 0.0
    %393 = vmatpush1.msra.mxu0 0.0
    %394 = vmatprep.subr.mxu0 0.0
    %395 = vmatpush1.msra.mxu0 0.0
    %396 = vmatprep.subr.mxu0 0.0
    %397 = vmatpush1.msra.mxu0 0.0
    %398 = vmatprep.subr.mxu0 0.0
    %399 = vmatpush1.msra.mxu0 0.0
    %400 = vmatprep.subr.mxu0 0.0
    %401 = vmatpush1.msra.mxu0 0.0
    %402 = vmatprep.subr.mxu0 0.0
    %403 = vmatpush1.msra.mxu0 0.0
    %404 = vmatprep.subr.mxu0 0.0
    %405 = vmatpush1.msra.mxu0 0.0
    %406 = vmatprep.subr.mxu0 0.0
    %407 = vmatpush1.msra.mxu0 0.0
    %408 = vmatprep.subr.mxu0 0.0
    %409 = vmatpush1.msra.mxu0 0.0
    %410 = vmatprep.subr.mxu0 0.0
    %411 = vmatpush1.msra.mxu0 0.0
    %412 = vmatprep.subr.mxu0 0.0
    %413 = vmatpush1.msra.mxu0 0.0
    %414 = vmatprep.subr.mxu0 0.0
    %415 = vmatpush1.msra.mxu0 0.0
    %416 = vmatprep.subr.mxu0 0.0
    %417 = vmatpush1.msra.mxu0 0.0
    %418 = vmatprep.subr.mxu0 0.0
    %419 = vmatpush1.msra.mxu0 0.0
    %420 = vmatprep.subr.mxu0 0.0
    %421 = vmatpush1.msra.mxu0 0.0
    %422 = vmatprep.subr.mxu0 0.0
    %423 = vmatpush1.msra.mxu0 0.0
    %424 = vmatprep.subr.mxu0 0.0
    %425 = vmatpush1.msra.mxu0 0.0
    %426 = vmatprep.subr.mxu0 0.0
    %427 = vmatpush1.msra.mxu0 0.0
    %428 = vmatprep.subr.mxu0 0.0
    %429 = vmatpush1.msra.mxu0 0.0
    %430 = vmatprep.subr.mxu0 0.0
    %431 = vmatpush1.msra.mxu0 0.0
    %432 = vmatprep.subr.mxu0 0.0
    %433 = vmatpush1.msra.mxu0 0.0
    %434 = vmatprep.subr.mxu0 0.0
    %435 = vmatpush1.msra.mxu0 0.0
    %436 = vmatprep.subr.mxu0 0.0
    %437 = vmatpush1.msra.mxu0 0.0
    %438 = vmatprep.subr.mxu0 0.0
    %439 = vmatpush1.msra.mxu0 0.0
    %440 = vmatprep.mubr.f32.mxu0 0.0
    %441 = vmatmul.mubr.f32.gmra.mrb[0].mxu0 %v374
    %v442 = vpop.f32.mrb[0].mxu0
    %v443 = vadd.f32 0.0, %v442
    %v444 = vpop.f32.mrb[0].mxu0
    %v445 = vadd.f32 0.0, %v444
    %446 = vdwg.mxu0
    %v449 = vrot.slane %v443, 6
    %v450 = vrot.slane %v445, 6
    %v453 = vadd.f32 %v371, %v449
    %v454 = vadd.f32 %v372, %v450
    %v455 = vxor.u32 %v453, 2147483648
    %v456 = vxor.u32 %v454, 2147483648
    %v457 = vmul.f32 %v455, 1.442695
    %v458 = vpow.pop %v457
    %v459 = vmul.f32 %v456, 1.442695
    %v460 = vpow.pop %v459
    %v461 = vadd.f32 %v458, 1.0
    %v462 = vadd.f32 %v460, 1.0
    %v463 = vrcp.pop %v461
    %v464 = vmul.f32 1.0, %v463
    %v465 = vrcp.pop %v462
    %v466 = vmul.f32 1.0, %v465
    %v467 = vmul.f32 %v466, 2.0
    %v468 = vsub.f32 %v467, 1.0
    %v470 = vrot.slane %v356, 6
    %v472 = vmul.f32 %v464, %v470
    %v473 = vmul.f32 %v464, %v468
    %475 = vrot.lane.b32.xlu0 %v473, 64
    %v476 = vpop.permute.xlu0 %475
    %v478 = vadd.f32 %v472, %v476
    %v479 = vtanh.pop %v478
    %v480 = vmul.f32 %v466, %v479
    %482 = vrot.lane.b32.xlu0 %v480, 64
    %v483 = vpop.permute.xlu0 %482
    %vm485 = vcmask 257026
    %486 = vst.msk [vmem:[#allocation3] sm:$0xc] %vm485, %v483
    %vm487 = vcmask 519426
    %488 = vst.msk [vmem:[#allocation3 + $0xa] sm:$0xc] %vm487, %v483
    %v489 = vrot.slane %v480, 2
    %490 = vrot.lane.b32.xlu0 %v489, 64
    %v491 = vpop.permute.xlu0 %490
    %v492 = vsel %vm373, %v491, 0
    %494 = vmatprep.subr.mxu0 %v313
    %495 = vmatpush1.msra.mxu0 %v312
    %496 = vmatprep.subr.mxu0 %v315
    %497 = vmatpush1.msra.mxu0 %v314
    %498 = vmatprep.subr.mxu0 %v317
    %499 = vmatpush1.msra.mxu0 %v316
    %500 = vmatprep.subr.mxu0 %v319
    %501 = vmatpush1.msra.mxu0 %v318
    %502 = vmatprep.subr.mxu0 %v321
    %503 = vmatpush1.msra.mxu0 %v320
    %504 = vmatprep.subr.mxu0 %v323
    %505 = vmatpush1.msra.mxu0 %v322
    %506 = vmatprep.subr.mxu0 %v325
    %507 = vmatpush1.msra.mxu0 %v324
    %508 = vmatprep.subr.mxu0 %v327
    %509 = vmatpush1.msra.mxu0 %v326
    %510 = vmatprep.subr.mxu0 0.0
    %511 = vmatpush1.msra.mxu0 0.0
    %512 = vmatprep.subr.mxu0 0.0
    %513 = vmatpush1.msra.mxu0 0.0
    %514 = vmatprep.subr.mxu0 0.0
    %515 = vmatpush1.msra.mxu0 0.0
    %516 = vmatprep.subr.mxu0 0.0
    %517 = vmatpush1.msra.mxu0 0.0
    %518 = vmatprep.subr.mxu0 0.0
    %519 = vmatpush1.msra.mxu0 0.0
    %520 = vmatprep.subr.mxu0 0.0
    %521 = vmatpush1.msra.mxu0 0.0
    %522 = vmatprep.subr.mxu0 0.0
    %523 = vmatpush1.msra.mxu0 0.0
    %524 = vmatprep.subr.mxu0 0.0
    %525 = vmatpush1.msra.mxu0 0.0
    %526 = vmatprep.subr.mxu0 0.0
    %527 = vmatpush1.msra.mxu0 0.0
    %528 = vmatprep.subr.mxu0 0.0
    %529 = vmatpush1.msra.mxu0 0.0
    %530 = vmatprep.subr.mxu0 0.0
    %531 = vmatpush1.msra.mxu0 0.0
    %532 = vmatprep.subr.mxu0 0.0
    %533 = vmatpush1.msra.mxu0 0.0
    %534 = vmatprep.subr.mxu0 0.0
    %535 = vmatpush1.msra.mxu0 0.0
    %536 = vmatprep.subr.mxu0 0.0
    %537 = vmatpush1.msra.mxu0 0.0
    %538 = vmatprep.subr.mxu0 0.0
    %539 = vmatpush1.msra.mxu0 0.0
    %540 = vmatprep.subr.mxu0 0.0
    %541 = vmatpush1.msra.mxu0 0.0
    %542 = vmatprep.subr.mxu0 0.0
    %543 = vmatpush1.msra.mxu0 0.0
    %544 = vmatprep.subr.mxu0 0.0
    %545 = vmatpush1.msra.mxu0 0.0
    %546 = vmatprep.subr.mxu0 0.0
    %547 = vmatpush1.msra.mxu0 0.0
    %548 = vmatprep.subr.mxu0 0.0
    %549 = vmatpush1.msra.mxu0 0.0
    %550 = vmatprep.subr.mxu0 0.0
    %551 = vmatpush1.msra.mxu0 0.0
    %552 = vmatprep.subr.mxu0 0.0
    %553 = vmatpush1.msra.mxu0 0.0
    %554 = vmatprep.subr.mxu0 0.0
    %555 = vmatpush1.msra.mxu0 0.0
    %556 = vmatprep.subr.mxu0 0.0
    %557 = vmatpush1.msra.mxu0 0.0
    %558 = vmatprep.mubr.f32.mxu0 0.0
    %559 = vmatmul.mubr.f32.gmra.mrb[0].mxu0 %v492
    %v560 = vpop.f32.mrb[0].mxu0
    %v561 = vadd.f32 0.0, %v560
    %v562 = vpop.f32.mrb[0].mxu0
    %v563 = vadd.f32 0.0, %v562
    %564 = vdwg.mxu0
    %v567 = vrot.slane %v561, 4
    %v568 = vrot.slane %v563, 4
    %v571 = vadd.f32 %v334, %v567
    %v572 = vadd.f32 %v335, %v568
    %v573 = vxor.u32 %v571, 2147483648
    %v574 = vxor.u32 %v572, 2147483648
    %v575 = vmul.f32 %v573, 1.442695
    %v576 = vpow.pop %v575
    %v577 = vmul.f32 %v574, 1.442695
    %v578 = vpow.pop %v577
    %v579 = vadd.f32 %v576, 1.0
    %v580 = vadd.f32 %v578, 1.0
    %v581 = vrcp.pop %v579
    %v582 = vmul.f32 1.0, %v581
    %v583 = vrcp.pop %v580
    %v584 = vmul.f32 1.0, %v583
    %v585 = vmul.f32 %v584, 2.0
    %v586 = vsub.f32 %v585, 1.0
    %v588 = vrot.slane %v478, 6
    %v590 = vmul.f32 %v582, %v588
    %v591 = vmul.f32 %v582, %v586
    %593 = vrot.lane.b32.xlu0 %v591, 64
    %v594 = vpop.permute.xlu0 %593
    %v596 = vadd.f32 %v590, %v594
    %v597 = vtanh.pop %v596
    %v598 = vmul.f32 %v584, %v597
    %600 = vrot.lane.b32.xlu0 %v598, 64
    %v601 = vpop.permute.xlu0 %600
    %vm603 = vcmask 259076
    %604 = vst.msk [vmem:[#allocation3] sm:$0x30] %vm603, %v601
    %vm605 = vcmask 521476
    %606 = vst.msk [vmem:[#allocation3 + $0x6] sm:$0x30] %vm605, %v601
    %v607 = vrot.slane %v598, 4
    %608 = vrot.lane.b32.xlu0 %v607, 64
    %v609 = vpop.permute.xlu0 %608
    %v610 = vsel %vm373, %v609, 0
    %612 = vmatprep.subr.mxu0 %v313
    %613 = vmatpush1.msra.mxu0 %v312
    %614 = vmatprep.subr.mxu0 %v315
    %615 = vmatpush1.msra.mxu0 %v314
    %616 = vmatprep.subr.mxu0 %v317
    %617 = vmatpush1.msra.mxu0 %v316
    %618 = vmatprep.subr.mxu0 %v319
    %619 = vmatpush1.msra.mxu0 %v318
    %620 = vmatprep.subr.mxu0 %v321
    %621 = vmatpush1.msra.mxu0 %v320
    %622 = vmatprep.subr.mxu0 %v323
    %623 = vmatpush1.msra.mxu0 %v322
    %624 = vmatprep.subr.mxu0 %v325
    %625 = vmatpush1.msra.mxu0 %v324
    %626 = vmatprep.subr.mxu0 %v327
    %627 = vmatpush1.msra.mxu0 %v326
    %628 = vmatprep.subr.mxu0 0.0
    %629 = vmatpush1.msra.mxu0 0.0
    %630 = vmatprep.subr.mxu0 0.0
    %631 = vmatpush1.msra.mxu0 0.0
    %632 = vmatprep.subr.mxu0 0.0
    %633 = vmatpush1.msra.mxu0 0.0
    %634 = vmatprep.subr.mxu0 0.0
    %635 = vmatpush1.msra.mxu0 0.0
    %636 = vmatprep.subr.mxu0 0.0
    %637 = vmatpush1.msra.mxu0 0.0
    %638 = vmatprep.subr.mxu0 0.0
    %639 = vmatpush1.msra.mxu0 0.0
    %640 = vmatprep.subr.mxu0 0.0
    %641 = vmatpush1.msra.mxu0 0.0
    %642 = vmatprep.subr.mxu0 0.0
    %643 = vmatpush1.msra.mxu0 0.0
    %644 = vmatprep.subr.mxu0 0.0
    %645 = vmatpush1.msra.mxu0 0.0
    %646 = vmatprep.subr.mxu0 0.0
    %647 = vmatpush1.msra.mxu0 0.0
    %648 = vmatprep.subr.mxu0 0.0
    %649 = vmatpush1.msra.mxu0 0.0
    %650 = vmatprep.subr.mxu0 0.0
    %651 = vmatpush1.msra.mxu0 0.0
    %652 = vmatprep.subr.mxu0 0.0
    %653 = vmatpush1.msra.mxu0 0.0
    %654 = vmatprep.subr.mxu0 0.0
    %655 = vmatpush1.msra.mxu0 0.0
    %656 = vmatprep.subr.mxu0 0.0
    %657 = vmatpush1.msra.mxu0 0.0
    %658 = vmatprep.subr.mxu0 0.0
    %659 = vmatpush1.msra.mxu0 0.0
    %660 = vmatprep.subr.mxu0 0.0
    %661 = vmatpush1.msra.mxu0 0.0
    %662 = vmatprep.subr.mxu0 0.0
    %663 = vmatpush1.msra.mxu0 0.0
    %664 = vmatprep.subr.mxu0 0.0
    %665 = vmatpush1.msra.mxu0 0.0
    %666 = vmatprep.subr.mxu0 0.0
    %667 = vmatpush1.msra.mxu0 0.0
    %668 = vmatprep.subr.mxu0 0.0
    %669 = vmatpush1.msra.mxu0 0.0
    %670 = vmatprep.subr.mxu0 0.0
    %671 = vmatpush1.msra.mxu0 0.0
    %672 = vmatprep.subr.mxu0 0.0
    %673 = vmatpush1.msra.mxu0 0.0
    %674 = vmatprep.subr.mxu0 0.0
    %675 = vmatpush1.msra.mxu0 0.0
    %676 = vmatprep.mubr.f32.mxu0 0.0
    %677 = vmatmul.mubr.f32.gmra.mrb[0].mxu0 %v610
    %v678 = vpop.f32.mrb[0].mxu0
    %v679 = vadd.f32 0.0, %v678
    %v680 = vpop.f32.mrb[0].mxu0
    %v681 = vadd.f32 0.0, %v680
    %682 = vdwg.mxu0
    %v685 = vrot.slane %v679, 2
    %v686 = vrot.slane %v681, 2
    %v689 = vadd.f32 %v371, %v685
    %v690 = vadd.f32 %v372, %v686
    %v691 = vxor.u32 %v689, 2147483648
    %v692 = vxor.u32 %v690, 2147483648
    %v693 = vmul.f32 %v691, 1.442695
    %v694 = vpow.pop %v693
    %v695 = vmul.f32 %v692, 1.442695
    %v696 = vpow.pop %v695
    %v697 = vadd.f32 %v694, 1.0
    %v698 = vadd.f32 %v696, 1.0
    %v699 = vrcp.pop %v697
    %v700 = vmul.f32 1.0, %v699
    %v701 = vrcp.pop %v698
    %v702 = vmul.f32 1.0, %v701
    %v703 = vmul.f32 %v702, 2.0
    %v704 = vsub.f32 %v703, 1.0
    %v706 = vrot.slane %v596, 6
    %v708 = vmul.f32 %v700, %v706
    %v709 = vmul.f32 %v700, %v704
    %711 = vrot.lane.b32.xlu0 %v709, 64
    %v712 = vpop.permute.xlu0 %711
    %v714 = vadd.f32 %v708, %v712
    %v715 = vtanh.pop %v714
    %v716 = vmul.f32 %v702, %v715
    %718 = vrot.lane.b32.xlu0 %v716, 64
    %v719 = vpop.permute.xlu0 %718
    %vm721 = vcmask 261126
    %722 = vst.msk [vmem:[#allocation3] sm:$0xc0] %vm721, %v719
    %vm723 = vcmask 523526
    %724 = vst.msk [vmem:[#allocation3 + $0x2] sm:$0xc0] %vm723, %v719
    %v727 = vrot.slane %v302, 6
    %v728 = vrot.slane %v304, 6
    %v731 = vadd.f32 %v210, %v727
    %v732 = vadd.f32 %v212, %v728
    %v733 = vrot.slane %v716, 6
    %734 = vrot.lane.b32.xlu0 %v733, 64
    %v735 = vpop.permute.xlu0 %734
    %v736 = vsel %vm373, %v735, 0
    %738 = vmatprep.subr.mxu0 %v313
    %739 = vmatpush1.msra.mxu0 %v312
    %740 = vmatprep.subr.mxu0 %v315
    %741 = vmatpush1.msra.mxu0 %v314
    %742 = vmatprep.subr.mxu0 %v317
    %743 = vmatpush1.msra.mxu0 %v316
    %744 = vmatprep.subr.mxu0 %v319
    %745 = vmatpush1.msra.mxu0 %v318
    %746 = vmatprep.subr.mxu0 %v321
    %747 = vmatpush1.msra.mxu0 %v320
    %748 = vmatprep.subr.mxu0 %v323
    %749 = vmatpush1.msra.mxu0 %v322
    %750 = vmatprep.subr.mxu0 %v325
    %751 = vmatpush1.msra.mxu0 %v324
    %752 = vmatprep.subr.mxu0 %v327
    %753 = vmatpush1.msra.mxu0 %v326
    %754 = vmatprep.subr.mxu0 0.0
    %755 = vmatpush1.msra.mxu0 0.0
    %756 = vmatprep.subr.mxu0 0.0
    %757 = vmatpush1.msra.mxu0 0.0
    %758 = vmatprep.subr.mxu0 0.0
    %759 = vmatpush1.msra.mxu0 0.0
    %760 = vmatprep.subr.mxu0 0.0
    %761 = vmatpush1.msra.mxu0 0.0
    %762 = vmatprep.subr.mxu0 0.0
    %763 = vmatpush1.msra.mxu0 0.0
    %764 = vmatprep.subr.mxu0 0.0
    %765 = vmatpush1.msra.mxu0 0.0
    %766 = vmatprep.subr.mxu0 0.0
    %767 = vmatpush1.msra.mxu0 0.0
    %768 = vmatprep.subr.mxu0 0.0
    %769 = vmatpush1.msra.mxu0 0.0
    %770 = vmatprep.subr.mxu0 0.0
    %771 = vmatpush1.msra.mxu0 0.0
    %772 = vmatprep.subr.mxu0 0.0
    %773 = vmatpush1.msra.mxu0 0.0
    %774 = vmatprep.subr.mxu0 0.0
    %775 = vmatpush1.msra.mxu0 0.0
    %776 = vmatprep.subr.mxu0 0.0
    %777 = vmatpush1.msra.mxu0 0.0
    %778 = vmatprep.subr.mxu0 0.0
    %779 = vmatpush1.msra.mxu0 0.0
    %780 = vmatprep.subr.mxu0 0.0
    %781 = vmatpush1.msra.mxu0 0.0
    %782 = vmatprep.subr.mxu0 0.0
    %783 = vmatpush1.msra.mxu0 0.0
    %784 = vmatprep.subr.mxu0 0.0
    %785 = vmatpush1.msra.mxu0 0.0
    %786 = vmatprep.subr.mxu0 0.0
    %787 = vmatpush1.msra.mxu0 0.0
    %788 = vmatprep.subr.mxu0 0.0
    %789 = vmatpush1.msra.mxu0 0.0
    %790 = vmatprep.subr.mxu0 0.0
    %791 = vmatpush1.msra.mxu0 0.0
    %792 = vmatprep.subr.mxu0 0.0
    %793 = vmatpush1.msra.mxu0 0.0
    %794 = vmatprep.subr.mxu0 0.0
    %795 = vmatpush1.msra.mxu0 0.0
    %796 = vmatprep.subr.mxu0 0.0
    %797 = vmatpush1.msra.mxu0 0.0
    %798 = vmatprep.subr.mxu0 0.0
    %799 = vmatpush1.msra.mxu0 0.0
    %800 = vmatprep.subr.mxu0 0.0
    %801 = vmatpush1.msra.mxu0 0.0
    %802 = vmatprep.mubr.f32.mxu0 0.0
    %803 = vmatmul.mubr.f32.gmra.mrb[0].mxu0 %v736
    %v804 = vpop.f32.mrb[0].mxu0
    %v805 = vadd.f32 0.0, %v804
    %v806 = vpop.f32.mrb[0].mxu0
    %v807 = vadd.f32 0.0, %v806
    %808 = vdwg.mxu0
    %v809 = vadd.f32 %v731, %v805
    %v810 = vadd.f32 %v732, %v807
    %v811 = vxor.u32 %v809, 2147483648
    %v812 = vxor.u32 %v810, 2147483648
    %v813 = vmul.f32 %v811, 1.442695
    %v814 = vpow.pop %v813
    %v815 = vmul.f32 %v812, 1.442695
    %v816 = vpow.pop %v815
    %v817 = vadd.f32 %v814, 1.0
    %v818 = vadd.f32 %v816, 1.0
    %v819 = vrcp.pop %v817
    %v820 = vmul.f32 1.0, %v819
    %v821 = vrcp.pop %v818
    %v822 = vmul.f32 1.0, %v821
    %v823 = vmul.f32 %v822, 2.0
    %v824 = vsub.f32 %v823, 1.0
    %v826 = vrot.slane %v714, 6
    %v828 = vmul.f32 %v820, %v826
    %v829 = vmul.f32 %v820, %v824
    %831 = vrot.lane.b32.xlu0 %v829, 64
    %v832 = vpop.permute.xlu0 %831
    %v834 = vadd.f32 %v828, %v832
    %v835 = vtanh.pop %v834
    %v836 = vmul.f32 %v822, %v835
    %838 = vrot.lane.b32.xlu0 %v836, 64
    %v839 = vpop.permute.xlu0 %838
    %841 = vst.msk [vmem:[#allocation3 + $0x8] sm:$0x3] %vm363, %v839
    %842 = vst.msk [vmem:[#allocation3 + $0x6] sm:$0x3] %vm365, %v839
    %v843 = vrot.slane %v302, 2
    %v844 = vrot.slane %v304, 2
    %v847 = vadd.f32 %v210, %v843
    %v848 = vadd.f32 %v212, %v844
    %v849 = vsel %vm373, %v839, 0
    %851 = vmatprep.subr.mxu0 %v313
    %852 = vmatpush1.msra.mxu0 %v312
    %853 = vmatprep.subr.mxu0 %v315
    %854 = vmatpush1.msra.mxu0 %v314
    %855 = vmatprep.subr.mxu0 %v317
    %856 = vmatpush1.msra.mxu0 %v316
    %857 = vmatprep.subr.mxu0 %v319
    %858 = vmatpush1.msra.mxu0 %v318
    %859 = vmatprep.subr.mxu0 %v321
    %860 = vmatpush1.msra.mxu0 %v320
    %861 = vmatprep.subr.mxu0 %v323
    %862 = vmatpush1.msra.mxu0 %v322
    %863 = vmatprep.subr.mxu0 %v325
    %864 = vmatpush1.msra.mxu0 %v324
    %865 = vmatprep.subr.mxu0 %v327
    %866 = vmatpush1.msra.mxu0 %v326
    %867 = vmatprep.subr.mxu0 0.0
    %868 = vmatpush1.msra.mxu0 0.0
    %869 = vmatprep.subr.mxu0 0.0
    %870 = vmatpush1.msra.mxu0 0.0
    %871 = vmatprep.subr.mxu0 0.0
    %872 = vmatpush1.msra.mxu0 0.0
    %873 = vmatprep.subr.mxu0 0.0
    %874 = vmatpush1.msra.mxu0 0.0
    %875 = vmatprep.subr.mxu0 0.0
    %876 = vmatpush1.msra.mxu0 0.0
    %877 = vmatprep.subr.mxu0 0.0
    %878 = vmatpush1.msra.mxu0 0.0
    %879 = vmatprep.subr.mxu0 0.0
    %880 = vmatpush1.msra.mxu0 0.0
    %881 = vmatprep.subr.mxu0 0.0
    %882 = vmatpush1.msra.mxu0 0.0
    %883 = vmatprep.subr.mxu0 0.0
    %884 = vmatpush1.msra.mxu0 0.0
    %885 = vmatprep.subr.mxu0 0.0
    %886 = vmatpush1.msra.mxu0 0.0
    %887 = vmatprep.subr.mxu0 0.0
    %888 = vmatpush1.msra.mxu0 0.0
    %889 = vmatprep.subr.mxu0 0.0
    %890 = vmatpush1.msra.mxu0 0.0
    %891 = vmatprep.subr.mxu0 0.0
    %892 = vmatpush1.msra.mxu0 0.0
    %893 = vmatprep.subr.mxu0 0.0
    %894 = vmatpush1.msra.mxu0 0.0
    %895 = vmatprep.subr.mxu0 0.0
    %896 = vmatpush1.msra.mxu0 0.0
    %897 = vmatprep.subr.mxu0 0.0
    %898 = vmatpush1.msra.mxu0 0.0
    %899 = vmatprep.subr.mxu0 0.0
    %900 = vmatpush1.msra.mxu0 0.0
    %901 = vmatprep.subr.mxu0 0.0
    %902 = vmatpush1.msra.mxu0 0.0
    %903 = vmatprep.subr.mxu0 0.0
    %904 = vmatpush1.msra.mxu0 0.0
    %905 = vmatprep.subr.mxu0 0.0
    %906 = vmatpush1.msra.mxu0 0.0
    %907 = vmatprep.subr.mxu0 0.0
    %908 = vmatpush1.msra.mxu0 0.0
    %909 = vmatprep.subr.mxu0 0.0
    %910 = vmatpush1.msra.mxu0 0.0
    %911 = vmatprep.subr.mxu0 0.0
    %912 = vmatpush1.msra.mxu0 0.0
    %913 = vmatprep.subr.mxu0 0.0
    %914 = vmatpush1.msra.mxu0 0.0
    %915 = vmatprep.mubr.f32.mxu0 0.0
    %916 = vmatmul.mubr.f32.gmra.mrb[0].mxu0 %v849
    %v917 = vpop.f32.mrb[0].mxu0
    %v918 = vadd.f32 0.0, %v917
    %v919 = vpop.f32.mrb[0].mxu0
    %v920 = vadd.f32 0.0, %v919
    %921 = vdwg.mxu0
    %v924 = vrot.slane %v918, 6
    %v925 = vrot.slane %v920, 6
    %v928 = vadd.f32 %v847, %v924
    %v929 = vadd.f32 %v848, %v925
    %v930 = vxor.u32 %v928, 2147483648
    %v931 = vxor.u32 %v929, 2147483648
    %v932 = vmul.f32 %v930, 1.442695
    %v933 = vpow.pop %v932
    %v934 = vmul.f32 %v931, 1.442695
    %v935 = vpow.pop %v934
    %v936 = vadd.f32 %v933, 1.0
    %v937 = vadd.f32 %v935, 1.0
    %v938 = vrcp.pop %v936
    %v939 = vmul.f32 1.0, %v938
    %v940 = vrcp.pop %v937
    %v941 = vmul.f32 1.0, %v940
    %v942 = vmul.f32 %v941, 2.0
    %v943 = vsub.f32 %v942, 1.0
    %v945 = vrot.slane %v834, 6
    %v947 = vmul.f32 %v939, %v945
    %v948 = vmul.f32 %v939, %v943
    %950 = vrot.lane.b32.xlu0 %v948, 64
    %v951 = vpop.permute.xlu0 %950
    %v953 = vadd.f32 %v947, %v951
    %v954 = vtanh.pop %v953
    %v955 = vmul.f32 %v941, %v954
    %957 = vrot.lane.b32.xlu0 %v955, 64
    %v958 = vpop.permute.xlu0 %957
    %960 = vst.msk [vmem:[#allocation3 + $0x8] sm:$0xc] %vm485, %v958
    %961 = vst.msk [vmem:[#allocation3 + $0x2] sm:$0xc] %vm487, %v958
    %v962 = vrot.slane %v955, 2
    %963 = vrot.lane.b32.xlu0 %v962, 64
    %v964 = vpop.permute.xlu0 %963
    %v965 = vsel %vm373, %v964, 0
    %967 = vmatprep.subr.mxu0 %v313
    %968 = vmatpush1.msra.mxu0 %v312
    %969 = vmatprep.subr.mxu0 %v315
    %970 = vmatpush1.msra.mxu0 %v314
    %971 = vmatprep.subr.mxu0 %v317
    %972 = vmatpush1.msra.mxu0 %v316
    %973 = vmatprep.subr.mxu0 %v319
    %974 = vmatpush1.msra.mxu0 %v318
    %975 = vmatprep.subr.mxu0 %v321
    %976 = vmatpush1.msra.mxu0 %v320
    %977 = vmatprep.subr.mxu0 %v323
    %978 = vmatpush1.msra.mxu0 %v322
    %979 = vmatprep.subr.mxu0 %v325
    %980 = vmatpush1.msra.mxu0 %v324
    %981 = vmatprep.subr.mxu0 %v327
    %982 = vmatpush1.msra.mxu0 %v326
    %983 = vmatprep.subr.mxu0 0.0
    %984 = vmatpush1.msra.mxu0 0.0
    %985 = vmatprep.subr.mxu0 0.0
    %986 = vmatpush1.msra.mxu0 0.0
    %987 = vmatprep.subr.mxu0 0.0
    %988 = vmatpush1.msra.mxu0 0.0
    %989 = vmatprep.subr.mxu0 0.0
    %990 = vmatpush1.msra.mxu0 0.0
    %991 = vmatprep.subr.mxu0 0.0
    %992 = vmatpush1.msra.mxu0 0.0
    %993 = vmatprep.subr.mxu0 0.0
    %994 = vmatpush1.msra.mxu0 0.0
    %995 = vmatprep.subr.mxu0 0.0
    %996 = vmatpush1.msra.mxu0 0.0
    %997 = vmatprep.subr.mxu0 0.0
    %998 = vmatpush1.msra.mxu0 0.0
    %999 = vmatprep.subr.mxu0 0.0
    %1000 = vmatpush1.msra.mxu0 0.0
    %1001 = vmatprep.subr.mxu0 0.0
    %1002 = vmatpush1.msra.mxu0 0.0
    %1003 = vmatprep.subr.mxu0 0.0
    %1004 = vmatpush1.msra.mxu0 0.0
    %1005 = vmatprep.subr.mxu0 0.0
    %1006 = vmatpush1.msra.mxu0 0.0
    %1007 = vmatprep.subr.mxu0 0.0
    %1008 = vmatpush1.msra.mxu0 0.0
    %1009 = vmatprep.subr.mxu0 0.0
    %1010 = vmatpush1.msra.mxu0 0.0
    %1011 = vmatprep.subr.mxu0 0.0
    %1012 = vmatpush1.msra.mxu0 0.0
    %1013 = vmatprep.subr.mxu0 0.0
    %1014 = vmatpush1.msra.mxu0 0.0
    %1015 = vmatprep.subr.mxu0 0.0
    %1016 = vmatpush1.msra.mxu0 0.0
    %1017 = vmatprep.subr.mxu0 0.0
    %1018 = vmatpush1.msra.mxu0 0.0
    %1019 = vmatprep.subr.mxu0 0.0
    %1020 = vmatpush1.msra.mxu0 0.0
    %1021 = vmatprep.subr.mxu0 0.0
    %1022 = vmatpush1.msra.mxu0 0.0
    %1023 = vmatprep.subr.mxu0 0.0
    %1024 = vmatpush1.msra.mxu0 0.0
    %1025 = vmatprep.subr.mxu0 0.0
    %1026 = vmatpush1.msra.mxu0 0.0
    %1027 = vmatprep.subr.mxu0 0.0
    %1028 = vmatpush1.msra.mxu0 0.0
    %1029 = vmatprep.subr.mxu0 0.0
    %1030 = vmatpush1.msra.mxu0 0.0
    %1031 = vmatprep.mubr.f32.mxu0 0.0
    %1032 = vmatmul.mubr.f32.gmra.mrb[0].mxu0 %v965
    %v1033 = vpop.f32.mrb[0].mxu0
    %v1034 = vadd.f32 0.0, %v1033
    %v1035 = vpop.f32.mrb[0].mxu0
    %v1036 = vadd.f32 0.0, %v1035
    %1037 = vdwg.mxu0
    %v1040 = vrot.slane %v1034, 4
    %v1041 = vrot.slane %v1036, 4
    %v1044 = vadd.f32 %v731, %v1040
    %v1045 = vadd.f32 %v732, %v1041
    %v1046 = vxor.u32 %v1044, 2147483648
    %v1047 = vxor.u32 %v1045, 2147483648
    %v1048 = vmul.f32 %v1046, 1.442695
    %v1049 = vpow.pop %v1048
    %v1050 = vmul.f32 %v1047, 1.442695
    %v1051 = vpow.pop %v1050
    %v1052 = vadd.f32 %v1049, 1.0
    %v1053 = vadd.f32 %v1051, 1.0
    %v1054 = vrcp.pop %v1052
    %v1055 = vmul.f32 1.0, %v1054
    %v1056 = vrcp.pop %v1053
    %v1057 = vmul.f32 1.0, %v1056
    %v1058 = vmul.f32 %v1057, 2.0
    %v1059 = vsub.f32 %v1058, 1.0
    %v1061 = vrot.slane %v953, 6
    %v1063 = vmul.f32 %v1055, %v1061
    %v1064 = vmul.f32 %v1055, %v1059
    %1066 = vrot.lane.b32.xlu0 %v1064, 64
    %v1067 = vpop.permute.xlu0 %1066
    %v1069 = vadd.f32 %v1063, %v1067
    %v1070 = vtanh.pop %v1069
    %v1071 = vmul.f32 %v1057, %v1070
    %1073 = vrot.lane.b32.xlu0 %v1071, 64
    %v1074 = vpop.permute.xlu0 %1073
    %1076 = vst.msk [vmem:[#allocation3 + $0x8] sm:$0x30] %vm603, %v1074
    %1077 = vst.msk [vmem:[#allocation3 - $0x2] sm:$0x30] %vm605, %v1074
    %v1078 = vrot.slane %v1071, 4
    %1079 = vrot.lane.b32.xlu0 %v1078, 64
    %v1080 = vpop.permute.xlu0 %1079
    %v1081 = vsel %vm373, %v1080, 0
    %1083 = vmatprep.subr.mxu0 %v313
    %1084 = vmatpush1.msra.mxu0 %v312
    %1085 = vmatprep.subr.mxu0 %v315
    %1086 = vmatpush1.msra.mxu0 %v314
    %1087 = vmatprep.subr.mxu0 %v317
    %1088 = vmatpush1.msra.mxu0 %v316
    %1089 = vmatprep.subr.mxu0 %v319
    %1090 = vmatpush1.msra.mxu0 %v318
    %1091 = vmatprep.subr.mxu0 %v321
    %1092 = vmatpush1.msra.mxu0 %v320
    %1093 = vmatprep.subr.mxu0 %v323
    %1094 = vmatpush1.msra.mxu0 %v322
    %1095 = vmatprep.subr.mxu0 %v325
    %1096 = vmatpush1.msra.mxu0 %v324
    %1097 = vmatprep.subr.mxu0 %v327
    %1098 = vmatpush1.msra.mxu0 %v326
    %1099 = vmatprep.subr.mxu0 0.0
    %1100 = vmatpush1.msra.mxu0 0.0
    %1101 = vmatprep.subr.mxu0 0.0
    %1102 = vmatpush1.msra.mxu0 0.0
    %1103 = vmatprep.subr.mxu0 0.0
    %1104 = vmatpush1.msra.mxu0 0.0
    %1105 = vmatprep.subr.mxu0 0.0
    %1106 = vmatpush1.msra.mxu0 0.0
    %1107 = vmatprep.subr.mxu0 0.0
    %1108 = vmatpush1.msra.mxu0 0.0
    %1109 = vmatprep.subr.mxu0 0.0
    %1110 = vmatpush1.msra.mxu0 0.0
    %1111 = vmatprep.subr.mxu0 0.0
    %1112 = vmatpush1.msra.mxu0 0.0
    %1113 = vmatprep.subr.mxu0 0.0
    %1114 = vmatpush1.msra.mxu0 0.0
    %1115 = vmatprep.subr.mxu0 0.0
    %1116 = vmatpush1.msra.mxu0 0.0
    %1117 = vmatprep.subr.mxu0 0.0
    %1118 = vmatpush1.msra.mxu0 0.0
    %1119 = vmatprep.subr.mxu0 0.0
    %1120 = vmatpush1.msra.mxu0 0.0
    %1121 = vmatprep.subr.mxu0 0.0
    %1122 = vmatpush1.msra.mxu0 0.0
    %1123 = vmatprep.subr.mxu0 0.0
    %1124 = vmatpush1.msra.mxu0 0.0
    %1125 = vmatprep.subr.mxu0 0.0
    %1126 = vmatpush1.msra.mxu0 0.0
    %1127 = vmatprep.subr.mxu0 0.0
    %1128 = vmatpush1.msra.mxu0 0.0
    %1129 = vmatprep.subr.mxu0 0.0
    %1130 = vmatpush1.msra.mxu0 0.0
    %1131 = vmatprep.subr.mxu0 0.0
    %1132 = vmatpush1.msra.mxu0 0.0
    %1133 = vmatprep.subr.mxu0 0.0
    %1134 = vmatpush1.msra.mxu0 0.0
    %1135 = vmatprep.subr.mxu0 0.0
    %1136 = vmatpush1.msra.mxu0 0.0
    %1137 = vmatprep.subr.mxu0 0.0
    %1138 = vmatpush1.msra.mxu0 0.0
    %1139 = vmatprep.subr.mxu0 0.0
    %1140 = vmatpush1.msra.mxu0 0.0
    %1141 = vmatprep.subr.mxu0 0.0
    %1142 = vmatpush1.msra.mxu0 0.0
    %1143 = vmatprep.subr.mxu0 0.0
    %1144 = vmatpush1.msra.mxu0 0.0
    %1145 = vmatprep.subr.mxu0 0.0
    %1146 = vmatpush1.msra.mxu0 0.0
    %1147 = vmatprep.mubr.f32.mxu0 0.0
    %1148 = vmatmul.mubr.f32.gmra.mrb[0].mxu0 %v1081
    %v1149 = vpop.f32.mrb[0].mxu0
    %v1150 = vadd.f32 0.0, %v1149
    %v1151 = vpop.f32.mrb[0].mxu0
    %v1152 = vadd.f32 0.0, %v1151
    %1153 = vdwg.mxu0
    %v1156 = vrot.slane %v1150, 2
    %v1157 = vrot.slane %v1152, 2
    %v1160 = vadd.f32 %v847, %v1156
    %v1161 = vadd.f32 %v848, %v1157
    %v1162 = vxor.u32 %v1160, 2147483648
    %v1163 = vxor.u32 %v1161, 2147483648
    %v1164 = vmul.f32 %v1162, 1.442695
    %v1165 = vpow.pop %v1164
    %v1166 = vmul.f32 %v1163, 1.442695
    %v1167 = vpow.pop %v1166
    %v1168 = vadd.f32 %v1165, 1.0
    %v1169 = vadd.f32 %v1167, 1.0
    %v1170 = vrcp.pop %v1168
    %v1171 = vmul.f32 1.0, %v1170
    %v1172 = vrcp.pop %v1169
    %v1173 = vmul.f32 1.0, %v1172
    %v1174 = vmul.f32 %v1173, 2.0
    %v1175 = vsub.f32 %v1174, 1.0
    %v1177 = vrot.slane %v1069, 6
    %v1179 = vmul.f32 %v1171, %v1177
    %v1180 = vmul.f32 %v1171, %v1175
    %1182 = vrot.lane.b32.xlu0 %v1180, 64
    %v1183 = vpop.permute.xlu0 %1182
    %v1185 = vadd.f32 %v1179, %v1183
    %v1186 = vtanh.pop %v1185
    %v1187 = vmul.f32 %v1173, %v1186
    %1189 = vrot.lane.b32.xlu0 %v1187, 64
    %v1190 = vpop.permute.xlu0 %1189
    %1192 = vst.msk [vmem:[#allocation3 + $0x8] sm:$0xc0] %vm721, %v1190
    %1193 = vst.msk [vmem:[#allocation3 - $0x6] sm:$0xc0] %vm723, %v1190
    %v1194 = vld [vmem:[#allocation3] sm:$0xff]
    %v1195 = vld [vmem:[#allocation3 + $0x8] sm:$0xff]
    %v1196 = vld [vmem:[#allocation8 + $0x120] sm:$0xff]
    %v1197 = vld [vmem:[#allocation8 + $0x128] sm:$0xff]
    %v1198 = vld [vmem:[#allocation8 + $0x130] sm:$0xff]
    %v1199 = vld [vmem:[#allocation8 + $0x138] sm:$0xff]
    %v1200 = vld [vmem:[#allocation8 + $0x140] sm:$0xff]
    %v1201 = vld [vmem:[#allocation8 + $0x148] sm:$0xff]
    %v1202 = vld [vmem:[#allocation8 + $0x150] sm:$0xff]
    %v1203 = vld [vmem:[#allocation8 + $0x158] sm:$0xff]
    %v1204 = vld [vmem:[#allocation8 + $0x160] sm:$0xff]
    %v1205 = vld [vmem:[#allocation8 + $0x168] sm:$0xff]
    %v1206 = vld [vmem:[#allocation8 + $0x170] sm:$0xff]
    %v1207 = vld [vmem:[#allocation8 + $0x178] sm:$0xff]
    %v1208 = vld [vmem:[#allocation8 + $0x180] sm:$0xff]
    %v1209 = vld [vmem:[#allocation8 + $0x188] sm:$0xff]
    %v1210 = vld [vmem:[#allocation8 + $0x190] sm:$0xff]
    %v1211 = vld [vmem:[#allocation8 + $0x198] sm:$0xff]
    %s1212 = scalar_lea.vmem [#allocation8], 672
    %v1213 = vld [vmem:[%s1212] ss:$8 sm:$0x3]
    %v1215 = vlaneseq
    %v1216 = vshrl.u32 %v1215, 7
    %v1217 = vsub.s32 0, %v1216
    %v1218 = vrot.slane %v1213, %v1217
    %v1219 = vlaneseq
    %v1220 = vshrl.u32 %v1219, 7
    %v1221 = vsub.s32 1, %v1220
    %v1222 = vrot.slane %v1213, %v1221
    %v1226 = vsel %vm373, %v1194, 0
    %v1229 = vsel %vm373, %v1195, 0
    %1231 = vmatprep.subr.mxu0 %v1197
    %1232 = vmatpush1.msra.mxu0 %v1196
    %1233 = vmatprep.subr.mxu0 %v1199
    %1234 = vmatpush1.msra.mxu0 %v1198
    %1235 = vmatprep.subr.mxu0 %v1201
    %1236 = vmatpush1.msra.mxu0 %v1200
    %1237 = vmatprep.subr.mxu0 %v1203
    %1238 = vmatpush1.msra.mxu0 %v1202
    %1239 = vmatprep.subr.mxu0 %v1205
    %1240 = vmatpush1.msra.mxu0 %v1204
    %1241 = vmatprep.subr.mxu0 %v1207
    %1242 = vmatpush1.msra.mxu0 %v1206
    %1243 = vmatprep.subr.mxu0 %v1209
    %1244 = vmatpush1.msra.mxu0 %v1208
    %1245 = vmatprep.subr.mxu0 %v1211
    %1246 = vmatpush1.msra.mxu0 %v1210
    %1247 = vmatprep.subr.mxu0 0.0
    %1248 = vmatpush1.msra.mxu0 0.0
    %1249 = vmatprep.subr.mxu0 0.0
    %1250 = vmatpush1.msra.mxu0 0.0
    %1251 = vmatprep.subr.mxu0 0.0
    %1252 = vmatpush1.msra.mxu0 0.0
    %1253 = vmatprep.subr.mxu0 0.0
    %1254 = vmatpush1.msra.mxu0 0.0
    %1255 = vmatprep.subr.mxu0 0.0
    %1256 = vmatpush1.msra.mxu0 0.0
    %1257 = vmatprep.subr.mxu0 0.0
    %1258 = vmatpush1.msra.mxu0 0.0
    %1259 = vmatprep.subr.mxu0 0.0
    %1260 = vmatpush1.msra.mxu0 0.0
    %1261 = vmatprep.subr.mxu0 0.0
    %1262 = vmatpush1.msra.mxu0 0.0
    %1263 = vmatprep.subr.mxu0 0.0
    %1264 = vmatpush1.msra.mxu0 0.0
    %1265 = vmatprep.subr.mxu0 0.0
    %1266 = vmatpush1.msra.mxu0 0.0
    %1267 = vmatprep.subr.mxu0 0.0
    %1268 = vmatpush1.msra.mxu0 0.0
    %1269 = vmatprep.subr.mxu0 0.0
    %1270 = vmatpush1.msra.mxu0 0.0
    %1271 = vmatprep.subr.mxu0 0.0
    %1272 = vmatpush1.msra.mxu0 0.0
    %1273 = vmatprep.subr.mxu0 0.0
    %1274 = vmatpush1.msra.mxu0 0.0
    %1275 = vmatprep.subr.mxu0 0.0
    %1276 = vmatpush1.msra.mxu0 0.0
    %1277 = vmatprep.subr.mxu0 0.0
    %1278 = vmatpush1.msra.mxu0 0.0
    %1279 = vmatprep.subr.mxu0 0.0
    %1280 = vmatpush1.msra.mxu0 0.0
    %1281 = vmatprep.subr.mxu0 0.0
    %1282 = vmatpush1.msra.mxu0 0.0
    %1283 = vmatprep.subr.mxu0 0.0
    %1284 = vmatpush1.msra.mxu0 0.0
    %1285 = vmatprep.subr.mxu0 0.0
    %1286 = vmatpush1.msra.mxu0 0.0
    %1287 = vmatprep.subr.mxu0 0.0
    %1288 = vmatpush1.msra.mxu0 0.0
    %1289 = vmatprep.subr.mxu0 0.0
    %1290 = vmatpush1.msra.mxu0 0.0
    %1291 = vmatprep.subr.mxu0 0.0
    %1292 = vmatpush1.msra.mxu0 0.0
    %1293 = vmatprep.subr.mxu0 0.0
    %1294 = vmatpush1.msra.mxu0 0.0
    %1295 = vmatprep.mubr.f32.mxu0 0.0
    %1296 = vmatmul.mubr.f32.gmra.mrb[0].mxu0 %v1226
    %v1297 = vpop.f32.mrb[0].mxu0
    %v1298 = vadd.f32 %v1218, %v1297
    %v1299 = vpop.f32.mrb[0].mxu0
    %v1300 = vadd.f32 %v1222, %v1299
    %1301 = vmatprep.mubr.f32.mxu0 0.0
    %1302 = vmatmul.mubr.f32.gmra.mrb[0].mxu0 %v1229
    %v1303 = vpop.f32.mrb[0].mxu0
    %v1304 = vadd.f32 %v1218, %v1303
    %v1305 = vpop.f32.mrb[0].mxu0
    %v1306 = vadd.f32 %v1222, %v1305
    %1307 = vdwg.mxu0
    %v1308 = vld [vmem:[#allocation8 + $0x1a0] sm:$0xff]
    %v1309 = vld [vmem:[#allocation8 + $0x1a8] sm:$0xff]
    %v1310 = vld [vmem:[#allocation8 + $0x1b0] sm:$0xff]
    %v1311 = vld [vmem:[#allocation8 + $0x1b8] sm:$0xff]
    %v1312 = vld [vmem:[#allocation8 + $0x1c0] sm:$0xff]
    %v1313 = vld [vmem:[#allocation8 + $0x1c8] sm:$0xff]
    %v1314 = vld [vmem:[#allocation8 + $0x1d0] sm:$0xff]
    %v1315 = vld [vmem:[#allocation8 + $0x1d8] sm:$0xff]
    %v1316 = vld [vmem:[#allocation8 + $0x1e0] sm:$0xff]
    %v1317 = vld [vmem:[#allocation8 + $0x1e8] sm:$0xff]
    %v1318 = vld [vmem:[#allocation8 + $0x1f0] sm:$0xff]
    %v1319 = vld [vmem:[#allocation8 + $0x1f8] sm:$0xff]
    %v1320 = vld [vmem:[#allocation8 + $0x200] sm:$0xff]
    %v1321 = vld [vmem:[#allocation8 + $0x208] sm:$0xff]
    %v1322 = vld [vmem:[#allocation8 + $0x210] sm:$0xff]
    %v1323 = vld [vmem:[#allocation8 + $0x218] sm:$0xff]
    %s1324 = scalar_lea.vmem [#allocation8], 688
    %v1325 = vld [vmem:[%s1324] ss:$8 sm:$0x3]
    %v1327 = vlaneseq
    %v1328 = vshrl.u32 %v1327, 7
    %v1329 = vsub.s32 0, %v1328
    %v1330 = vrot.slane %v1325, %v1329
    %v1331 = vlaneseq
    %v1332 = vshrl.u32 %v1331, 7
    %v1333 = vsub.s32 1, %v1332
    %v1334 = vrot.slane %v1325, %v1333
    %1337 = vmatprep.subr.mxu0 %v1309
    %1338 = vmatpush1.msra.mxu0 %v1308
    %1339 = vmatprep.subr.mxu0 %v1311
    %1340 = vmatpush1.msra.mxu0 %v1310
    %1341 = vmatprep.subr.mxu0 %v1313
    %1342 = vmatpush1.msra.mxu0 %v1312
    %1343 = vmatprep.subr.mxu0 %v1315
    %1344 = vmatpush1.msra.mxu0 %v1314
    %1345 = vmatprep.subr.mxu0 %v1317
    %1346 = vmatpush1.msra.mxu0 %v1316
    %1347 = vmatprep.subr.mxu0 %v1319
    %1348 = vmatpush1.msra.mxu0 %v1318
    %1349 = vmatprep.subr.mxu0 %v1321
    %1350 = vmatpush1.msra.mxu0 %v1320
    %1351 = vmatprep.subr.mxu0 %v1323
    %1352 = vmatpush1.msra.mxu0 %v1322
    %1353 = vmatprep.subr.mxu0 0.0
    %1354 = vmatpush1.msra.mxu0 0.0
    %1355 = vmatprep.subr.mxu0 0.0
    %1356 = vmatpush1.msra.mxu0 0.0
    %1357 = vmatprep.subr.mxu0 0.0
    %1358 = vmatpush1.msra.mxu0 0.0
    %1359 = vmatprep.subr.mxu0 0.0
    %1360 = vmatpush1.msra.mxu0 0.0
    %1361 = vmatprep.subr.mxu0 0.0
    %1362 = vmatpush1.msra.mxu0 0.0
    %1363 = vmatprep.subr.mxu0 0.0
    %1364 = vmatpush1.msra.mxu0 0.0
    %1365 = vmatprep.subr.mxu0 0.0
    %1366 = vmatpush1.msra.mxu0 0.0
    %1367 = vmatprep.subr.mxu0 0.0
    %1368 = vmatpush1.msra.mxu0 0.0
    %1369 = vmatprep.subr.mxu0 0.0
    %1370 = vmatpush1.msra.mxu0 0.0
    %1371 = vmatprep.subr.mxu0 0.0
    %1372 = vmatpush1.msra.mxu0 0.0
    %1373 = vmatprep.subr.mxu0 0.0
    %1374 = vmatpush1.msra.mxu0 0.0
    %1375 = vmatprep.subr.mxu0 0.0
    %1376 = vmatpush1.msra.mxu0 0.0
    %1377 = vmatprep.subr.mxu0 0.0
    %1378 = vmatpush1.msra.mxu0 0.0
    %1379 = vmatprep.subr.mxu0 0.0
    %1380 = vmatpush1.msra.mxu0 0.0
    %1381 = vmatprep.subr.mxu0 0.0
    %1382 = vmatpush1.msra.mxu0 0.0
    %1383 = vmatprep.subr.mxu0 0.0
    %1384 = vmatpush1.msra.mxu0 0.0
    %1385 = vmatprep.subr.mxu0 0.0
    %1386 = vmatpush1.msra.mxu0 0.0
    %1387 = vmatprep.subr.mxu0 0.0
    %1388 = vmatpush1.msra.mxu0 0.0
    %1389 = vmatprep.subr.mxu0 0.0
    %1390 = vmatpush1.msra.mxu0 0.0
    %1391 = vmatprep.subr.mxu0 0.0
    %1392 = vmatpush1.msra.mxu0 0.0
    %1393 = vmatprep.subr.mxu0 0.0
    %1394 = vmatpush1.msra.mxu0 0.0
    %1395 = vmatprep.subr.mxu0 0.0
    %1396 = vmatpush1.msra.mxu0 0.0
    %1397 = vmatprep.subr.mxu0 0.0
    %1398 = vmatpush1.msra.mxu0 0.0
    %1399 = vmatprep.subr.mxu0 0.0
    %1400 = vmatpush1.msra.mxu0 0.0
    %1401 = vmatprep.mubr.f32.mxu0 0.0
    %1402 = vmatmul.mubr.f32.gmra.mrb[0].mxu0 %v1226
    %v1403 = vpop.f32.mrb[0].mxu0
    %v1404 = vadd.f32 %v1330, %v1403
    %v1405 = vpop.f32.mrb[0].mxu0
    %v1406 = vadd.f32 %v1334, %v1405
    %1407 = vmatprep.mubr.f32.mxu0 0.0
    %1408 = vmatmul.mubr.f32.gmra.mrb[0].mxu0 %v1229
    %v1409 = vpop.f32.mrb[0].mxu0
    %v1410 = vadd.f32 %v1330, %v1409
    %v1411 = vpop.f32.mrb[0].mxu0
    %v1412 = vadd.f32 %v1334, %v1411
    %1413 = vdwg.mxu0
    %v1414 = vld [vmem:[#allocation8 + $0x220] sm:$0xff]
    %v1415 = vld [vmem:[#allocation8 + $0x228] sm:$0xff]
    %v1416 = vld [vmem:[#allocation8 + $0x230] sm:$0xff]
    %v1417 = vld [vmem:[#allocation8 + $0x238] sm:$0xff]
    %v1418 = vld [vmem:[#allocation8 + $0x240] sm:$0xff]
    %v1419 = vld [vmem:[#allocation8 + $0x248] sm:$0xff]
    %v1420 = vld [vmem:[#allocation8 + $0x250] sm:$0xff]
    %v1421 = vld [vmem:[#allocation8 + $0x258] sm:$0xff]
    %v1422 = vld [vmem:[#allocation8 + $0x260] sm:$0xff]
    %v1423 = vld [vmem:[#allocation8 + $0x268] sm:$0xff]
    %v1424 = vld [vmem:[#allocation8 + $0x270] sm:$0xff]
    %v1425 = vld [vmem:[#allocation8 + $0x278] sm:$0xff]
    %v1426 = vld [vmem:[#allocation8 + $0x280] sm:$0xff]
    %v1427 = vld [vmem:[#allocation8 + $0x288] sm:$0xff]
    %v1428 = vld [vmem:[#allocation8 + $0x290] sm:$0xff]
    %v1429 = vld [vmem:[#allocation8 + $0x298] sm:$0xff]
    %v1432 = vrot.slane %v1410, 6
    %v1433 = vrot.slane %v1412, 6
    %v1436 = vadd.f32 %v1298, %v1432
    %v1437 = vadd.f32 %v1300, %v1433
    %v1438 = vxor.u32 %v1436, 2147483648
    %v1439 = vxor.u32 %v1437, 2147483648
    %v1440 = vmul.f32 %v1438, 1.442695
    %v1441 = vpow.pop %v1440
    %v1442 = vmul.f32 %v1439, 1.442695
    %v1443 = vpow.pop %v1442
    %v1444 = vadd.f32 %v1441, 1.0
    %v1445 = vadd.f32 %v1443, 1.0
    %v1446 = vrcp.pop %v1444
    %v1447 = vmul.f32 1.0, %v1446
    %v1448 = vrcp.pop %v1445
    %v1449 = vmul.f32 1.0, %v1448
    %v1450 = vmul.f32 %v1449, 2.0
    %v1451 = vsub.f32 %v1450, 1.0
    %v1452 = vmul.f32 %v1447, 0.0
    %v1453 = vmul.f32 %v1447, %v1451
    %1455 = vrot.lane.b32.xlu0 %v1453, 64
    %v1456 = vpop.permute.xlu0 %1455
    %v1458 = vadd.f32 %v1452, %v1456
    %v1459 = vtanh.pop %v1458
    %v1460 = vmul.f32 %v1449, %v1459
    %v1461 = vrot.slane %v1410, 2
    %v1462 = vrot.slane %v1412, 2
    %v1465 = vadd.f32 %v1298, %v1461
    %v1466 = vadd.f32 %v1300, %v1462
    %1468 = vrot.lane.b32.xlu0 %v1460, 64
    %v1469 = vpop.permute.xlu0 %1468
    %v1470 = vsel %vm373, %v1469, 0
    %1472 = vmatprep.subr.mxu0 %v1415
    %1473 = vmatpush1.msra.mxu0 %v1414
    %1474 = vmatprep.subr.mxu0 %v1417
    %1475 = vmatpush1.msra.mxu0 %v1416
    %1476 = vmatprep.subr.mxu0 %v1419
    %1477 = vmatpush1.msra.mxu0 %v1418
    %1478 = vmatprep.subr.mxu0 %v1421
    %1479 = vmatpush1.msra.mxu0 %v1420
    %1480 = vmatprep.subr.mxu0 %v1423
    %1481 = vmatpush1.msra.mxu0 %v1422
    %1482 = vmatprep.subr.mxu0 %v1425
    %1483 = vmatpush1.msra.mxu0 %v1424
    %1484 = vmatprep.subr.mxu0 %v1427
    %1485 = vmatpush1.msra.mxu0 %v1426
    %1486 = vmatprep.subr.mxu0 %v1429
    %1487 = vmatpush1.msra.mxu0 %v1428
    %1488 = vmatprep.subr.mxu0 0.0
    %1489 = vmatpush1.msra.mxu0 0.0
    %1490 = vmatprep.subr.mxu0 0.0
    %1491 = vmatpush1.msra.mxu0 0.0
    %1492 = vmatprep.subr.mxu0 0.0
    %1493 = vmatpush1.msra.mxu0 0.0
    %1494 = vmatprep.subr.mxu0 0.0
    %1495 = vmatpush1.msra.mxu0 0.0
    %1496 = vmatprep.subr.mxu0 0.0
    %1497 = vmatpush1.msra.mxu0 0.0
    %1498 = vmatprep.subr.mxu0 0.0
    %1499 = vmatpush1.msra.mxu0 0.0
    %1500 = vmatprep.subr.mxu0 0.0
    %1501 = vmatpush1.msra.mxu0 0.0
    %1502 = vmatprep.subr.mxu0 0.0
    %1503 = vmatpush1.msra.mxu0 0.0
    %1504 = vmatprep.subr.mxu0 0.0
    %1505 = vmatpush1.msra.mxu0 0.0
    %1506 = vmatprep.subr.mxu0 0.0
    %1507 = vmatpush1.msra.mxu0 0.0
    %1508 = vmatprep.subr.mxu0 0.0
    %1509 = vmatpush1.msra.mxu0 0.0
    %1510 = vmatprep.subr.mxu0 0.0
    %1511 = vmatpush1.msra.mxu0 0.0
    %1512 = vmatprep.subr.mxu0 0.0
    %1513 = vmatpush1.msra.mxu0 0.0
    %1514 = vmatprep.subr.mxu0 0.0
    %1515 = vmatpush1.msra.mxu0 0.0
    %1516 = vmatprep.subr.mxu0 0.0
    %1517 = vmatpush1.msra.mxu0 0.0
    %1518 = vmatprep.subr.mxu0 0.0
    %1519 = vmatpush1.msra.mxu0 0.0
    %1520 = vmatprep.subr.mxu0 0.0
    %1521 = vmatpush1.msra.mxu0 0.0
    %1522 = vmatprep.subr.mxu0 0.0
    %1523 = vmatpush1.msra.mxu0 0.0
    %1524 = vmatprep.subr.mxu0 0.0
    %1525 = vmatpush1.msra.mxu0 0.0
    %1526 = vmatprep.subr.mxu0 0.0
    %1527 = vmatpush1.msra.mxu0 0.0
    %1528 = vmatprep.subr.mxu0 0.0
    %1529 = vmatpush1.msra.mxu0 0.0
    %1530 = vmatprep.subr.mxu0 0.0
    %1531 = vmatpush1.msra.mxu0 0.0
    %1532 = vmatprep.subr.mxu0 0.0
    %1533 = vmatpush1.msra.mxu0 0.0
    %1534 = vmatprep.subr.mxu0 0.0
    %1535 = vmatpush1.msra.mxu0 0.0
    %1536 = vmatprep.mubr.f32.mxu0 0.0
    %1537 = vmatmul.mubr.f32.gmra.mrb[0].mxu0 %v1470
    %v1538 = vpop.f32.mrb[0].mxu0
    %v1539 = vadd.f32 0.0, %v1538
    %v1540 = vpop.f32.mrb[0].mxu0
    %v1541 = vadd.f32 0.0, %v1540
    %1542 = vdwg.mxu0
    %v1545 = vrot.slane %v1539, 6
    %v1546 = vrot.slane %v1541, 6
    %v1549 = vadd.f32 %v1465, %v1545
    %v1550 = vadd.f32 %v1466, %v1546
    %v1551 = vxor.u32 %v1549, 2147483648
    %v1552 = vxor.u32 %v1550, 2147483648
    %v1553 = vmul.f32 %v1551, 1.442695
    %v1554 = vpow.pop %v1553
    %v1555 = vmul.f32 %v1552, 1.442695
    %v1556 = vpow.pop %v1555
    %v1557 = vadd.f32 %v1554, 1.0
    %v1558 = vadd.f32 %v1556, 1.0
    %v1559 = vrcp.pop %v1557
    %v1560 = vmul.f32 1.0, %v1559
    %v1561 = vrcp.pop %v1558
    %v1562 = vmul.f32 1.0, %v1561
    %v1563 = vmul.f32 %v1562, 2.0
    %v1564 = vsub.f32 %v1563, 1.0
    %v1566 = vrot.slane %v1458, 6
    %v1568 = vmul.f32 %v1560, %v1566
    %v1569 = vmul.f32 %v1560, %v1564
    %1571 = vrot.lane.b32.xlu0 %v1569, 64
    %v1572 = vpop.permute.xlu0 %1571
    %v1574 = vadd.f32 %v1568, %v1572
    %v1575 = vtanh.pop %v1574
    %v1576 = vmul.f32 %v1562, %v1575
    %v1578 = vrot.slane %v1576, 2
    %1579 = vrot.lane.b32.xlu0 %v1578, 64
    %v1580 = vpop.permute.xlu0 %1579
    %v1581 = vsel %vm373, %v1580, 0
    %1583 = vmatprep.subr.mxu0 %v1415
    %1584 = vmatpush1.msra.mxu0 %v1414
    %1585 = vmatprep.subr.mxu0 %v1417
    %1586 = vmatpush1.msra.mxu0 %v1416
    %1587 = vmatprep.subr.mxu0 %v1419
    %1588 = vmatpush1.msra.mxu0 %v1418
    %1589 = vmatprep.subr.mxu0 %v1421
    %1590 = vmatpush1.msra.mxu0 %v1420
    %1591 = vmatprep.subr.mxu0 %v1423
    %1592 = vmatpush1.msra.mxu0 %v1422
    %1593 = vmatprep.subr.mxu0 %v1425
    %1594 = vmatpush1.msra.mxu0 %v1424
    %1595 = vmatprep.subr.mxu0 %v1427
    %1596 = vmatpush1.msra.mxu0 %v1426
    %1597 = vmatprep.subr.mxu0 %v1429
    %1598 = vmatpush1.msra.mxu0 %v1428
    %1599 = vmatprep.subr.mxu0 0.0
    %1600 = vmatpush1.msra.mxu0 0.0
    %1601 = vmatprep.subr.mxu0 0.0
    %1602 = vmatpush1.msra.mxu0 0.0
    %1603 = vmatprep.subr.mxu0 0.0
    %1604 = vmatpush1.msra.mxu0 0.0
    %1605 = vmatprep.subr.mxu0 0.0
    %1606 = vmatpush1.msra.mxu0 0.0
    %1607 = vmatprep.subr.mxu0 0.0
    %1608 = vmatpush1.msra.mxu0 0.0
    %1609 = vmatprep.subr.mxu0 0.0
    %1610 = vmatpush1.msra.mxu0 0.0
    %1611 = vmatprep.subr.mxu0 0.0
    %1612 = vmatpush1.msra.mxu0 0.0
    %1613 = vmatprep.subr.mxu0 0.0
    %1614 = vmatpush1.msra.mxu0 0.0
    %1615 = vmatprep.subr.mxu0 0.0
    %1616 = vmatpush1.msra.mxu0 0.0
    %1617 = vmatprep.subr.mxu0 0.0
    %1618 = vmatpush1.msra.mxu0 0.0
    %1619 = vmatprep.subr.mxu0 0.0
    %1620 = vmatpush1.msra.mxu0 0.0
    %1621 = vmatprep.subr.mxu0 0.0
    %1622 = vmatpush1.msra.mxu0 0.0
    %1623 = vmatprep.subr.mxu0 0.0
    %1624 = vmatpush1.msra.mxu0 0.0
    %1625 = vmatprep.subr.mxu0 0.0
    %1626 = vmatpush1.msra.mxu0 0.0
    %1627 = vmatprep.subr.mxu0 0.0
    %1628 = vmatpush1.msra.mxu0 0.0
    %1629 = vmatprep.subr.mxu0 0.0
    %1630 = vmatpush1.msra.mxu0 0.0
    %1631 = vmatprep.subr.mxu0 0.0
    %1632 = vmatpush1.msra.mxu0 0.0
    %1633 = vmatprep.subr.mxu0 0.0
    %1634 = vmatpush1.msra.mxu0 0.0
    %1635 = vmatprep.subr.mxu0 0.0
    %1636 = vmatpush1.msra.mxu0 0.0
    %1637 = vmatprep.subr.mxu0 0.0
    %1638 = vmatpush1.msra.mxu0 0.0
    %1639 = vmatprep.subr.mxu0 0.0
    %1640 = vmatpush1.msra.mxu0 0.0
    %1641 = vmatprep.subr.mxu0 0.0
    %1642 = vmatpush1.msra.mxu0 0.0
    %1643 = vmatprep.subr.mxu0 0.0
    %1644 = vmatpush1.msra.mxu0 0.0
    %1645 = vmatprep.subr.mxu0 0.0
    %1646 = vmatpush1.msra.mxu0 0.0
    %1647 = vmatprep.mubr.f32.mxu0 0.0
    %1648 = vmatmul.mubr.f32.gmra.mrb[0].mxu0 %v1581
    %v1649 = vpop.f32.mrb[0].mxu0
    %v1650 = vadd.f32 0.0, %v1649
    %v1651 = vpop.f32.mrb[0].mxu0
    %v1652 = vadd.f32 0.0, %v1651
    %1653 = vdwg.mxu0
    %v1656 = vrot.slane %v1650, 4
    %v1657 = vrot.slane %v1652, 4
    %v1660 = vadd.f32 %v1436, %v1656
    %v1661 = vadd.f32 %v1437, %v1657
    %v1662 = vxor.u32 %v1660, 2147483648
    %v1663 = vxor.u32 %v1661, 2147483648
    %v1664 = vmul.f32 %v1662, 1.442695
    %v1665 = vpow.pop %v1664
    %v1666 = vmul.f32 %v1663, 1.442695
    %v1667 = vpow.pop %v1666
    %v1668 = vadd.f32 %v1665, 1.0
    %v1669 = vadd.f32 %v1667, 1.0
    %v1670 = vrcp.pop %v1668
    %v1671 = vmul.f32 1.0, %v1670
    %v1672 = vrcp.pop %v1669
    %v1673 = vmul.f32 1.0, %v1672
    %v1674 = vmul.f32 %v1673, 2.0
    %v1675 = vsub.f32 %v1674, 1.0
    %v1677 = vrot.slane %v1574, 6
    %v1679 = vmul.f32 %v1671, %v1677
    %v1680 = vmul.f32 %v1671, %v1675
    %1682 = vrot.lane.b32.xlu0 %v1680, 64
    %v1683 = vpop.permute.xlu0 %1682
    %v1685 = vadd.f32 %v1679, %v1683
    %v1686 = vtanh.pop %v1685
    %v1687 = vmul.f32 %v1673, %v1686
    %v1689 = vrot.slane %v1687, 4
    %1690 = vrot.lane.b32.xlu0 %v1689, 64
    %v1691 = vpop.permute.xlu0 %1690
    %v1692 = vsel %vm373, %v1691, 0
    %1694 = vmatprep.subr.mxu0 %v1415
    %1695 = vmatpush1.msra.mxu0 %v1414
    %1696 = vmatprep.subr.mxu0 %v1417
    %1697 = vmatpush1.msra.mxu0 %v1416
    %1698 = vmatprep.subr.mxu0 %v1419
    %1699 = vmatpush1.msra.mxu0 %v1418
    %1700 = vmatprep.subr.mxu0 %v1421
    %1701 = vmatpush1.msra.mxu0 %v1420
    %1702 = vmatprep.subr.mxu0 %v1423
    %1703 = vmatpush1.msra.mxu0 %v1422
    %1704 = vmatprep.subr.mxu0 %v1425
    %1705 = vmatpush1.msra.mxu0 %v1424
    %1706 = vmatprep.subr.mxu0 %v1427
    %1707 = vmatpush1.msra.mxu0 %v1426
    %1708 = vmatprep.subr.mxu0 %v1429
    %1709 = vmatpush1.msra.mxu0 %v1428
    %1710 = vmatprep.subr.mxu0 0.0
    %1711 = vmatpush1.msra.mxu0 0.0
    %1712 = vmatprep.subr.mxu0 0.0
    %1713 = vmatpush1.msra.mxu0 0.0
    %1714 = vmatprep.subr.mxu0 0.0
    %1715 = vmatpush1.msra.mxu0 0.0
    %1716 = vmatprep.subr.mxu0 0.0
    %1717 = vmatpush1.msra.mxu0 0.0
    %1718 = vmatprep.subr.mxu0 0.0
    %1719 = vmatpush1.msra.mxu0 0.0
    %1720 = vmatprep.subr.mxu0 0.0
    %1721 = vmatpush1.msra.mxu0 0.0
    %1722 = vmatprep.subr.mxu0 0.0
    %1723 = vmatpush1.msra.mxu0 0.0
    %1724 = vmatprep.subr.mxu0 0.0
    %1725 = vmatpush1.msra.mxu0 0.0
    %1726 = vmatprep.subr.mxu0 0.0
    %1727 = vmatpush1.msra.mxu0 0.0
    %1728 = vmatprep.subr.mxu0 0.0
    %1729 = vmatpush1.msra.mxu0 0.0
    %1730 = vmatprep.subr.mxu0 0.0
    %1731 = vmatpush1.msra.mxu0 0.0
    %1732 = vmatprep.subr.mxu0 0.0
    %1733 = vmatpush1.msra.mxu0 0.0
    %1734 = vmatprep.subr.mxu0 0.0
    %1735 = vmatpush1.msra.mxu0 0.0
    %1736 = vmatprep.subr.mxu0 0.0
    %1737 = vmatpush1.msra.mxu0 0.0
    %1738 = vmatprep.subr.mxu0 0.0
    %1739 = vmatpush1.msra.mxu0 0.0
    %1740 = vmatprep.subr.mxu0 0.0
    %1741 = vmatpush1.msra.mxu0 0.0
    %1742 = vmatprep.subr.mxu0 0.0
    %1743 = vmatpush1.msra.mxu0 0.0
    %1744 = vmatprep.subr.mxu0 0.0
    %1745 = vmatpush1.msra.mxu0 0.0
    %1746 = vmatprep.subr.mxu0 0.0
    %1747 = vmatpush1.msra.mxu0 0.0
    %1748 = vmatprep.subr.mxu0 0.0
    %1749 = vmatpush1.msra.mxu0 0.0
    %1750 = vmatprep.subr.mxu0 0.0
    %1751 = vmatpush1.msra.mxu0 0.0
    %1752 = vmatprep.subr.mxu0 0.0
    %1753 = vmatpush1.msra.mxu0 0.0
    %1754 = vmatprep.subr.mxu0 0.0
    %1755 = vmatpush1.msra.mxu0 0.0
    %1756 = vmatprep.subr.mxu0 0.0
    %1757 = vmatpush1.msra.mxu0 0.0
    %1758 = vmatprep.mubr.f32.mxu0 0.0
    %1759 = vmatmul.mubr.f32.gmra.mrb[0].mxu0 %v1692
    %v1760 = vpop.f32.mrb[0].mxu0
    %v1761 = vadd.f32 0.0, %v1760
    %v1762 = vpop.f32.mrb[0].mxu0
    %v1763 = vadd.f32 0.0, %v1762
    %1764 = vdwg.mxu0
    %v1767 = vrot.slane %v1761, 2
    %v1768 = vrot.slane %v1763, 2
    %v1771 = vadd.f32 %v1465, %v1767
    %v1772 = vadd.f32 %v1466, %v1768
    %v1773 = vxor.u32 %v1771, 2147483648
    %v1774 = vxor.u32 %v1772, 2147483648
    %v1775 = vmul.f32 %v1773, 1.442695
    %v1776 = vpow.pop %v1775
    %v1777 = vmul.f32 %v1774, 1.442695
    %v1778 = vpow.pop %v1777
    %v1779 = vadd.f32 %v1776, 1.0
    %v1780 = vadd.f32 %v1778, 1.0
    %v1781 = vrcp.pop %v1779
    %v1782 = vmul.f32 1.0, %v1781
    %v1783 = vrcp.pop %v1780
    %v1784 = vmul.f32 1.0, %v1783
    %v1785 = vmul.f32 %v1784, 2.0
    %v1786 = vsub.f32 %v1785, 1.0
    %v1788 = vrot.slane %v1685, 6
    %v1790 = vmul.f32 %v1782, %v1788
    %v1791 = vmul.f32 %v1782, %v1786
    %1793 = vrot.lane.b32.xlu0 %v1791, 64
    %v1794 = vpop.permute.xlu0 %1793
    %v1796 = vadd.f32 %v1790, %v1794
    %v1797 = vtanh.pop %v1796
    %v1798 = vmul.f32 %v1784, %v1797
    %v1801 = vrot.slane %v1404, 6
    %v1802 = vrot.slane %v1406, 6
    %v1805 = vadd.f32 %v1304, %v1801
    %v1806 = vadd.f32 %v1306, %v1802
    %v1808 = vrot.slane %v1798, 6
    %1809 = vrot.lane.b32.xlu0 %v1808, 64
    %v1810 = vpop.permute.xlu0 %1809
    %v1811 = vsel %vm373, %v1810, 0
    %1813 = vmatprep.subr.mxu0 %v1415
    %1814 = vmatpush1.msra.mxu0 %v1414
    %1815 = vmatprep.subr.mxu0 %v1417
    %1816 = vmatpush1.msra.mxu0 %v1416
    %1817 = vmatprep.subr.mxu0 %v1419
    %1818 = vmatpush1.msra.mxu0 %v1418
    %1819 = vmatprep.subr.mxu0 %v1421
    %1820 = vmatpush1.msra.mxu0 %v1420
    %1821 = vmatprep.subr.mxu0 %v1423
    %1822 = vmatpush1.msra.mxu0 %v1422
    %1823 = vmatprep.subr.mxu0 %v1425
    %1824 = vmatpush1.msra.mxu0 %v1424
    %1825 = vmatprep.subr.mxu0 %v1427
    %1826 = vmatpush1.msra.mxu0 %v1426
    %1827 = vmatprep.subr.mxu0 %v1429
    %1828 = vmatpush1.msra.mxu0 %v1428
    %1829 = vmatprep.subr.mxu0 0.0
    %1830 = vmatpush1.msra.mxu0 0.0
    %1831 = vmatprep.subr.mxu0 0.0
    %1832 = vmatpush1.msra.mxu0 0.0
    %1833 = vmatprep.subr.mxu0 0.0
    %1834 = vmatpush1.msra.mxu0 0.0
    %1835 = vmatprep.subr.mxu0 0.0
    %1836 = vmatpush1.msra.mxu0 0.0
    %1837 = vmatprep.subr.mxu0 0.0
    %1838 = vmatpush1.msra.mxu0 0.0
    %1839 = vmatprep.subr.mxu0 0.0
    %1840 = vmatpush1.msra.mxu0 0.0
    %1841 = vmatprep.subr.mxu0 0.0
    %1842 = vmatpush1.msra.mxu0 0.0
    %1843 = vmatprep.subr.mxu0 0.0
    %1844 = vmatpush1.msra.mxu0 0.0
    %1845 = vmatprep.subr.mxu0 0.0
    %1846 = vmatpush1.msra.mxu0 0.0
    %1847 = vmatprep.subr.mxu0 0.0
    %1848 = vmatpush1.msra.mxu0 0.0
    %1849 = vmatprep.subr.mxu0 0.0
    %1850 = vmatpush1.msra.mxu0 0.0
    %1851 = vmatprep.subr.mxu0 0.0
    %1852 = vmatpush1.msra.mxu0 0.0
    %1853 = vmatprep.subr.mxu0 0.0
    %1854 = vmatpush1.msra.mxu0 0.0
    %1855 = vmatprep.subr.mxu0 0.0
    %1856 = vmatpush1.msra.mxu0 0.0
    %1857 = vmatprep.subr.mxu0 0.0
    %1858 = vmatpush1.msra.mxu0 0.0
    %1859 = vmatprep.subr.mxu0 0.0
    %1860 = vmatpush1.msra.mxu0 0.0
    %1861 = vmatprep.subr.mxu0 0.0
    %1862 = vmatpush1.msra.mxu0 0.0
    %1863 = vmatprep.subr.mxu0 0.0
    %1864 = vmatpush1.msra.mxu0 0.0
    %1865 = vmatprep.subr.mxu0 0.0
    %1866 = vmatpush1.msra.mxu0 0.0
    %1867 = vmatprep.subr.mxu0 0.0
    %1868 = vmatpush1.msra.mxu0 0.0
    %1869 = vmatprep.subr.mxu0 0.0
    %1870 = vmatpush1.msra.mxu0 0.0
    %1871 = vmatprep.subr.mxu0 0.0
    %1872 = vmatpush1.msra.mxu0 0.0
    %1873 = vmatprep.subr.mxu0 0.0
    %1874 = vmatpush1.msra.mxu0 0.0
    %1875 = vmatprep.subr.mxu0 0.0
    %1876 = vmatpush1.msra.mxu0 0.0
    %1877 = vmatprep.mubr.f32.mxu0 0.0
    %1878 = vmatmul.mubr.f32.gmra.mrb[0].mxu0 %v1811
    %v1879 = vpop.f32.mrb[0].mxu0
    %v1880 = vadd.f32 0.0, %v1879
    %v1881 = vpop.f32.mrb[0].mxu0
    %v1882 = vadd.f32 0.0, %v1881
    %1883 = vdwg.mxu0
    %v1884 = vadd.f32 %v1805, %v1880
    %v1885 = vadd.f32 %v1806, %v1882
    %v1886 = vxor.u32 %v1884, 2147483648
    %v1887 = vxor.u32 %v1885, 2147483648
    %v1888 = vmul.f32 %v1886, 1.442695
    %v1889 = vpow.pop %v1888
    %v1890 = vmul.f32 %v1887, 1.442695
    %v1891 = vpow.pop %v1890
    %v1892 = vadd.f32 %v1889, 1.0
    %v1893 = vadd.f32 %v1891, 1.0
    %v1894 = vrcp.pop %v1892
    %v1895 = vmul.f32 1.0, %v1894
    %v1896 = vrcp.pop %v1893
    %v1897 = vmul.f32 1.0, %v1896
    %v1898 = vmul.f32 %v1897, 2.0
    %v1899 = vsub.f32 %v1898, 1.0
    %v1901 = vrot.slane %v1796, 6
    %v1903 = vmul.f32 %v1895, %v1901
    %v1904 = vmul.f32 %v1895, %v1899
    %1906 = vrot.lane.b32.xlu0 %v1904, 64
    %v1907 = vpop.permute.xlu0 %1906
    %v1909 = vadd.f32 %v1903, %v1907
    %v1910 = vtanh.pop %v1909
    %v1911 = vmul.f32 %v1897, %v1910
    %v1912 = vrot.slane %v1404, 2
    %v1913 = vrot.slane %v1406, 2
    %v1916 = vadd.f32 %v1304, %v1912
    %v1917 = vadd.f32 %v1306, %v1913
    %1919 = vrot.lane.b32.xlu0 %v1911, 64
    %v1920 = vpop.permute.xlu0 %1919
    %v1921 = vsel %vm373, %v1920, 0
    %1923 = vmatprep.subr.mxu0 %v1415
    %1924 = vmatpush1.msra.mxu0 %v1414
    %1925 = vmatprep.subr.mxu0 %v1417
    %1926 = vmatpush1.msra.mxu0 %v1416
    %1927 = vmatprep.subr.mxu0 %v1419
    %1928 = vmatpush1.msra.mxu0 %v1418
    %1929 = vmatprep.subr.mxu0 %v1421
    %1930 = vmatpush1.msra.mxu0 %v1420
    %1931 = vmatprep.subr.mxu0 %v1423
    %1932 = vmatpush1.msra.mxu0 %v1422
    %1933 = vmatprep.subr.mxu0 %v1425
    %1934 = vmatpush1.msra.mxu0 %v1424
    %1935 = vmatprep.subr.mxu0 %v1427
    %1936 = vmatpush1.msra.mxu0 %v1426
    %1937 = vmatprep.subr.mxu0 %v1429
    %1938 = vmatpush1.msra.mxu0 %v1428
    %1939 = vmatprep.subr.mxu0 0.0
    %1940 = vmatpush1.msra.mxu0 0.0
    %1941 = vmatprep.subr.mxu0 0.0
    %1942 = vmatpush1.msra.mxu0 0.0
    %1943 = vmatprep.subr.mxu0 0.0
    %1944 = vmatpush1.msra.mxu0 0.0
    %1945 = vmatprep.subr.mxu0 0.0
    %1946 = vmatpush1.msra.mxu0 0.0
    %1947 = vmatprep.subr.mxu0 0.0
    %1948 = vmatpush1.msra.mxu0 0.0
    %1949 = vmatprep.subr.mxu0 0.0
    %1950 = vmatpush1.msra.mxu0 0.0
    %1951 = vmatprep.subr.mxu0 0.0
    %1952 = vmatpush1.msra.mxu0 0.0
    %1953 = vmatprep.subr.mxu0 0.0
    %1954 = vmatpush1.msra.mxu0 0.0
    %1955 = vmatprep.subr.mxu0 0.0
    %1956 = vmatpush1.msra.mxu0 0.0
    %1957 = vmatprep.subr.mxu0 0.0
    %1958 = vmatpush1.msra.mxu0 0.0
    %1959 = vmatprep.subr.mxu0 0.0
    %1960 = vmatpush1.msra.mxu0 0.0
    %1961 = vmatprep.subr.mxu0 0.0
    %1962 = vmatpush1.msra.mxu0 0.0
    %1963 = vmatprep.subr.mxu0 0.0
    %1964 = vmatpush1.msra.mxu0 0.0
    %1965 = vmatprep.subr.mxu0 0.0
    %1966 = vmatpush1.msra.mxu0 0.0
    %1967 = vmatprep.subr.mxu0 0.0
    %1968 = vmatpush1.msra.mxu0 0.0
    %1969 = vmatprep.subr.mxu0 0.0
    %1970 = vmatpush1.msra.mxu0 0.0
    %1971 = vmatprep.subr.mxu0 0.0
    %1972 = vmatpush1.msra.mxu0 0.0
    %1973 = vmatprep.subr.mxu0 0.0
    %1974 = vmatpush1.msra.mxu0 0.0
    %1975 = vmatprep.subr.mxu0 0.0
    %1976 = vmatpush1.msra.mxu0 0.0
    %1977 = vmatprep.subr.mxu0 0.0
    %1978 = vmatpush1.msra.mxu0 0.0
    %1979 = vmatprep.subr.mxu0 0.0
    %1980 = vmatpush1.msra.mxu0 0.0
    %1981 = vmatprep.subr.mxu0 0.0
    %1982 = vmatpush1.msra.mxu0 0.0
    %1983 = vmatprep.subr.mxu0 0.0
    %1984 = vmatpush1.msra.mxu0 0.0
    %1985 = vmatprep.subr.mxu0 0.0
    %1986 = vmatpush1.msra.mxu0 0.0
    %1987 = vmatprep.mubr.f32.mxu0 0.0
    %1988 = vmatmul.mubr.f32.gmra.mrb[0].mxu0 %v1921
    %v1989 = vpop.f32.mrb[0].mxu0
    %v1990 = vadd.f32 0.0, %v1989
    %v1991 = vpop.f32.mrb[0].mxu0
    %v1992 = vadd.f32 0.0, %v1991
    %1993 = vdwg.mxu0
    %v1996 = vrot.slane %v1990, 6
    %v1997 = vrot.slane %v1992, 6
    %v2000 = vadd.f32 %v1916, %v1996
    %v2001 = vadd.f32 %v1917, %v1997
    %v2002 = vxor.u32 %v2000, 2147483648
    %v2003 = vxor.u32 %v2001, 2147483648
    %v2004 = vmul.f32 %v2002, 1.442695
    %v2005 = vpow.pop %v2004
    %v2006 = vmul.f32 %v2003, 1.442695
    %v2007 = vpow.pop %v2006
    %v2008 = vadd.f32 %v2005, 1.0
    %v2009 = vadd.f32 %v2007, 1.0
    %v2010 = vrcp.pop %v2008
    %v2011 = vmul.f32 1.0, %v2010
    %v2012 = vrcp.pop %v2009
    %v2013 = vmul.f32 1.0, %v2012
    %v2014 = vmul.f32 %v2013, 2.0
    %v2015 = vsub.f32 %v2014, 1.0
    %v2017 = vrot.slane %v1909, 6
    %v2019 = vmul.f32 %v2011, %v2017
    %v2020 = vmul.f32 %v2011, %v2015
    %2022 = vrot.lane.b32.xlu0 %v2020, 64
    %v2023 = vpop.permute.xlu0 %2022
    %v2025 = vadd.f32 %v2019, %v2023
    %v2026 = vtanh.pop %v2025
    %v2027 = vmul.f32 %v2013, %v2026
    %v2029 = vrot.slane %v2027, 2
    %2030 = vrot.lane.b32.xlu0 %v2029, 64
    %v2031 = vpop.permute.xlu0 %2030
    %v2032 = vsel %vm373, %v2031, 0
    %2034 = vmatprep.subr.mxu0 %v1415
    %2035 = vmatpush1.msra.mxu0 %v1414
    %2036 = vmatprep.subr.mxu0 %v1417
    %2037 = vmatpush1.msra.mxu0 %v1416
    %2038 = vmatprep.subr.mxu0 %v1419
    %2039 = vmatpush1.msra.mxu0 %v1418
    %2040 = vmatprep.subr.mxu0 %v1421
    %2041 = vmatpush1.msra.mxu0 %v1420
    %2042 = vmatprep.subr.mxu0 %v1423
    %2043 = vmatpush1.msra.mxu0 %v1422
    %2044 = vmatprep.subr.mxu0 %v1425
    %2045 = vmatpush1.msra.mxu0 %v1424
    %2046 = vmatprep.subr.mxu0 %v1427
    %2047 = vmatpush1.msra.mxu0 %v1426
    %2048 = vmatprep.subr.mxu0 %v1429
    %2049 = vmatpush1.msra.mxu0 %v1428
    %2050 = vmatprep.subr.mxu0 0.0
    %2051 = vmatpush1.msra.mxu0 0.0
    %2052 = vmatprep.subr.mxu0 0.0
    %2053 = vmatpush1.msra.mxu0 0.0
    %2054 = vmatprep.subr.mxu0 0.0
    %2055 = vmatpush1.msra.mxu0 0.0
    %2056 = vmatprep.subr.mxu0 0.0
    %2057 = vmatpush1.msra.mxu0 0.0
    %2058 = vmatprep.subr.mxu0 0.0
    %2059 = vmatpush1.msra.mxu0 0.0
    %2060 = vmatprep.subr.mxu0 0.0
    %2061 = vmatpush1.msra.mxu0 0.0
    %2062 = vmatprep.subr.mxu0 0.0
    %2063 = vmatpush1.msra.mxu0 0.0
    %2064 = vmatprep.subr.mxu0 0.0
    %2065 = vmatpush1.msra.mxu0 0.0
    %2066 = vmatprep.subr.mxu0 0.0
    %2067 = vmatpush1.msra.mxu0 0.0
    %2068 = vmatprep.subr.mxu0 0.0
    %2069 = vmatpush1.msra.mxu0 0.0
    %2070 = vmatprep.subr.mxu0 0.0
    %2071 = vmatpush1.msra.mxu0 0.0
    %2072 = vmatprep.subr.mxu0 0.0
    %2073 = vmatpush1.msra.mxu0 0.0
    %2074 = vmatprep.subr.mxu0 0.0
    %2075 = vmatpush1.msra.mxu0 0.0
    %2076 = vmatprep.subr.mxu0 0.0
    %2077 = vmatpush1.msra.mxu0 0.0
    %2078 = vmatprep.subr.mxu0 0.0
    %2079 = vmatpush1.msra.mxu0 0.0
    %2080 = vmatprep.subr.mxu0 0.0
    %2081 = vmatpush1.msra.mxu0 0.0
    %2082 = vmatprep.subr.mxu0 0.0
    %2083 = vmatpush1.msra.mxu0 0.0
    %2084 = vmatprep.subr.mxu0 0.0
    %2085 = vmatpush1.msra.mxu0 0.0
    %2086 = vmatprep.subr.mxu0 0.0
    %2087 = vmatpush1.msra.mxu0 0.0
    %2088 = vmatprep.subr.mxu0 0.0
    %2089 = vmatpush1.msra.mxu0 0.0
    %2090 = vmatprep.subr.mxu0 0.0
    %2091 = vmatpush1.msra.mxu0 0.0
    %2092 = vmatprep.subr.mxu0 0.0
    %2093 = vmatpush1.msra.mxu0 0.0
    %2094 = vmatprep.subr.mxu0 0.0
    %2095 = vmatpush1.msra.mxu0 0.0
    %2096 = vmatprep.subr.mxu0 0.0
    %2097 = vmatpush1.msra.mxu0 0.0
    %2098 = vmatprep.mubr.f32.mxu0 0.0
    %2099 = vmatmul.mubr.f32.gmra.mrb[0].mxu0 %v2032
    %v2100 = vpop.f32.mrb[0].mxu0
    %v2101 = vadd.f32 0.0, %v2100
    %v2102 = vpop.f32.mrb[0].mxu0
    %v2103 = vadd.f32 0.0, %v2102
    %2104 = vdwg.mxu0
    %v2107 = vrot.slane %v2101, 4
    %v2108 = vrot.slane %v2103, 4
    %v2111 = vadd.f32 %v1805, %v2107
    %v2112 = vadd.f32 %v1806, %v2108
    %v2113 = vxor.u32 %v2111, 2147483648
    %v2114 = vxor.u32 %v2112, 2147483648
    %v2115 = vmul.f32 %v2113, 1.442695
    %v2116 = vpow.pop %v2115
    %v2117 = vmul.f32 %v2114, 1.442695
    %v2118 = vpow.pop %v2117
    %v2119 = vadd.f32 %v2116, 1.0
    %v2120 = vadd.f32 %v2118, 1.0
    %v2121 = vrcp.pop %v2119
    %v2122 = vmul.f32 1.0, %v2121
    %v2123 = vrcp.pop %v2120
    %v2124 = vmul.f32 1.0, %v2123
    %v2125 = vmul.f32 %v2124, 2.0
    %v2126 = vsub.f32 %v2125, 1.0
    %v2128 = vrot.slane %v2025, 6
    %v2130 = vmul.f32 %v2122, %v2128
    %v2131 = vmul.f32 %v2122, %v2126
    %2133 = vrot.lane.b32.xlu0 %v2131, 64
    %v2134 = vpop.permute.xlu0 %2133
    %v2136 = vadd.f32 %v2130, %v2134
    %v2137 = vtanh.pop %v2136
    %v2138 = vmul.f32 %v2124, %v2137
    %v2140 = vrot.slane %v2138, 4
    %2141 = vrot.lane.b32.xlu0 %v2140, 64
    %v2142 = vpop.permute.xlu0 %2141
    %v2143 = vsel %vm373, %v2142, 0
    %2145 = vmatprep.subr.mxu0 %v1415
    %2146 = vmatpush1.msra.mxu0 %v1414
    %2147 = vmatprep.subr.mxu0 %v1417
    %2148 = vmatpush1.msra.mxu0 %v1416
    %2149 = vmatprep.subr.mxu0 %v1419
    %2150 = vmatpush1.msra.mxu0 %v1418
    %2151 = vmatprep.subr.mxu0 %v1421
    %2152 = vmatpush1.msra.mxu0 %v1420
    %2153 = vmatprep.subr.mxu0 %v1423
    %2154 = vmatpush1.msra.mxu0 %v1422
    %2155 = vmatprep.subr.mxu0 %v1425
    %2156 = vmatpush1.msra.mxu0 %v1424
    %2157 = vmatprep.subr.mxu0 %v1427
    %2158 = vmatpush1.msra.mxu0 %v1426
    %2159 = vmatprep.subr.mxu0 %v1429
    %2160 = vmatpush1.msra.mxu0 %v1428
    %2161 = vmatprep.subr.mxu0 0.0
    %2162 = vmatpush1.msra.mxu0 0.0
    %2163 = vmatprep.subr.mxu0 0.0
    %2164 = vmatpush1.msra.mxu0 0.0
    %2165 = vmatprep.subr.mxu0 0.0
    %2166 = vmatpush1.msra.mxu0 0.0
    %2167 = vmatprep.subr.mxu0 0.0
    %2168 = vmatpush1.msra.mxu0 0.0
    %2169 = vmatprep.subr.mxu0 0.0
    %2170 = vmatpush1.msra.mxu0 0.0
    %2171 = vmatprep.subr.mxu0 0.0
    %2172 = vmatpush1.msra.mxu0 0.0
    %2173 = vmatprep.subr.mxu0 0.0
    %2174 = vmatpush1.msra.mxu0 0.0
    %2175 = vmatprep.subr.mxu0 0.0
    %2176 = vmatpush1.msra.mxu0 0.0
    %2177 = vmatprep.subr.mxu0 0.0
    %2178 = vmatpush1.msra.mxu0 0.0
    %2179 = vmatprep.subr.mxu0 0.0
    %2180 = vmatpush1.msra.mxu0 0.0
    %2181 = vmatprep.subr.mxu0 0.0
    %2182 = vmatpush1.msra.mxu0 0.0
    %2183 = vmatprep.subr.mxu0 0.0
    %2184 = vmatpush1.msra.mxu0 0.0
    %2185 = vmatprep.subr.mxu0 0.0
    %2186 = vmatpush1.msra.mxu0 0.0
    %2187 = vmatprep.subr.mxu0 0.0
    %2188 = vmatpush1.msra.mxu0 0.0
    %2189 = vmatprep.subr.mxu0 0.0
    %2190 = vmatpush1.msra.mxu0 0.0
    %2191 = vmatprep.subr.mxu0 0.0
    %2192 = vmatpush1.msra.mxu0 0.0
    %2193 = vmatprep.subr.mxu0 0.0
    %2194 = vmatpush1.msra.mxu0 0.0
    %2195 = vmatprep.subr.mxu0 0.0
    %2196 = vmatpush1.msra.mxu0 0.0
    %2197 = vmatprep.subr.mxu0 0.0
    %2198 = vmatpush1.msra.mxu0 0.0
    %2199 = vmatprep.subr.mxu0 0.0
    %2200 = vmatpush1.msra.mxu0 0.0
    %2201 = vmatprep.subr.mxu0 0.0
    %2202 = vmatpush1.msra.mxu0 0.0
    %2203 = vmatprep.subr.mxu0 0.0
    %2204 = vmatpush1.msra.mxu0 0.0
    %2205 = vmatprep.subr.mxu0 0.0
    %2206 = vmatpush1.msra.mxu0 0.0
    %2207 = vmatprep.subr.mxu0 0.0
    %2208 = vmatpush1.msra.mxu0 0.0
    %2209 = vmatprep.mubr.f32.mxu0 0.0
    %2210 = vmatmul.mubr.f32.gmra.mrb[0].mxu0 %v2143
    %v2211 = vpop.f32.mrb[0].mxu0
    %v2212 = vadd.f32 0.0, %v2211
    %v2213 = vpop.f32.mrb[0].mxu0
    %v2214 = vadd.f32 0.0, %v2213
    %2215 = vdwg.mxu0
    %v2218 = vrot.slane %v2212, 2
    %v2219 = vrot.slane %v2214, 2
    %v2222 = vadd.f32 %v1916, %v2218
    %v2223 = vadd.f32 %v1917, %v2219
    %v2224 = vxor.u32 %v2222, 2147483648
    %v2225 = vxor.u32 %v2223, 2147483648
    %v2226 = vmul.f32 %v2224, 1.442695
    %v2227 = vpow.pop %v2226
    %v2228 = vmul.f32 %v2225, 1.442695
    %v2229 = vpow.pop %v2228
    %v2230 = vadd.f32 %v2227, 1.0
    %v2231 = vadd.f32 %v2229, 1.0
    %v2232 = vrcp.pop %v2230
    %v2233 = vmul.f32 1.0, %v2232
    %v2234 = vrcp.pop %v2231
    %v2235 = vmul.f32 1.0, %v2234
    %v2236 = vmul.f32 %v2235, 2.0
    %v2237 = vsub.f32 %v2236, 1.0
    %v2239 = vrot.slane %v2136, 6
    %v2241 = vmul.f32 %v2233, %v2239
    %v2242 = vmul.f32 %v2233, %v2237
    %2244 = vrot.lane.b32.xlu0 %v2242, 64
    %v2245 = vpop.permute.xlu0 %2244
    %v2247 = vadd.f32 %v2241, %v2245
    %v2248 = vtanh.pop %v2247
    %v2249 = vmul.f32 %v2235, %v2248
    %v2250 = vld [vmem:[#allocation8 + $0x2c0] sm:$0xff]
    %v2251 = vld [vmem:[#allocation8 + $0x2c8] sm:$0xff]
    %v2252 = vld [vmem:[#allocation8 + $0x2d0] sm:$0xff]
    %v2253 = vld [vmem:[#allocation8 + $0x2d8] sm:$0xff]
    %v2254 = vld [vmem:[#allocation8 + $0x2e0] sm:$0xff]
    %v2255 = vld [vmem:[#allocation8 + $0x2e8] sm:$0xff]
    %v2256 = vld [vmem:[#allocation8 + $0x2f0] sm:$0xff]
    %v2257 = vld [vmem:[#allocation8 + $0x2f8] sm:$0xff]
    %v2258 = vld [vmem:[#allocation8 + $0x300] sm:$0xff]
    %v2259 = vld [vmem:[#allocation8 + $0x308] sm:$0xff]
    %v2260 = vld [vmem:[#allocation8 + $0x310] sm:$0xff]
    %v2261 = vld [vmem:[#allocation8 + $0x318] sm:$0xff]
    %v2262 = vld [vmem:[#allocation8 + $0x320] sm:$0xff]
    %v2263 = vld [vmem:[#allocation8 + $0x328] sm:$0xff]
    %v2264 = vld [vmem:[#allocation8 + $0x330] sm:$0xff]
    %v2265 = vld [vmem:[#allocation8 + $0x338] sm:$0xff]
    %v2266 = vld [vmem:[#allocation8 + $0x340] sm:$0xff]
    %v2267 = vld [vmem:[#allocation8 + $0x348] sm:$0xff]
    %v2268 = vld [vmem:[#allocation8 + $0x350] sm:$0xff]
    %v2269 = vld [vmem:[#allocation8 + $0x358] sm:$0xff]
    %v2270 = vld [vmem:[#allocation8 + $0x360] sm:$0xff]
    %v2271 = vld [vmem:[#allocation8 + $0x368] sm:$0xff]
    %v2272 = vld [vmem:[#allocation8 + $0x370] sm:$0xff]
    %v2273 = vld [vmem:[#allocation8 + $0x378] sm:$0xff]
    %v2274 = vld [vmem:[#allocation8 + $0x380] sm:$0xff]
    %v2275 = vld [vmem:[#allocation8 + $0x388] sm:$0xff]
    %v2276 = vld [vmem:[#allocation8 + $0x390] sm:$0xff]
    %v2277 = vld [vmem:[#allocation8 + $0x398] sm:$0xff]
    %v2278 = vld [vmem:[#allocation8 + $0x3a0] sm:$0xff]
    %v2279 = vld [vmem:[#allocation8 + $0x3a8] sm:$0xff]
    %v2280 = vld [vmem:[#allocation8 + $0x3b0] sm:$0xff]
    %v2281 = vld [vmem:[#allocation8 + $0x3b8] sm:$0xff]
    %v2283 = vrot.slane %v2249, 6
    %2284 = vrot.lane.b32.xlu0 %v2283, 64
    %v2285 = vpop.permute.xlu0 %2284
    %v2286 = vsel %vm373, %v2285, 0
    %2288 = vmatprep.subr.mxu0 %v2267
    %2289 = vmatpush1.msra.mxu0 %v2266
    %2290 = vmatprep.subr.mxu0 %v2269
    %2291 = vmatpush1.msra.mxu0 %v2268
    %2292 = vmatprep.subr.mxu0 %v2271
    %2293 = vmatpush1.msra.mxu0 %v2270
    %2294 = vmatprep.subr.mxu0 %v2273
    %2295 = vmatpush1.msra.mxu0 %v2272
    %2296 = vmatprep.subr.mxu0 %v2275
    %2297 = vmatpush1.msra.mxu0 %v2274
    %2298 = vmatprep.subr.mxu0 %v2277
    %2299 = vmatpush1.msra.mxu0 %v2276
    %2300 = vmatprep.subr.mxu0 %v2279
    %2301 = vmatpush1.msra.mxu0 %v2278
    %2302 = vmatprep.subr.mxu0 %v2281
    %2303 = vmatpush1.msra.mxu0 %v2280
    %2304 = vmatprep.subr.mxu0 0.0
    %2305 = vmatpush1.msra.mxu0 0.0
    %2306 = vmatprep.subr.mxu0 0.0
    %2307 = vmatpush1.msra.mxu0 0.0
    %2308 = vmatprep.subr.mxu0 0.0
    %2309 = vmatpush1.msra.mxu0 0.0
    %2310 = vmatprep.subr.mxu0 0.0
    %2311 = vmatpush1.msra.mxu0 0.0
    %2312 = vmatprep.subr.mxu0 0.0
    %2313 = vmatpush1.msra.mxu0 0.0
    %2314 = vmatprep.subr.mxu0 0.0
    %2315 = vmatpush1.msra.mxu0 0.0
    %2316 = vmatprep.subr.mxu0 0.0
    %2317 = vmatpush1.msra.mxu0 0.0
    %2318 = vmatprep.subr.mxu0 0.0
    %2319 = vmatpush1.msra.mxu0 0.0
    %2320 = vmatprep.subr.mxu0 0.0
    %2321 = vmatpush1.msra.mxu0 0.0
    %2322 = vmatprep.subr.mxu0 0.0
    %2323 = vmatpush1.msra.mxu0 0.0
    %2324 = vmatprep.subr.mxu0 0.0
    %2325 = vmatpush1.msra.mxu0 0.0
    %2326 = vmatprep.subr.mxu0 0.0
    %2327 = vmatpush1.msra.mxu0 0.0
    %2328 = vmatprep.subr.mxu0 0.0
    %2329 = vmatpush1.msra.mxu0 0.0
    %2330 = vmatprep.subr.mxu0 0.0
    %2331 = vmatpush1.msra.mxu0 0.0
    %2332 = vmatprep.subr.mxu0 0.0
    %2333 = vmatpush1.msra.mxu0 0.0
    %2334 = vmatprep.subr.mxu0 0.0
    %2335 = vmatpush1.msra.mxu0 0.0
    %2336 = vmatprep.subr.mxu0 0.0
    %2337 = vmatpush1.msra.mxu0 0.0
    %2338 = vmatprep.subr.mxu0 0.0
    %2339 = vmatpush1.msra.mxu0 0.0
    %2340 = vmatprep.subr.mxu0 0.0
    %2341 = vmatpush1.msra.mxu0 0.0
    %2342 = vmatprep.subr.mxu0 0.0
    %2343 = vmatpush1.msra.mxu0 0.0
    %2344 = vmatprep.subr.mxu0 0.0
    %2345 = vmatpush1.msra.mxu0 0.0
    %2346 = vmatprep.subr.mxu0 0.0
    %2347 = vmatpush1.msra.mxu0 0.0
    %2348 = vmatprep.subr.mxu0 0.0
    %2349 = vmatpush1.msra.mxu0 0.0
    %2350 = vmatprep.subr.mxu0 0.0
    %2351 = vmatpush1.msra.mxu0 0.0
    %2352 = vmatprep.mubr.f32.mxu0 0.0
    %2353 = vmatmul.mubr.f32.gmra.mrb[0].mxu0 %v2286
    %v2354 = vpop.f32.mrb[0].mxu0
    %v2355 = vadd.f32 0.0, %v2354
    %v2356 = vpop.f32.mrb[0].mxu0
    %2357 = vdwg.mxu0
    %2358 = vmatprep.subr.mxu0 %v2251
    %2359 = vmatpush1.msra.mxu0 %v2250
    %2360 = vmatprep.subr.mxu0 %v2253
    %2361 = vmatpush1.msra.mxu0 %v2252
    %2362 = vmatprep.subr.mxu0 %v2255
    %2363 = vmatpush1.msra.mxu0 %v2254
    %2364 = vmatprep.subr.mxu0 %v2257
    %2365 = vmatpush1.msra.mxu0 %v2256
    %2366 = vmatprep.subr.mxu0 %v2259
    %2367 = vmatpush1.msra.mxu0 %v2258
    %2368 = vmatprep.subr.mxu0 %v2261
    %2369 = vmatpush1.msra.mxu0 %v2260
    %2370 = vmatprep.subr.mxu0 %v2263
    %2371 = vmatpush1.msra.mxu0 %v2262
    %2372 = vmatprep.subr.mxu0 %v2265
    %2373 = vmatpush1.msra.mxu0 %v2264
    %2374 = vmatprep.subr.mxu0 0.0
    %2375 = vmatpush1.msra.mxu0 0.0
    %2376 = vmatprep.subr.mxu0 0.0
    %2377 = vmatpush1.msra.mxu0 0.0
    %2378 = vmatprep.subr.mxu0 0.0
    %2379 = vmatpush1.msra.mxu0 0.0
    %2380 = vmatprep.subr.mxu0 0.0
    %2381 = vmatpush1.msra.mxu0 0.0
    %2382 = vmatprep.subr.mxu0 0.0
    %2383 = vmatpush1.msra.mxu0 0.0
    %2384 = vmatprep.subr.mxu0 0.0
    %2385 = vmatpush1.msra.mxu0 0.0
    %2386 = vmatprep.subr.mxu0 0.0
    %2387 = vmatpush1.msra.mxu0 0.0
    %2388 = vmatprep.subr.mxu0 0.0
    %2389 = vmatpush1.msra.mxu0 0.0
    %2390 = vmatprep.subr.mxu0 0.0
    %2391 = vmatpush1.msra.mxu0 0.0
    %2392 = vmatprep.subr.mxu0 0.0
    %2393 = vmatpush1.msra.mxu0 0.0
    %2394 = vmatprep.subr.mxu0 0.0
    %2395 = vmatpush1.msra.mxu0 0.0
    %2396 = vmatprep.subr.mxu0 0.0
    %2397 = vmatpush1.msra.mxu0 0.0
    %2398 = vmatprep.subr.mxu0 0.0
    %2399 = vmatpush1.msra.mxu0 0.0
    %2400 = vmatprep.subr.mxu0 0.0
    %2401 = vmatpush1.msra.mxu0 0.0
    %2402 = vmatprep.subr.mxu0 0.0
    %2403 = vmatpush1.msra.mxu0 0.0
    %2404 = vmatprep.subr.mxu0 0.0
    %2405 = vmatpush1.msra.mxu0 0.0
    %2406 = vmatprep.subr.mxu0 0.0
    %2407 = vmatpush1.msra.mxu0 0.0
    %2408 = vmatprep.subr.mxu0 0.0
    %2409 = vmatpush1.msra.mxu0 0.0
    %2410 = vmatprep.subr.mxu0 0.0
    %2411 = vmatpush1.msra.mxu0 0.0
    %2412 = vmatprep.subr.mxu0 0.0
    %2413 = vmatpush1.msra.mxu0 0.0
    %2414 = vmatprep.subr.mxu0 0.0
    %2415 = vmatpush1.msra.mxu0 0.0
    %2416 = vmatprep.subr.mxu0 0.0
    %2417 = vmatpush1.msra.mxu0 0.0
    %2418 = vmatprep.subr.mxu0 0.0
    %2419 = vmatpush1.msra.mxu0 0.0
    %2420 = vmatprep.subr.mxu0 0.0
    %2421 = vmatpush1.msra.mxu0 0.0
    %2422 = vmatprep.mubr.f32.mxu0 0.0
    %2423 = vmatmul.mubr.f32.gmra.mrb[0].mxu0 %v1470
    %v2424 = vpop.f32.mrb[0].mxu0
    %v2425 = vadd.f32 %v2355, %v2424
    %v2426 = vpop.f32.mrb[0].mxu0
    %2427 = vdwg.mxu0
    %s2428 = scalar_lea.vmem [#allocation8], 960
    %v2429 = vld [vmem:[%s2428] ss:$8 sm:$0x3]
    %v2431 = vlaneseq
    %v2432 = vshrl.u32 %v2431, 7
    %v2433 = vsub.s32 0, %v2432
    %v2434 = vrot.slane %v2429, %v2433
    %v2436 = vadd.f32 %v2425, %v2434
    %vm2437 = vcmask 33792
    %2438 = vst.msk [vmem:[#allocation9] sm:$0x3] %vm2437, %v2436
    // Predicated region
    $region22: #{_forward.1} parent=1 // pred_check
      _
    $region23: #{_forward.1} parent=1 // pred_check_branch
      %2440 = sbr.rel (0) target = $region25
    $region24: #{_forward.1} parent=1 // pred_region
      %s2442 = ssub.s32 32, 32
      %2443 = vsyncadd [#allocation6], %s2442
      %s2445 = sshll.u32 [#allocation9], 4
      %s2446 = int_to_ptr.vmem [resolvable:$true] %s2445
      %2448 = dma.vmem_to_hbm [thread:$0]  %s2446, 32, %s3, [#allocation6]
    $region25: #{_forward.1} parent=1 // pred_fallthru
      _
    // Predicated region
    $region26: #{_forward.1} parent=1 // pred_check
      _
    $region27: #{_forward.1} parent=1 // pred_check_branch
      %2450 = sbr.rel (0) target = $region29
    $region28: #{_forward.1} parent=1 // pred_region
      %2451 = dma.done [#allocation6], 32
    $region29: #{_forward.1} parent=1 // pred_fallthru
      _
    %2452 = vsyncpa [#allocation5], 1
    %2453 = vsyncpa [#allocation6], 1
    %2454 = vsyncpa [#allocation7], 1

</llo_original>
